<compile_context>
chip_gen: v6e
topology: v6e:2x2x1
jax: 0.10.0
libtpu: 0.0.40
codegen_flags: <defaults>
</compile_context>

<pallas_src>
import math
import functools

import jax
import jax.numpy as jnp
from jax.experimental import pallas as pl
from jax.experimental.pallas import tpu as pltpu


# ---------------------------------------------------------------------------
# ALiBi slopes (pure-math port of _get_alibi_slopes)
# ---------------------------------------------------------------------------
def get_alibi_slopes(total_num_heads: int) -> jnp.ndarray:
    closest_power_of_2 = 2 ** math.floor(math.log2(total_num_heads))
    base = 2 ** (-(2 ** (-(math.log2(closest_power_of_2) - 3))))
    powers = jnp.arange(1, 1 + closest_power_of_2, dtype=jnp.float32)
    slopes = jnp.power(jnp.float32(base), powers)
    if closest_power_of_2 != total_num_heads:
        extra_base = 2 ** (-(2 ** (-(math.log2(2 * closest_power_of_2) - 3))))
        num_remaining = min(closest_power_of_2, total_num_heads - closest_power_of_2)
        extra_powers = jnp.arange(1, 1 + 2 * num_remaining, 2, dtype=jnp.float32)
        slopes = jnp.concatenate(
            [slopes, jnp.power(jnp.float32(extra_base), extra_powers)], axis=0)
    return slopes.astype(jnp.float32)


# ---------------------------------------------------------------------------
# Small helpers: tile selection + VMEM budget
# ---------------------------------------------------------------------------
def _pick_tile(dim: int, target: int, align: int = 128) -> int:
    """Largest divisor of `dim` that is <= target and a multiple of `align`
    (falls back to the full dim if no aligned divisor exists)."""
    if dim <= align:
        return dim
    t = min(target, dim)
    t = (t // align) * align
    while t > 0 and dim % t != 0:
        t -= align
    return t if t > 0 else dim


def _vmem_limit(est_bytes: int) -> int:
    # Explicit limit so the tile sweep is portable across 16/32 MiB scoped
    # defaults (v5e/v6e/v7x); capped at v7x's 64 MiB physical VMEM.
    return int(min(64 * 1024 * 1024, max(32 * 1024 * 1024, 2 * est_bytes)))


# ---------------------------------------------------------------------------
# Tiled GEMM (QKV projection and output projection)
# ---------------------------------------------------------------------------
def _matmul_kernel(a_ref, b_ref, o_ref, acc_ref):
    @pl.when(pl.program_id(2) == 0)
    def _init():
        acc_ref[...] = jnp.zeros_like(acc_ref)

    # Native-dtype operands straight into the MXU, fp32 accumulation.
    acc_ref[...] += jnp.dot(a_ref[...], b_ref[...],
                            preferred_element_type=jnp.float32)

    @pl.when(pl.program_id(2) == pl.num_programs(2) - 1)
    def _store():
        o_ref[...] = acc_ref[...].astype(o_ref.dtype)


def matmul(a, b, *, tm=512, tn=512, tk=512):
    """C = A @ B with a (M, N, K) grid, fp32 VMEM accumulator, lane-dense tiles."""
    M, K = a.shape
    K2, N = b.shape
    assert K == K2
    tm = _pick_tile(M, tm)
    tn = _pick_tile(N, tn)
    tk = _pick_tile(K, tk)
    assert M % tm == 0 and N % tn == 0 and K % tk == 0, (M, N, K, tm, tn, tk)

    isz = jnp.dtype(a.dtype).itemsize
    osz = jnp.dtype(a.dtype).itemsize
    est = 2 * (tm * tk + tk * tn) * isz + 2 * tm * tn * osz + tm * tn * 4

    return pl.pallas_call(
        _matmul_kernel,
        out_shape=jax.ShapeDtypeStruct((M, N), a.dtype),
        grid_spec=pltpu.PrefetchScalarGridSpec(
            num_scalar_prefetch=0,
            grid=(M // tm, N // tn, K // tk),
            in_specs=[pl.BlockSpec((tm, tk), lambda i, j, k: (i, k)),
                      pl.BlockSpec((tk, tn), lambda i, j, k: (k, j))],
            out_specs=pl.BlockSpec((tm, tn), lambda i, j, k: (i, j)),
            scratch_shapes=[pltpu.VMEM((tm, tn), jnp.float32)]),
        compiler_params=pltpu.CompilerParams(
            dimension_semantics=("parallel", "parallel", "arbitrary"),
            vmem_limit_bytes=_vmem_limit(est)),
    )(a, b)


# ---------------------------------------------------------------------------
# Flash attention with ALiBi bias + causal masking over a flattened
# lower-triangular (q_tile, kv_tile) grid.  Q/K/V are per-head slabs of the
# packed qkv = [Q | K | V] activation, addressed purely via BlockSpec maps.
# ---------------------------------------------------------------------------
def _flash_alibi_kernel(qi_ref, ki_ref,                      # scalar prefetch (SMEM)
                        slopes_ref,                          # (num_heads,) SMEM
                        boff_ref, bdiag_ref,                 # (tq, tk) ALiBi tiles
                        q_ref, k_ref, v_ref, o_ref,
                        m_sc, l_sc, acc_sc, *, tk_blk):
    h = pl.program_id(0)
    t = pl.program_id(1)
    qi = qi_ref[t]
    ki = ki_ref[t]

    @pl.when(ki == 0)
    def _init():
        m_sc[...] = jnp.full_like(m_sc, -jnp.inf)
        l_sc[...] = jnp.zeros_like(l_sc)
        acc_sc[...] = jnp.zeros_like(acc_sc)

    # q @ k^T on the MXU (contract head_dim of both), fp32 accumulation.
    # The 1/sqrt(head_dim) scale was folded into the Q projection weights.
    s = jax.lax.dot_general(
        q_ref[...], k_ref[...], (((1,), (1,)), ((), ())),
        preferred_element_type=jnp.float32)                  # (tq, tk)

    def _online_softmax(scores):
        m_prev = m_sc[...]
        m_new = jnp.maximum(m_prev, jnp.max(scores, axis=-1, keepdims=True))
        alpha = jnp.exp(m_prev - m_new)
        p = jnp.exp(scores - m_new)
        l_sc[...] = alpha * l_sc[...] + jnp.sum(p, axis=-1, keepdims=True)
        acc_sc[...] = alpha * acc_sc[...] + jnp.dot(
            p.astype(v_ref.dtype), v_ref[...],
            preferred_element_type=jnp.float32)
        m_sc[...] = m_new

    # Strictly-below-diagonal tiles: bias only, no causal mask at all.
    @pl.when(ki < qi)
    def _off_diag():
        slope = slopes_ref[h]
        off = slope * ((ki - qi) * tk_blk).astype(jnp.float32)   # global j-i offset
        _online_softmax(s + boff_ref[...] + off)

    # Diagonal tile: precomputed causally-masked bias tile; also the last
    # contributing tile of this query row, so finalize + write output here
    # (overlaps the writeback DMA with the next row's work).
    @pl.when(ki == qi)
    def _diag():
        _online_softmax(s + bdiag_ref[...])
        # Every query row has >=1 unmasked key (the diagonal), so l > 0.
        inv_l = pl.reciprocal(l_sc[...], approx=True)
        o_ref[...] = (acc_sc[...] * inv_l).astype(o_ref.dtype)


def flash_attention_alibi(qkv, slopes, num_heads: int, head_dim: int, *, tile=256):
    """qkv: (S, 3*H) packed (pre-scaled-Q) activations -> (S, H) attention out."""
    S = qkv.shape[0]
    H = num_heads * head_dim
    assert qkv.shape[1] == 3 * H
    tq = _pick_tile(S, tile, 128)
    tk = tq   # triangular schedule + diagonal-mask tile assume square tiles
    assert S % tq == 0 and head_dim % 128 == 0, (S, tq, head_dim)

    # Flattened lower-triangular (qi, ki) schedule: above-diagonal tiles are
    # simply not in the grid (no dead grid steps, no DMA for them).
    T = S // tq
    qi_list, ki_list = [], []
    for i in range(T):
        for j in range(i + 1):
            qi_list.append(i)
            ki_list.append(j)
    qi_map = jnp.asarray(qi_list, dtype=jnp.int32)
    ki_map = jnp.asarray(ki_list, dtype=jnp.int32)
    n_tiles = len(qi_list)

    # Per-head ALiBi bias tiles, precomputed once (DMA'd once per head because
    # their block index is constant across the whole t sweep of a head).
    rel = (jnp.arange(tk, dtype=jnp.float32)[None, :]
           - jnp.arange(tq, dtype=jnp.float32)[:, None])            # j - i in-tile
    slopes_f32 = slopes.astype(jnp.float32)
    bias_off = slopes_f32[:, None, None] * rel                      # (nh, tq, tk)
    bias_diag = jnp.where(rel[None, :, :] <= 0.0, bias_off, jnp.float32(-1e30))

    kernel = functools.partial(_flash_alibi_kernel, tk_blk=tk)

    # Per-head (tile, head_dim) slabs of packed qkv via column-block indices:
    # Q head h -> block h, K -> num_heads + h, V -> 2*num_heads + h.
    q_spec = pl.BlockSpec((tq, head_dim), lambda h, t, qi, ki: (qi[t], h))
    k_spec = pl.BlockSpec((tk, head_dim), lambda h, t, qi, ki: (ki[t], num_heads + h))
    v_spec = pl.BlockSpec((tk, head_dim), lambda h, t, qi, ki: (ki[t], 2 * num_heads + h))
    o_spec = pl.BlockSpec((tq, head_dim), lambda h, t, qi, ki: (qi[t], h))
    boff_spec = pl.BlockSpec((None, tq, tk), lambda h, t, qi, ki: (h, 0, 0))
    bdiag_spec = pl.BlockSpec((None, tq, tk), lambda h, t, qi, ki: (h, 0, 0))

    isz = jnp.dtype(qkv.dtype).itemsize
    est = (2 * (tq * head_dim + 2 * tk * head_dim) * isz   # q/k/v double-buffered
           + 2 * 2 * tq * tk * 4                           # two bias tiles
           + 2 * tq * head_dim * isz                       # output
           + (2 * tq + tq * head_dim) * 4)                 # fp32 scratch

    return pl.pallas_call(
        kernel,
        out_shape=jax.ShapeDtypeStruct((S, H), qkv.dtype),
        grid_spec=pltpu.PrefetchScalarGridSpec(
            num_scalar_prefetch=2,
            grid=(num_heads, n_tiles),
            in_specs=[pl.BlockSpec(memory_space=pltpu.MemorySpace.SMEM),  # slopes
                      boff_spec, bdiag_spec, q_spec, k_spec, v_spec],
            out_specs=o_spec,
            scratch_shapes=[pltpu.VMEM((tq, 1), jnp.float32),        # running max
                            pltpu.VMEM((tq, 1), jnp.float32),        # running sum
                            pltpu.VMEM((tq, head_dim), jnp.float32)  # fp32 acc
                            ]),
        compiler_params=pltpu.CompilerParams(
            # head axis shards across TensorCores (v7x megacore); the flattened
            # lower-triangular kv axis is the sequential online-softmax reduction.
            dimension_semantics=("parallel", "arbitrary"),
            vmem_limit_bytes=_vmem_limit(est)),
    )(qi_map, ki_map, slopes, bias_off, bias_diag, qkv, qkv, qkv)


# ---------------------------------------------------------------------------
# Full BaichuanAttention forward
# ---------------------------------------------------------------------------
def baichuan_attention(x, w_pack, w_o, slopes, num_heads: int, *, attn_tile=256):
    S, H = x.shape
    head_dim = H // num_heads
    scale = head_dim ** -0.5
    # Fold the softmax scale into the Q columns of W_pack (in production do this
    # once at weight-load time) so the attention kernel never rescales scores.
    w_pack_scaled = jnp.concatenate(
        [w_pack[:, :H] * jnp.asarray(scale, w_pack.dtype), w_pack[:, H:]], axis=-1)
    # 1) QKV projection (tiled GEMM, native dtype into the MXU).
    qkv = matmul(x, w_pack_scaled)                               # (S, 3H)
    # 2) per-head flash attention with ALiBi, causal lower-triangular grid.
    attn = flash_attention_alibi(qkv, slopes, num_heads, head_dim, tile=attn_tile)
    # 3) output projection (tiled GEMM).
    return matmul(attn, w_o)                                     # (S, H)


# ---------------------------------------------------------------------------
# Pure-JAX reference (causal self-attention with ALiBi)
# ---------------------------------------------------------------------------
def reference(x, w_pack, w_o, slopes, num_heads):
    S, H = x.shape
    hd = H // num_heads
    qkv = x @ w_pack
    q, k, v = jnp.split(qkv, 3, axis=-1)
    q = q.reshape(S, num_heads, hd)
    k = k.reshape(S, num_heads, hd)
    v = v.reshape(S, num_heads, hd)
    scores = jnp.einsum('qhd,khd->hqk', q, k) * (hd ** -0.5)
    pos = jnp.arange(S)
    bias = slopes[:, None, None] * (pos[None, None, :] - pos[None, :, None]
                                    ).astype(jnp.float32)
    causal = pos[None, :] <= pos[:, None]           # key j <= query i
    scores = jnp.where(causal[None], scores + bias, -jnp.inf)
    p = jax.nn.softmax(scores, axis=-1)
    o = jnp.einsum('hqk,khd->qhd', p, v).reshape(S, H)
    return o @ w_o


if __name__ == "__main__":
    # Small config consistent with the module: hidden = num_heads * head_dim.
    # S=512 with tile=256 exercises init, off-diagonal and diagonal tile paths.
    seq_len = 512
    num_heads = 2
    head_dim = 128
    hidden_size = num_heads * head_dim          # 256

    key = jax.random.PRNGKey(0)
    k1, k2, k3 = jax.random.split(key, 3)
    x = jax.random.normal(k1, (seq_len, hidden_size), dtype=jnp.float32)
    w_pack = jax.random.normal(
        k2, (hidden_size, 3 * hidden_size), dtype=jnp.float32) / math.sqrt(hidden_size)
    w_o = jax.random.normal(
        k3, (hidden_size, hidden_size), dtype=jnp.float32) / math.sqrt(hidden_size)
    slopes = get_alibi_slopes(num_heads)        # (num_heads,)

    # fp32 correctness check against the dense reference (tolerance allows for
    # the EUP approximate reciprocal in the finalize, ~1e-3 relative).
    out = baichuan_attention(x, w_pack, w_o, slopes, num_heads)
    out = jax.block_until_ready(out)
    ref = reference(x, w_pack, w_o, slopes, num_heads)
    assert out.shape == (seq_len, hidden_size)
    err = float(jnp.max(jnp.abs(out - ref)))
    assert jnp.allclose(out, ref, atol=5e-3, rtol=5e-3), f"mismatch vs reference: {err}"

    # bf16 path: activations/weights (and the qkv / attn intermediates in HBM)
    # stay bf16 all the way into the MXU, fp32 accumulation only.
    out_bf16 = baichuan_attention(x.astype(jnp.bfloat16),
                                  w_pack.astype(jnp.bfloat16),
                                  w_o.astype(jnp.bfloat16),
                                  slopes, num_heads)
    out_bf16 = jax.block_until_ready(out_bf16)
    assert out_bf16.shape == (seq_len, hidden_size)
    assert bool(jnp.all(jnp.isfinite(out_bf16.astype(jnp.float32))))

    print("KERNEL_OK")
</pallas_src>

<mosaic_0001>
module attributes {stable_mosaic.version = 11 : i64} {
  func.func @_matmul_kernel(%arg0: i32, %arg1: i32, %arg2: i32, %arg3: memref<512x256xf32, #tpu.memory_space<vmem>>, %arg4: memref<256x384xf32, #tpu.memory_space<vmem>>, %arg5: memref<512x384xf32, #tpu.memory_space<vmem>>, %arg6: memref<512x384xf32, #tpu.memory_space<vmem>>) attributes {dimension_semantics = [#tpu.dimension_semantics<parallel>, #tpu.dimension_semantics<parallel>, #tpu.dimension_semantics<arbitrary>], iteration_bounds = array<i64: 1, 2, 1>, scalar_prefetch = 0 : i64, scratch_operands = 1 : i64, tpu.core_type = #tpu.core_type<tc>, window_params = [{transform_indices = @transform_0, window_bounds = array<i64: 512, 256>}, {transform_indices = @transform_1, window_bounds = array<i64: 256, 384>}, {transform_indices = @transform_2, window_bounds = array<i64: 512, 384>}]} {
    %c0_i32 = arith.constant 0 : i32
    %0 = arith.cmpi eq, %arg2, %c0_i32 : i32
    %1 = arith.extui %0 : i1 to i32
    %c0_i32_0 = arith.constant 0 : i32
    %2 = arith.cmpi ne, %1, %c0_i32_0 : i32
    scf.if %2 {
      %cst_10 = arith.constant 0.000000e+00 : f32
      %12 = vector.broadcast %cst_10 : f32 to vector<512x384xf32>
      %c0_11 = arith.constant 0 : index
      %c0_12 = arith.constant 0 : index
      %13 = vector.load %arg6[%c0_11, %c0_12] : memref<512x384xf32, #tpu.memory_space<vmem>>, vector<512x384xf32>
      tpu.vector_store %arg6[%c0_11, %c0_12], %12 {strides = array<i32>} : memref<512x384xf32, #tpu.memory_space<vmem>>, vector<512x384xf32>,
    } else {
    }
    %c0 = arith.constant 0 : index
    %c0_1 = arith.constant 0 : index
    %3 = vector.load %arg6[%c0, %c0_1] : memref<512x384xf32, #tpu.memory_space<vmem>>, vector<512x384xf32>
    %c0_2 = arith.constant 0 : index
    %c0_3 = arith.constant 0 : index
    %4 = vector.load %arg3[%c0_2, %c0_3] : memref<512x256xf32, #tpu.memory_space<vmem>>, vector<512x256xf32>
    %c0_4 = arith.constant 0 : index
    %c0_5 = arith.constant 0 : index
    %5 = vector.load %arg4[%c0_4, %c0_5] : memref<256x384xf32, #tpu.memory_space<vmem>>, vector<256x384xf32>
    %cst = arith.constant dense<0.000000e+00> : vector<512x384xf32>
    %6 = tpu.matmul %4, %5, %cst {dimension_numbers = #tpu.dot_dimension_numbers<[1], [0], [0], [1], [0, 0, 1, 1], [], []>} : vector<512x256xf32>, vector<256x384xf32>, vector<512x384xf32> -> vector<512x384xf32>
    %7 = arith.addf %3, %6 : vector<512x384xf32>
    %c0_6 = arith.constant 0 : index
    %c0_7 = arith.constant 0 : index
    %8 = vector.load %arg6[%c0_6, %c0_7] : memref<512x384xf32, #tpu.memory_space<vmem>>, vector<512x384xf32>
    tpu.vector_store %arg6[%c0_6, %c0_7], %7 {strides = array<i32>} : memref<512x384xf32, #tpu.memory_space<vmem>>, vector<512x384xf32>,
    %c0_i32_8 = arith.constant 0 : i32
    %9 = arith.cmpi eq, %arg2, %c0_i32_8 : i32
    %10 = arith.extui %9 : i1 to i32
    %c0_i32_9 = arith.constant 0 : i32
    %11 = arith.cmpi ne, %10, %c0_i32_9 : i32
    scf.if %11 {
      %c0_10 = arith.constant 0 : index
      %c0_11 = arith.constant 0 : index
      %12 = vector.load %arg6[%c0_10, %c0_11] : memref<512x384xf32, #tpu.memory_space<vmem>>, vector<512x384xf32>
      %c0_12 = arith.constant 0 : index
      %c0_13 = arith.constant 0 : index
      %13 = vector.load %arg5[%c0_12, %c0_13] : memref<512x384xf32, #tpu.memory_space<vmem>>, vector<512x384xf32>
      tpu.vector_store %arg5[%c0_12, %c0_13], %12 {strides = array<i32>} : memref<512x384xf32, #tpu.memory_space<vmem>>, vector<512x384xf32>,
    } else {
    }
    return
  }
  func.func @transform_0(%arg0: i32, %arg1: i32, %arg2: i32) -> (i32, i32) {
    %c0_i32 = arith.constant 0 : i32
    return %arg0, %arg2 : i32, i32
  }
  func.func @transform_1(%arg0: i32, %arg1: i32, %arg2: i32) -> (i32, i32) {
    %c0_i32 = arith.constant 0 : i32
    return %arg2, %arg1 : i32, i32
  }
  func.func @transform_2(%arg0: i32, %arg1: i32, %arg2: i32) -> (i32, i32) {
    %c0_i32 = arith.constant 0 : i32
    return %arg0, %arg1 : i32, i32
  }
}

</mosaic_0001>

<llo_original>
// kernel: tpu_custom_call.1
$region0: #{tpu_custom_call.1}
  #allocation0 [shape = 'u32[]', space=smem, size = 0x4, offset = 0x4, fixed_abs, tag = 'smem constant byte address 0x4 - core index']
  #allocation1 [shape = 'u32[144,128]{1,0:T(1,128)}', space=vmem, size = 0x12000, scoped, tag = 'internal scratch']
  #allocation2 [shape = 'f32[512,384]{1,0:T(8,128)}', space=vmem, size = 0xc0000, scoped, tag = 'scratch operand']
  %s0 = inlined_call_operand.hbm [shape: f32[512,256], index: 0, kind: input, shape index: {}]
  %s1 = inlined_call_operand.hbm [shape: f32[256,768], index: 1, kind: input, shape index: {}]
  %s2 = inlined_call_operand.hbm [shape: f32[512,768], index: 2, kind: output, shape index: {}]
  %s3 = sld [smem:[#allocation0]]
  $region57: #{tpu_custom_call.1} parent=0
    _
  %s5 = ssub.s32 1, %s3
  %s6 = scalar_select 0, %s5, %s3
  $region1: #{tpu_custom_call.1} parent=0
    #allocation3 [shape = 'u8[524288]{0}', space=vmem, size = 0x80000, scoped, tag = 'input window, operand 0, single buffered']
    #allocation4 [shape = 's32[2]{0}', space=sflag, size = 0x8, scoped, tag = 'scoped memory for tpu_custom_call.1']
    #allocation5 [shape = 's32[2]{0}', space=sflag, size = 0x8, scoped, tag = 'scoped memory for tpu_custom_call.1']
    #allocation6 [shape = 'u8[786432]{0}', space=vmem, size = 0xc0000, scoped, tag = 'input window, operand 1']
    #allocation7 [shape = 's32[2]{0}', space=sflag, size = 0x8, scoped, tag = 'scoped memory for tpu_custom_call.1']
    #allocation8 [shape = 'u8[1572864]{0}', space=vmem, size = 0x180000, scoped, tag = 'output window, operand 0']
    %7 = vsyncpa [#allocation4], 0
    %8 = vsyncpa [#allocation7], 0
    %s9 = scalar_lea.sflag [#allocation7], 1
    %10 = vsyncpa %s9, 0
    %11 = vsyncpa [#allocation5], 0
    %s12 = scalar_lea.sflag [#allocation5], 1
    %13 = vsyncpa %s12, 0
    loop: start=0, step=1, limit=4
    $region2: #{tpu_custom_call.1} parent=1 // loop_pre_header
      _
    $region3: #{tpu_custom_call.1} parent=1 // loop_header
      %s15 = sphi 0, %s19
      %p16 = scmp.ge.s32.totalorder %s15, 4
      %s22 = sphi 0, %s41
      %s23 = sphi 0, %s37
      %s24 = sphi 0, %s33
      %s25 = sphi 0, %s22
      %s26 = sphi 0, %s23
      %s27 = sphi 0, %s24
      %s28 = sphi 0, %s25
      %s29 = sphi 0, %s26
      %s30 = sphi 0, %s27
      %s46 = sphi 0, %s48
      %s49 = sphi 0, %s46
      %s50 = sphi 0, %s49
      %s66 = sphi 0, %s50
      %s74 = sphi 0, %s76
      %s77 = sphi 0, %s74
      %s78 = sphi 0, %s77
      %s94 = sphi 0, %s78
      %s102 = sphi 0, %s104
      %s105 = sphi 0, %s102
      %s106 = sphi 0, %s105
      %s122 = sphi 0, %s106
    $region4: #{tpu_custom_call.1} parent=1 // loop_header_branch
      %18 = sbr.rel (%p16) target = $region8
    $region5: #{tpu_custom_call.1} parent=1 // loop_body
      %s20 = ssub.s32 %s15, 1
      %s21 = ssub.s32 %s15, 2
      %s31 = sadd.s32 1, %s24
      %p32 = scmp.ge.s32.totalorder %s31, 1
      %s33 = scalar_select %p32, 0, %s31
      %s34 = sadd.s32 1, %s23
      %s35 = scalar_select %p32, %s34, %s23
      %p36 = scmp.ge.s32.totalorder %s35, 2
      %s37 = scalar_select %p36, 0, %s35
      %s38 = sadd.s32 1, %s22
      %s39 = scalar_select %p36, %s38, %s22
      %p40 = scmp.ge.s32.totalorder %s39, 1
      %s41 = scalar_select %p40, 0, %s39
      %s42 = ssub.s32 %s22, %s41
      %s43 = ssub.s32 %s24, %s33
      %s44 = sor.u32 %s42, %s43
      %p45 = scmp.eq.s32.totalorder %s44, 0
      %s47 = sadd.s32 %s46, 1
      %s48 = scalar_select %p45, %s46, %s47
      %p51 = pneg %p45
      %p52 = scmp.eq.s32.totalorder %s15, 1
      %p53 = por %p51, %p52
      %p54 = scmp.ne.s32.totalorder %s46, %s49
      %p55 = scmp.eq.s32.totalorder %s15, 0
      %p56 = por %p54, %p55
      %p57 = scmp.ne.s32.totalorder %s46, %s49
      %p58 = scmp.eq.s32.totalorder %s20, 1
      %p59 = por %p57, %p58
      %p60 = scmp.ne.s32.totalorder %s49, %s50
      %p61 = scmp.eq.s32.totalorder %s20, 0
      %p62 = por %p60, %p61
      %p63 = scmp.ne.s32.totalorder %s49, %s50
      %p64 = scmp.eq.s32.totalorder %s21, 1
      %p65 = por %p63, %p64
      %p67 = scmp.ne.s32.totalorder %s50, %s66
      %p68 = scmp.eq.s32.totalorder %s21, 0
      %p69 = por %p67, %p68
      %s70 = ssub.s32 %s24, %s33
      %s71 = ssub.s32 %s23, %s37
      %s72 = sor.u32 %s70, %s71
      %p73 = scmp.eq.s32.totalorder %s72, 0
      %s75 = sadd.s32 %s74, 1
      %s76 = scalar_select %p73, %s74, %s75
      %p79 = pneg %p73
      %p80 = scmp.eq.s32.totalorder %s15, 1
      %p81 = por %p79, %p80
      %p82 = scmp.ne.s32.totalorder %s74, %s77
      %p83 = scmp.eq.s32.totalorder %s15, 0
      %p84 = por %p82, %p83
      %p85 = scmp.ne.s32.totalorder %s74, %s77
      %p86 = scmp.eq.s32.totalorder %s20, 1
      %p87 = por %p85, %p86
      %p88 = scmp.ne.s32.totalorder %s77, %s78
      %p89 = scmp.eq.s32.totalorder %s20, 0
      %p90 = por %p88, %p89
      %p91 = scmp.ne.s32.totalorder %s77, %s78
      %p92 = scmp.eq.s32.totalorder %s21, 1
      %p93 = por %p91, %p92
      %p95 = scmp.ne.s32.totalorder %s78, %s94
      %p96 = scmp.eq.s32.totalorder %s21, 0
      %p97 = por %p95, %p96
      %s98 = ssub.s32 %s22, %s41
      %s99 = ssub.s32 %s23, %s37
      %s100 = sor.u32 %s98, %s99
      %p101 = scmp.eq.s32.totalorder %s100, 0
      %s103 = sadd.s32 %s102, 1
      %s104 = scalar_select %p101, %s102, %s103
      %p107 = pneg %p101
      %p108 = scmp.eq.s32.totalorder %s15, 1
      %p109 = por %p107, %p108
      %p110 = scmp.ne.s32.totalorder %s102, %s105
      %p111 = scmp.eq.s32.totalorder %s15, 0
      %p112 = por %p110, %p111
      %p113 = scmp.ne.s32.totalorder %s102, %s105
      %p114 = scmp.eq.s32.totalorder %s20, 1
      %p115 = por %p113, %p114
      %p116 = scmp.ne.s32.totalorder %s105, %s106
      %p117 = scmp.eq.s32.totalorder %s20, 0
      %p118 = por %p116, %p117
      %p119 = scmp.ne.s32.totalorder %s105, %s106
      %p120 = scmp.eq.s32.totalorder %s21, 1
      %p121 = por %p119, %p120
      %p123 = scmp.ne.s32.totalorder %s106, %s122
      %p124 = scmp.eq.s32.totalorder %s21, 0
      %p125 = por %p123, %p124
      %p126 = scmp.le.s32.totalorder 1, %s15
      %p127 = scmp.lt.s32.totalorder %s15, 3
      %p128 = pnand %p126, %p127
      %p129 = pneg %p128
      // Predicated region
      $region9: #{tpu_custom_call.1} parent=5 // pred_check
        _
      $region10: #{tpu_custom_call.1} parent=5 // pred_check_branch
        %131 = sbr.rel (%p128) target = $region12
      $region11: #{tpu_custom_call.1} parent=5 // pred_region
        %s132 = ssub.s32 %s15, 1
        // Predicated region
        $region13: #{tpu_custom_call.1} parent=11 // pred_check
          %p133 = pneg %p62
        $region14: #{tpu_custom_call.1} parent=11 // pred_check_branch
          %135 = sbr.rel (%p133) target = $region16
        $region15: #{tpu_custom_call.1} parent=11 // pred_region
          %s136 = smul.u32 64, %s25
          %s137 = smul.u32 2, %s27
          %s139 = ssub.s32 16384, 16384
          %140 = vsyncadd [#allocation4], %s139
          %s141 = smul.addr %s136, 2
          %s142 = sadd.s32 %s137, %s141
          %s143 = smul.addr %s142, 128
          %s144 = scalar_lea.hbm %s0, %s143
          %s145 = sshll.u32 [#allocation3], 4
          %s146 = int_to_ptr.vmem [resolvable:$true] %s145
          %151 = dma.hbm_to_vmem [thread:$0]  %s144, 16384, %s146, [#allocation4], 256, 256, 16
        $region16: #{tpu_custom_call.1} parent=11 // pred_fallthru
          _
      $region12: #{tpu_custom_call.1} parent=5 // pred_fallthru
        _
      %p152 = scmp.lt.s32.totalorder %s15, 2
      // Predicated region
      $region17: #{tpu_custom_call.1} parent=5 // pred_check
        %p153 = pneg %p152
      $region18: #{tpu_custom_call.1} parent=5 // pred_check_branch
        %155 = sbr.rel (%p153) target = $region20
      $region19: #{tpu_custom_call.1} parent=5 // pred_region
        // Predicated region
        $region21: #{tpu_custom_call.1} parent=19 // pred_check
          %p156 = pneg %p84
        $region22: #{tpu_custom_call.1} parent=19 // pred_check_branch
          %158 = sbr.rel (%p156) target = $region24
        $region23: #{tpu_custom_call.1} parent=19 // pred_region
          %s159 = sand.u32 %s74, 1
          %s160 = scalar_lea.sflag [#allocation7], %s159
          %s161 = sand.u32 %s74, 1
          %s162 = smul.addr %s161, 768
          %s163 = scalar_lea.vmem [#allocation6], %s162
          %s164 = smul.u32 32, %s24
          %s165 = smul.u32 3, %s23
          %s167 = ssub.s32 12288, 12288
          %168 = vsyncadd %s160, %s167
          %s169 = smul.addr %s164, 6
          %s170 = sadd.s32 %s165, %s169
          %s171 = smul.addr %s170, 128
          %s172 = scalar_lea.hbm %s1, %s171
          %s173 = sshll.u32 %s163, 4
          %s174 = int_to_ptr.vmem [resolvable:$true] %s173
          %179 = dma.hbm_to_vmem [thread:$0]  %s172, 12288, %s174, %s160, 768, 384, 24
        $region24: #{tpu_custom_call.1} parent=19 // pred_fallthru
          _
      $region20: #{tpu_custom_call.1} parent=5 // pred_fallthru
        _
      %p180 = scmp.le.s32.totalorder 1, %s15
      %p181 = scmp.lt.s32.totalorder %s15, 3
      %p182 = pnand %p180, %p181
      %p183 = pneg %p182
      // Predicated region
      $region25: #{tpu_custom_call.1} parent=5 // pred_check
        _
      $region26: #{tpu_custom_call.1} parent=5 // pred_check_branch
        %185 = sbr.rel (%p182) target = $region28
      $region27: #{tpu_custom_call.1} parent=5 // pred_region
        %s186 = ssub.s32 %s15, 1
        // Predicated region
        $region29: #{tpu_custom_call.1} parent=27 // pred_check
          %p187 = pneg %p62
        $region30: #{tpu_custom_call.1} parent=27 // pred_check_branch
          %189 = sbr.rel (%p187) target = $region32
        $region31: #{tpu_custom_call.1} parent=27 // pred_region
          %190 = dma.done [#allocation4], 16384
        $region32: #{tpu_custom_call.1} parent=27 // pred_fallthru
          _
        %s191 = sand.u32 %s77, 1
        %s192 = scalar_lea.sflag [#allocation7], %s191
        %s193 = sand.u32 %s77, 1
        %s194 = smul.addr %s193, 768
        %s195 = scalar_lea.vmem [#allocation6], %s194
        // Predicated region
        $region33: #{tpu_custom_call.1} parent=27 // pred_check
          %p196 = pneg %p90
        $region34: #{tpu_custom_call.1} parent=27 // pred_check_branch
          %198 = sbr.rel (%p196) target = $region36
        $region35: #{tpu_custom_call.1} parent=27 // pred_region
          %199 = dma.done %s192, 12288
        $region36: #{tpu_custom_call.1} parent=27 // pred_fallthru
          _
        %p200 = pneg %p62
        %p201 = pneg %p59
        %s202 = sand.u32 %s77, 1
        %s203 = scalar_lea.sflag [#allocation7], %s202
        %s204 = sand.u32 %s77, 1
        %s205 = smul.addr %s204, 768
        %s206 = scalar_lea.vmem [#allocation6], %s205
        %p207 = pneg %p90
        %p208 = pneg %p87
        %p209 = pneg %p118
        %p210 = pneg %p115
        %s211 = sand.u32 %s105, 1
        %s212 = scalar_lea.sflag [#allocation5], %s211
        %s213 = sand.u32 %s105, 1
        %s214 = smul.addr %s213, 1536
        %s215 = scalar_lea.vmem [#allocation8], %s214
        %s216 = smul.u32 64, %s25
        %s217 = smul.u32 2, %s27
        %s218 = smul.u32 32, %s27
        %s219 = smul.u32 3, %s26
        %s220 = smul.u32 64, %s25
        %s221 = smul.u32 3, %s26
        %p222 = scmp.eq.s32.totalorder %s27, 0
        // Predicated region
        $region37: #{tpu_custom_call.1} parent=27 // pred_check
          %p223 = pneg %p222
        $region38: #{tpu_custom_call.1} parent=27 // pred_check_branch
          %225 = sbr.rel (%p223) target = $region40
        $region39: #{tpu_custom_call.1} parent=27 // pred_region
          %226 = vst [vmem:[#allocation2] sm:$0xff] 0.0
          %227 = vst [vmem:[#allocation2 + $0x8] sm:$0xff] 0.0
          %228 = vst [vmem:[#allocation2 + $0x10] sm:$0xff] 0.0
          %229 = vst [vmem:[#allocation2 + $0x18] sm:$0xff] 0.0
          %230 = vst [vmem:[#allocation2 + $0x20] sm:$0xff] 0.0
          %231 = vst [vmem:[#allocation2 + $0x28] sm:$0xff] 0.0
          %232 = vst [vmem:[#allocation2 + $0x30] sm:$0xff] 0.0
          %233 = vst [vmem:[#allocation2 + $0x38] sm:$0xff] 0.0
          %234 = vst [vmem:[#allocation2 + $0x40] sm:$0xff] 0.0
          %235 = vst [vmem:[#allocation2 + $0x48] sm:$0xff] 0.0
          %236 = vst [vmem:[#allocation2 + $0x50] sm:$0xff] 0.0
          %237 = vst [vmem:[#allocation2 + $0x58] sm:$0xff] 0.0
          %238 = vst [vmem:[#allocation2 + $0x60] sm:$0xff] 0.0
          %239 = vst [vmem:[#allocation2 + $0x68] sm:$0xff] 0.0
          %240 = vst [vmem:[#allocation2 + $0x70] sm:$0xff] 0.0
          %241 = vst [vmem:[#allocation2 + $0x78] sm:$0xff] 0.0
          %242 = vst [vmem:[#allocation2 + $0x80] sm:$0xff] 0.0
          %243 = vst [vmem:[#allocation2 + $0x88] sm:$0xff] 0.0
          %244 = vst [vmem:[#allocation2 + $0x90] sm:$0xff] 0.0
          %245 = vst [vmem:[#allocation2 + $0x98] sm:$0xff] 0.0
          %246 = vst [vmem:[#allocation2 + $0xa0] sm:$0xff] 0.0
          %247 = vst [vmem:[#allocation2 + $0xa8] sm:$0xff] 0.0
          %248 = vst [vmem:[#allocation2 + $0xb0] sm:$0xff] 0.0
          %249 = vst [vmem:[#allocation2 + $0xb8] sm:$0xff] 0.0
          %250 = vst [vmem:[#allocation2 + $0xc0] sm:$0xff] 0.0
          %251 = vst [vmem:[#allocation2 + $0xc8] sm:$0xff] 0.0
          %252 = vst [vmem:[#allocation2 + $0xd0] sm:$0xff] 0.0
          %253 = vst [vmem:[#allocation2 + $0xd8] sm:$0xff] 0.0
          %254 = vst [vmem:[#allocation2 + $0xe0] sm:$0xff] 0.0
          %255 = vst [vmem:[#allocation2 + $0xe8] sm:$0xff] 0.0
          %256 = vst [vmem:[#allocation2 + $0xf0] sm:$0xff] 0.0
          %257 = vst [vmem:[#allocation2 + $0xf8] sm:$0xff] 0.0
          %258 = vst [vmem:[#allocation2 + $0x100] sm:$0xff] 0.0
          %259 = vst [vmem:[#allocation2 + $0x108] sm:$0xff] 0.0
          %260 = vst [vmem:[#allocation2 + $0x110] sm:$0xff] 0.0
          %261 = vst [vmem:[#allocation2 + $0x118] sm:$0xff] 0.0
          %262 = vst [vmem:[#allocation2 + $0x120] sm:$0xff] 0.0
          %263 = vst [vmem:[#allocation2 + $0x128] sm:$0xff] 0.0
          %264 = vst [vmem:[#allocation2 + $0x130] sm:$0xff] 0.0
          %265 = vst [vmem:[#allocation2 + $0x138] sm:$0xff] 0.0
          %266 = vst [vmem:[#allocation2 + $0x140] sm:$0xff] 0.0
          %267 = vst [vmem:[#allocation2 + $0x148] sm:$0xff] 0.0
          %268 = vst [vmem:[#allocation2 + $0x150] sm:$0xff] 0.0
          %269 = vst [vmem:[#allocation2 + $0x158] sm:$0xff] 0.0
          %270 = vst [vmem:[#allocation2 + $0x160] sm:$0xff] 0.0
          %271 = vst [vmem:[#allocation2 + $0x168] sm:$0xff] 0.0
          %272 = vst [vmem:[#allocation2 + $0x170] sm:$0xff] 0.0
          %273 = vst [vmem:[#allocation2 + $0x178] sm:$0xff] 0.0
          %274 = vst [vmem:[#allocation2 + $0x180] sm:$0xff] 0.0
          %275 = vst [vmem:[#allocation2 + $0x188] sm:$0xff] 0.0
          %276 = vst [vmem:[#allocation2 + $0x190] sm:$0xff] 0.0
          %277 = vst [vmem:[#allocation2 + $0x198] sm:$0xff] 0.0
          %278 = vst [vmem:[#allocation2 + $0x1a0] sm:$0xff] 0.0
          %279 = vst [vmem:[#allocation2 + $0x1a8] sm:$0xff] 0.0
          %280 = vst [vmem:[#allocation2 + $0x1b0] sm:$0xff] 0.0
          %281 = vst [vmem:[#allocation2 + $0x1b8] sm:$0xff] 0.0
          %282 = vst [vmem:[#allocation2 + $0x1c0] sm:$0xff] 0.0
          %283 = vst [vmem:[#allocation2 + $0x1c8] sm:$0xff] 0.0
          %284 = vst [vmem:[#allocation2 + $0x1d0] sm:$0xff] 0.0
          %285 = vst [vmem:[#allocation2 + $0x1d8] sm:$0xff] 0.0
          %286 = vst [vmem:[#allocation2 + $0x1e0] sm:$0xff] 0.0
          %287 = vst [vmem:[#allocation2 + $0x1e8] sm:$0xff] 0.0
          %288 = vst [vmem:[#allocation2 + $0x1f0] sm:$0xff] 0.0
          %289 = vst [vmem:[#allocation2 + $0x1f8] sm:$0xff] 0.0
          %290 = vst [vmem:[#allocation2 + $0x200] sm:$0xff] 0.0
          %291 = vst [vmem:[#allocation2 + $0x208] sm:$0xff] 0.0
          %292 = vst [vmem:[#allocation2 + $0x210] sm:$0xff] 0.0
          %293 = vst [vmem:[#allocation2 + $0x218] sm:$0xff] 0.0
          %294 = vst [vmem:[#allocation2 + $0x220] sm:$0xff] 0.0
          %295 = vst [vmem:[#allocation2 + $0x228] sm:$0xff] 0.0
          %296 = vst [vmem:[#allocation2 + $0x230] sm:$0xff] 0.0
          %297 = vst [vmem:[#allocation2 + $0x238] sm:$0xff] 0.0
          %298 = vst [vmem:[#allocation2 + $0x240] sm:$0xff] 0.0
          %299 = vst [vmem:[#allocation2 + $0x248] sm:$0xff] 0.0
          %300 = vst [vmem:[#allocation2 + $0x250] sm:$0xff] 0.0
          %301 = vst [vmem:[#allocation2 + $0x258] sm:$0xff] 0.0
          %302 = vst [vmem:[#allocation2 + $0x260] sm:$0xff] 0.0
          %303 = vst [vmem:[#allocation2 + $0x268] sm:$0xff] 0.0
          %304 = vst [vmem:[#allocation2 + $0x270] sm:$0xff] 0.0
          %305 = vst [vmem:[#allocation2 + $0x278] sm:$0xff] 0.0
          %306 = vst [vmem:[#allocation2 + $0x280] sm:$0xff] 0.0
          %307 = vst [vmem:[#allocation2 + $0x288] sm:$0xff] 0.0
          %308 = vst [vmem:[#allocation2 + $0x290] sm:$0xff] 0.0
          %309 = vst [vmem:[#allocation2 + $0x298] sm:$0xff] 0.0
          %310 = vst [vmem:[#allocation2 + $0x2a0] sm:$0xff] 0.0
          %311 = vst [vmem:[#allocation2 + $0x2a8] sm:$0xff] 0.0
          %312 = vst [vmem:[#allocation2 + $0x2b0] sm:$0xff] 0.0
          %313 = vst [vmem:[#allocation2 + $0x2b8] sm:$0xff] 0.0
          %314 = vst [vmem:[#allocation2 + $0x2c0] sm:$0xff] 0.0
          %315 = vst [vmem:[#allocation2 + $0x2c8] sm:$0xff] 0.0
          %316 = vst [vmem:[#allocation2 + $0x2d0] sm:$0xff] 0.0
          %317 = vst [vmem:[#allocation2 + $0x2d8] sm:$0xff] 0.0
          %318 = vst [vmem:[#allocation2 + $0x2e0] sm:$0xff] 0.0
          %319 = vst [vmem:[#allocation2 + $0x2e8] sm:$0xff] 0.0
          %320 = vst [vmem:[#allocation2 + $0x2f0] sm:$0xff] 0.0
          %321 = vst [vmem:[#allocation2 + $0x2f8] sm:$0xff] 0.0
          %322 = vst [vmem:[#allocation2 + $0x300] sm:$0xff] 0.0
          %323 = vst [vmem:[#allocation2 + $0x308] sm:$0xff] 0.0
          %324 = vst [vmem:[#allocation2 + $0x310] sm:$0xff] 0.0
          %325 = vst [vmem:[#allocation2 + $0x318] sm:$0xff] 0.0
          %326 = vst [vmem:[#allocation2 + $0x320] sm:$0xff] 0.0
          %327 = vst [vmem:[#allocation2 + $0x328] sm:$0xff] 0.0
          %328 = vst [vmem:[#allocation2 + $0x330] sm:$0xff] 0.0
          %329 = vst [vmem:[#allocation2 + $0x338] sm:$0xff] 0.0
          %330 = vst [vmem:[#allocation2 + $0x340] sm:$0xff] 0.0
          %331 = vst [vmem:[#allocation2 + $0x348] sm:$0xff] 0.0
          %332 = vst [vmem:[#allocation2 + $0x350] sm:$0xff] 0.0
          %333 = vst [vmem:[#allocation2 + $0x358] sm:$0xff] 0.0
          %334 = vst [vmem:[#allocation2 + $0x360] sm:$0xff] 0.0
          %335 = vst [vmem:[#allocation2 + $0x368] sm:$0xff] 0.0
          %336 = vst [vmem:[#allocation2 + $0x370] sm:$0xff] 0.0
          %337 = vst [vmem:[#allocation2 + $0x378] sm:$0xff] 0.0
          %338 = vst [vmem:[#allocation2 + $0x380] sm:$0xff] 0.0
          %339 = vst [vmem:[#allocation2 + $0x388] sm:$0xff] 0.0
          %340 = vst [vmem:[#allocation2 + $0x390] sm:$0xff] 0.0
          %341 = vst [vmem:[#allocation2 + $0x398] sm:$0xff] 0.0
          %342 = vst [vmem:[#allocation2 + $0x3a0] sm:$0xff] 0.0
          %343 = vst [vmem:[#allocation2 + $0x3a8] sm:$0xff] 0.0
          %344 = vst [vmem:[#allocation2 + $0x3b0] sm:$0xff] 0.0
          %345 = vst [vmem:[#allocation2 + $0x3b8] sm:$0xff] 0.0
          %346 = vst [vmem:[#allocation2 + $0x3c0] sm:$0xff] 0.0
          %347 = vst [vmem:[#allocation2 + $0x3c8] sm:$0xff] 0.0
          %348 = vst [vmem:[#allocation2 + $0x3d0] sm:$0xff] 0.0
          %349 = vst [vmem:[#allocation2 + $0x3d8] sm:$0xff] 0.0
          %350 = vst [vmem:[#allocation2 + $0x3e0] sm:$0xff] 0.0
          %351 = vst [vmem:[#allocation2 + $0x3e8] sm:$0xff] 0.0
          %352 = vst [vmem:[#allocation2 + $0x3f0] sm:$0xff] 0.0
          %353 = vst [vmem:[#allocation2 + $0x3f8] sm:$0xff] 0.0
          %354 = vst [vmem:[#allocation2 + $0x400] sm:$0xff] 0.0
          %355 = vst [vmem:[#allocation2 + $0x408] sm:$0xff] 0.0
          %356 = vst [vmem:[#allocation2 + $0x410] sm:$0xff] 0.0
          %357 = vst [vmem:[#allocation2 + $0x418] sm:$0xff] 0.0
          %358 = vst [vmem:[#allocation2 + $0x420] sm:$0xff] 0.0
          %359 = vst [vmem:[#allocation2 + $0x428] sm:$0xff] 0.0
          %360 = vst [vmem:[#allocation2 + $0x430] sm:$0xff] 0.0
          %361 = vst [vmem:[#allocation2 + $0x438] sm:$0xff] 0.0
          %362 = vst [vmem:[#allocation2 + $0x440] sm:$0xff] 0.0
          %363 = vst [vmem:[#allocation2 + $0x448] sm:$0xff] 0.0
          %364 = vst [vmem:[#allocation2 + $0x450] sm:$0xff] 0.0
          %365 = vst [vmem:[#allocation2 + $0x458] sm:$0xff] 0.0
          %366 = vst [vmem:[#allocation2 + $0x460] sm:$0xff] 0.0
          %367 = vst [vmem:[#allocation2 + $0x468] sm:$0xff] 0.0
          %368 = vst [vmem:[#allocation2 + $0x470] sm:$0xff] 0.0
          %369 = vst [vmem:[#allocation2 + $0x478] sm:$0xff] 0.0
          %370 = vst [vmem:[#allocation2 + $0x480] sm:$0xff] 0.0
          %371 = vst [vmem:[#allocation2 + $0x488] sm:$0xff] 0.0
          %372 = vst [vmem:[#allocation2 + $0x490] sm:$0xff] 0.0
          %373 = vst [vmem:[#allocation2 + $0x498] sm:$0xff] 0.0
          %374 = vst [vmem:[#allocation2 + $0x4a0] sm:$0xff] 0.0
          %375 = vst [vmem:[#allocation2 + $0x4a8] sm:$0xff] 0.0
          %376 = vst [vmem:[#allocation2 + $0x4b0] sm:$0xff] 0.0
          %377 = vst [vmem:[#allocation2 + $0x4b8] sm:$0xff] 0.0
          %378 = vst [vmem:[#allocation2 + $0x4c0] sm:$0xff] 0.0
          %379 = vst [vmem:[#allocation2 + $0x4c8] sm:$0xff] 0.0
          %380 = vst [vmem:[#allocation2 + $0x4d0] sm:$0xff] 0.0
          %381 = vst [vmem:[#allocation2 + $0x4d8] sm:$0xff] 0.0
          %382 = vst [vmem:[#allocation2 + $0x4e0] sm:$0xff] 0.0
          %383 = vst [vmem:[#allocation2 + $0x4e8] sm:$0xff] 0.0
          %384 = vst [vmem:[#allocation2 + $0x4f0] sm:$0xff] 0.0
          %385 = vst [vmem:[#allocation2 + $0x4f8] sm:$0xff] 0.0
          %386 = vst [vmem:[#allocation2 + $0x500] sm:$0xff] 0.0
          %387 = vst [vmem:[#allocation2 + $0x508] sm:$0xff] 0.0
          %388 = vst [vmem:[#allocation2 + $0x510] sm:$0xff] 0.0
          %389 = vst [vmem:[#allocation2 + $0x518] sm:$0xff] 0.0
          %390 = vst [vmem:[#allocation2 + $0x520] sm:$0xff] 0.0
          %391 = vst [vmem:[#allocation2 + $0x528] sm:$0xff] 0.0
          %392 = vst [vmem:[#allocation2 + $0x530] sm:$0xff] 0.0
          %393 = vst [vmem:[#allocation2 + $0x538] sm:$0xff] 0.0
          %394 = vst [vmem:[#allocation2 + $0x540] sm:$0xff] 0.0
          %395 = vst [vmem:[#allocation2 + $0x548] sm:$0xff] 0.0
          %396 = vst [vmem:[#allocation2 + $0x550] sm:$0xff] 0.0
          %397 = vst [vmem:[#allocation2 + $0x558] sm:$0xff] 0.0
          %398 = vst [vmem:[#allocation2 + $0x560] sm:$0xff] 0.0
          %399 = vst [vmem:[#allocation2 + $0x568] sm:$0xff] 0.0
          %400 = vst [vmem:[#allocation2 + $0x570] sm:$0xff] 0.0
          %401 = vst [vmem:[#allocation2 + $0x578] sm:$0xff] 0.0
          %402 = vst [vmem:[#allocation2 + $0x580] sm:$0xff] 0.0
          %403 = vst [vmem:[#allocation2 + $0x588] sm:$0xff] 0.0
          %404 = vst [vmem:[#allocation2 + $0x590] sm:$0xff] 0.0
          %405 = vst [vmem:[#allocation2 + $0x598] sm:$0xff] 0.0
          %406 = vst [vmem:[#allocation2 + $0x5a0] sm:$0xff] 0.0
          %407 = vst [vmem:[#allocation2 + $0x5a8] sm:$0xff] 0.0
          %408 = vst [vmem:[#allocation2 + $0x5b0] sm:$0xff] 0.0
          %409 = vst [vmem:[#allocation2 + $0x5b8] sm:$0xff] 0.0
          %410 = vst [vmem:[#allocation2 + $0x5c0] sm:$0xff] 0.0
          %411 = vst [vmem:[#allocation2 + $0x5c8] sm:$0xff] 0.0
          %412 = vst [vmem:[#allocation2 + $0x5d0] sm:$0xff] 0.0
          %413 = vst [vmem:[#allocation2 + $0x5d8] sm:$0xff] 0.0
          %414 = vst [vmem:[#allocation2 + $0x5e0] sm:$0xff] 0.0
          %415 = vst [vmem:[#allocation2 + $0x5e8] sm:$0xff] 0.0
          %416 = vst [vmem:[#allocation2 + $0x5f0] sm:$0xff] 0.0
          %417 = vst [vmem:[#allocation2 + $0x5f8] sm:$0xff] 0.0
        $region40: #{tpu_custom_call.1} parent=27 // pred_fallthru
          _
        %v418 = vld [vmem:[#allocation2] sm:$0xff]
        %v419 = vld [vmem:[#allocation2 + $0x8] sm:$0xff]
        %v420 = vld [vmem:[#allocation2 + $0x10] sm:$0xff]
        %v421 = vld [vmem:[#allocation2 + $0x18] sm:$0xff]
        %v422 = vld [vmem:[#allocation2 + $0x20] sm:$0xff]
        %v423 = vld [vmem:[#allocation2 + $0x28] sm:$0xff]
        %v424 = vld [vmem:[#allocation2 + $0x30] sm:$0xff]
        %v425 = vld [vmem:[#allocation2 + $0x38] sm:$0xff]
        %v426 = vld [vmem:[#allocation2 + $0x40] sm:$0xff]
        %v427 = vld [vmem:[#allocation2 + $0x48] sm:$0xff]
        %v428 = vld [vmem:[#allocation2 + $0x50] sm:$0xff]
        %v429 = vld [vmem:[#allocation2 + $0x58] sm:$0xff]
        %v430 = vld [vmem:[#allocation2 + $0x60] sm:$0xff]
        %v431 = vld [vmem:[#allocation2 + $0x68] sm:$0xff]
        %v432 = vld [vmem:[#allocation2 + $0x70] sm:$0xff]
        %v433 = vld [vmem:[#allocation2 + $0x78] sm:$0xff]
        %v434 = vld [vmem:[#allocation2 + $0x80] sm:$0xff]
        %v435 = vld [vmem:[#allocation2 + $0x88] sm:$0xff]
        %v436 = vld [vmem:[#allocation2 + $0x90] sm:$0xff]
        %v437 = vld [vmem:[#allocation2 + $0x98] sm:$0xff]
        %v438 = vld [vmem:[#allocation2 + $0xa0] sm:$0xff]
        %v439 = vld [vmem:[#allocation2 + $0xa8] sm:$0xff]
        %v440 = vld [vmem:[#allocation2 + $0xb0] sm:$0xff]
        %v441 = vld [vmem:[#allocation2 + $0xb8] sm:$0xff]
        %v442 = vld [vmem:[#allocation2 + $0xc0] sm:$0xff]
        %v443 = vld [vmem:[#allocation2 + $0xc8] sm:$0xff]
        %v444 = vld [vmem:[#allocation2 + $0xd0] sm:$0xff]
        %v445 = vld [vmem:[#allocation2 + $0xd8] sm:$0xff]
        %v446 = vld [vmem:[#allocation2 + $0xe0] sm:$0xff]
        %v447 = vld [vmem:[#allocation2 + $0xe8] sm:$0xff]
        %v448 = vld [vmem:[#allocation2 + $0xf0] sm:$0xff]
        %v449 = vld [vmem:[#allocation2 + $0xf8] sm:$0xff]
        %v450 = vld [vmem:[#allocation2 + $0x100] sm:$0xff]
        %v451 = vld [vmem:[#allocation2 + $0x108] sm:$0xff]
        %v452 = vld [vmem:[#allocation2 + $0x110] sm:$0xff]
        %v453 = vld [vmem:[#allocation2 + $0x118] sm:$0xff]
        %v454 = vld [vmem:[#allocation2 + $0x120] sm:$0xff]
        %v455 = vld [vmem:[#allocation2 + $0x128] sm:$0xff]
        %v456 = vld [vmem:[#allocation2 + $0x130] sm:$0xff]
        %v457 = vld [vmem:[#allocation2 + $0x138] sm:$0xff]
        %v458 = vld [vmem:[#allocation2 + $0x140] sm:$0xff]
        %v459 = vld [vmem:[#allocation2 + $0x148] sm:$0xff]
        %v460 = vld [vmem:[#allocation2 + $0x150] sm:$0xff]
        %v461 = vld [vmem:[#allocation2 + $0x158] sm:$0xff]
        %v462 = vld [vmem:[#allocation2 + $0x160] sm:$0xff]
        %v463 = vld [vmem:[#allocation2 + $0x168] sm:$0xff]
        %v464 = vld [vmem:[#allocation2 + $0x170] sm:$0xff]
        %v465 = vld [vmem:[#allocation2 + $0x178] sm:$0xff]
        %v466 = vld [vmem:[#allocation2 + $0x180] sm:$0xff]
        %v467 = vld [vmem:[#allocation2 + $0x188] sm:$0xff]
        %v468 = vld [vmem:[#allocation2 + $0x190] sm:$0xff]
        %v469 = vld [vmem:[#allocation2 + $0x198] sm:$0xff]
        %v470 = vld [vmem:[#allocation2 + $0x1a0] sm:$0xff]
        %v471 = vld [vmem:[#allocation2 + $0x1a8] sm:$0xff]
        %v472 = vld [vmem:[#allocation2 + $0x1b0] sm:$0xff]
        %v473 = vld [vmem:[#allocation2 + $0x1b8] sm:$0xff]
        %v474 = vld [vmem:[#allocation2 + $0x1c0] sm:$0xff]
        %v475 = vld [vmem:[#allocation2 + $0x1c8] sm:$0xff]
        %v476 = vld [vmem:[#allocation2 + $0x1d0] sm:$0xff]
        %v477 = vld [vmem:[#allocation2 + $0x1d8] sm:$0xff]
        %v478 = vld [vmem:[#allocation2 + $0x1e0] sm:$0xff]
        %v479 = vld [vmem:[#allocation2 + $0x1e8] sm:$0xff]
        %v480 = vld [vmem:[#allocation2 + $0x1f0] sm:$0xff]
        %v481 = vld [vmem:[#allocation2 + $0x1f8] sm:$0xff]
        %v482 = vld [vmem:[#allocation2 + $0x200] sm:$0xff]
        %v483 = vld [vmem:[#allocation2 + $0x208] sm:$0xff]
        %v484 = vld [vmem:[#allocation2 + $0x210] sm:$0xff]
        %v485 = vld [vmem:[#allocation2 + $0x218] sm:$0xff]
        %v486 = vld [vmem:[#allocation2 + $0x220] sm:$0xff]
        %v487 = vld [vmem:[#allocation2 + $0x228] sm:$0xff]
        %v488 = vld [vmem:[#allocation2 + $0x230] sm:$0xff]
        %v489 = vld [vmem:[#allocation2 + $0x238] sm:$0xff]
        %v490 = vld [vmem:[#allocation2 + $0x240] sm:$0xff]
        %v491 = vld [vmem:[#allocation2 + $0x248] sm:$0xff]
        %v492 = vld [vmem:[#allocation2 + $0x250] sm:$0xff]
        %v493 = vld [vmem:[#allocation2 + $0x258] sm:$0xff]
        %v494 = vld [vmem:[#allocation2 + $0x260] sm:$0xff]
        %v495 = vld [vmem:[#allocation2 + $0x268] sm:$0xff]
        %v496 = vld [vmem:[#allocation2 + $0x270] sm:$0xff]
        %v497 = vld [vmem:[#allocation2 + $0x278] sm:$0xff]
        %v498 = vld [vmem:[#allocation2 + $0x280] sm:$0xff]
        %v499 = vld [vmem:[#allocation2 + $0x288] sm:$0xff]
        %v500 = vld [vmem:[#allocation2 + $0x290] sm:$0xff]
        %v501 = vld [vmem:[#allocation2 + $0x298] sm:$0xff]
        %v502 = vld [vmem:[#allocation2 + $0x2a0] sm:$0xff]
        %v503 = vld [vmem:[#allocation2 + $0x2a8] sm:$0xff]
        %v504 = vld [vmem:[#allocation2 + $0x2b0] sm:$0xff]
        %v505 = vld [vmem:[#allocation2 + $0x2b8] sm:$0xff]
        %v506 = vld [vmem:[#allocation2 + $0x2c0] sm:$0xff]
        %v507 = vld [vmem:[#allocation2 + $0x2c8] sm:$0xff]
        %v508 = vld [vmem:[#allocation2 + $0x2d0] sm:$0xff]
        %v509 = vld [vmem:[#allocation2 + $0x2d8] sm:$0xff]
        %v510 = vld [vmem:[#allocation2 + $0x2e0] sm:$0xff]
        %v511 = vld [vmem:[#allocation2 + $0x2e8] sm:$0xff]
        %v512 = vld [vmem:[#allocation2 + $0x2f0] sm:$0xff]
        %v513 = vld [vmem:[#allocation2 + $0x2f8] sm:$0xff]
        %v514 = vld [vmem:[#allocation2 + $0x300] sm:$0xff]
        %v515 = vld [vmem:[#allocation2 + $0x308] sm:$0xff]
        %v516 = vld [vmem:[#allocation2 + $0x310] sm:$0xff]
        %v517 = vld [vmem:[#allocation2 + $0x318] sm:$0xff]
        %v518 = vld [vmem:[#allocation2 + $0x320] sm:$0xff]
        %v519 = vld [vmem:[#allocation2 + $0x328] sm:$0xff]
        %v520 = vld [vmem:[#allocation2 + $0x330] sm:$0xff]
        %v521 = vld [vmem:[#allocation2 + $0x338] sm:$0xff]
        %v522 = vld [vmem:[#allocation2 + $0x340] sm:$0xff]
        %v523 = vld [vmem:[#allocation2 + $0x348] sm:$0xff]
        %v524 = vld [vmem:[#allocation2 + $0x350] sm:$0xff]
        %v525 = vld [vmem:[#allocation2 + $0x358] sm:$0xff]
        %v526 = vld [vmem:[#allocation2 + $0x360] sm:$0xff]
        %v527 = vld [vmem:[#allocation2 + $0x368] sm:$0xff]
        %v528 = vld [vmem:[#allocation2 + $0x370] sm:$0xff]
        %v529 = vld [vmem:[#allocation2 + $0x378] sm:$0xff]
        %v530 = vld [vmem:[#allocation2 + $0x380] sm:$0xff]
        %v531 = vld [vmem:[#allocation2 + $0x388] sm:$0xff]
        %v532 = vld [vmem:[#allocation2 + $0x390] sm:$0xff]
        %v533 = vld [vmem:[#allocation2 + $0x398] sm:$0xff]
        %v534 = vld [vmem:[#allocation2 + $0x3a0] sm:$0xff]
        %v535 = vld [vmem:[#allocation2 + $0x3a8] sm:$0xff]
        %v536 = vld [vmem:[#allocation2 + $0x3b0] sm:$0xff]
        %v537 = vld [vmem:[#allocation2 + $0x3b8] sm:$0xff]
        %v538 = vld [vmem:[#allocation2 + $0x3c0] sm:$0xff]
        %v539 = vld [vmem:[#allocation2 + $0x3c8] sm:$0xff]
        %v540 = vld [vmem:[#allocation2 + $0x3d0] sm:$0xff]
        %v541 = vld [vmem:[#allocation2 + $0x3d8] sm:$0xff]
        %v542 = vld [vmem:[#allocation2 + $0x3e0] sm:$0xff]
        %v543 = vld [vmem:[#allocation2 + $0x3e8] sm:$0xff]
        %v544 = vld [vmem:[#allocation2 + $0x3f0] sm:$0xff]
        %v545 = vld [vmem:[#allocation2 + $0x3f8] sm:$0xff]
        %v546 = vld [vmem:[#allocation2 + $0x400] sm:$0xff]
        %v547 = vld [vmem:[#allocation2 + $0x408] sm:$0xff]
        %v548 = vld [vmem:[#allocation2 + $0x410] sm:$0xff]
        %v549 = vld [vmem:[#allocation2 + $0x418] sm:$0xff]
        %v550 = vld [vmem:[#allocation2 + $0x420] sm:$0xff]
        %v551 = vld [vmem:[#allocation2 + $0x428] sm:$0xff]
        %v552 = vld [vmem:[#allocation2 + $0x430] sm:$0xff]
        %v553 = vld [vmem:[#allocation2 + $0x438] sm:$0xff]
        %v554 = vld [vmem:[#allocation2 + $0x440] sm:$0xff]
        %v555 = vld [vmem:[#allocation2 + $0x448] sm:$0xff]
        %v556 = vld [vmem:[#allocation2 + $0x450] sm:$0xff]
        %v557 = vld [vmem:[#allocation2 + $0x458] sm:$0xff]
        %v558 = vld [vmem:[#allocation2 + $0x460] sm:$0xff]
        %v559 = vld [vmem:[#allocation2 + $0x468] sm:$0xff]
        %v560 = vld [vmem:[#allocation2 + $0x470] sm:$0xff]
        %v561 = vld [vmem:[#allocation2 + $0x478] sm:$0xff]
        %v562 = vld [vmem:[#allocation2 + $0x480] sm:$0xff]
        %v563 = vld [vmem:[#allocation2 + $0x488] sm:$0xff]
        %v564 = vld [vmem:[#allocation2 + $0x490] sm:$0xff]
        %v565 = vld [vmem:[#allocation2 + $0x498] sm:$0xff]
        %v566 = vld [vmem:[#allocation2 + $0x4a0] sm:$0xff]
        %v567 = vld [vmem:[#allocation2 + $0x4a8] sm:$0xff]
        %v568 = vld [vmem:[#allocation2 + $0x4b0] sm:$0xff]
        %v569 = vld [vmem:[#allocation2 + $0x4b8] sm:$0xff]
        %v570 = vld [vmem:[#allocation2 + $0x4c0] sm:$0xff]
        %v571 = vld [vmem:[#allocation2 + $0x4c8] sm:$0xff]
        %v572 = vld [vmem:[#allocation2 + $0x4d0] sm:$0xff]
        %v573 = vld [vmem:[#allocation2 + $0x4d8] sm:$0xff]
        %v574 = vld [vmem:[#allocation2 + $0x4e0] sm:$0xff]
        %v575 = vld [vmem:[#allocation2 + $0x4e8] sm:$0xff]
        %v576 = vld [vmem:[#allocation2 + $0x4f0] sm:$0xff]
        %v577 = vld [vmem:[#allocation2 + $0x4f8] sm:$0xff]
        %v578 = vld [vmem:[#allocation2 + $0x500] sm:$0xff]
        %v579 = vld [vmem:[#allocation2 + $0x508] sm:$0xff]
        %v580 = vld [vmem:[#allocation2 + $0x510] sm:$0xff]
        %v581 = vld [vmem:[#allocation2 + $0x518] sm:$0xff]
        %v582 = vld [vmem:[#allocation2 + $0x520] sm:$0xff]
        %v583 = vld [vmem:[#allocation2 + $0x528] sm:$0xff]
        %v584 = vld [vmem:[#allocation2 + $0x530] sm:$0xff]
        %v585 = vld [vmem:[#allocation2 + $0x538] sm:$0xff]
        %v586 = vld [vmem:[#allocation2 + $0x540] sm:$0xff]
        %v587 = vld [vmem:[#allocation2 + $0x548] sm:$0xff]
        %v588 = vld [vmem:[#allocation2 + $0x550] sm:$0xff]
        %v589 = vld [vmem:[#allocation2 + $0x558] sm:$0xff]
        %v590 = vld [vmem:[#allocation2 + $0x560] sm:$0xff]
        %v591 = vld [vmem:[#allocation2 + $0x568] sm:$0xff]
        %v592 = vld [vmem:[#allocation2 + $0x570] sm:$0xff]
        %v593 = vld [vmem:[#allocation2 + $0x578] sm:$0xff]
        %v594 = vld [vmem:[#allocation2 + $0x580] sm:$0xff]
        %v595 = vld [vmem:[#allocation2 + $0x588] sm:$0xff]
        %v596 = vld [vmem:[#allocation2 + $0x590] sm:$0xff]
        %v597 = vld [vmem:[#allocation2 + $0x598] sm:$0xff]
        %v598 = vld [vmem:[#allocation2 + $0x5a0] sm:$0xff]
        %v599 = vld [vmem:[#allocation2 + $0x5a8] sm:$0xff]
        %v600 = vld [vmem:[#allocation2 + $0x5b0] sm:$0xff]
        %v601 = vld [vmem:[#allocation2 + $0x5b8] sm:$0xff]
        %v602 = vld [vmem:[#allocation2 + $0x5c0] sm:$0xff]
        %v603 = vld [vmem:[#allocation2 + $0x5c8] sm:$0xff]
        %v604 = vld [vmem:[#allocation2 + $0x5d0] sm:$0xff]
        %v605 = vld [vmem:[#allocation2 + $0x5d8] sm:$0xff]
        %v606 = vld [vmem:[#allocation2 + $0x5e0] sm:$0xff]
        %v607 = vld [vmem:[#allocation2 + $0x5e8] sm:$0xff]
        %v608 = vld [vmem:[#allocation2 + $0x5f0] sm:$0xff]
        %v609 = vld [vmem:[#allocation2 + $0x5f8] sm:$0xff]
        %v610 = vld [vmem:[#allocation3] sm:$0xff]
        %v611 = vld [vmem:[#allocation3 + $0x8] sm:$0xff]
        %v612 = vld [vmem:[#allocation3 + $0x10] sm:$0xff]
        %v613 = vld [vmem:[#allocation3 + $0x18] sm:$0xff]
        %v614 = vld [vmem:[#allocation3 + $0x20] sm:$0xff]
        %v615 = vld [vmem:[#allocation3 + $0x28] sm:$0xff]
        %v616 = vld [vmem:[#allocation3 + $0x30] sm:$0xff]
        %v617 = vld [vmem:[#allocation3 + $0x38] sm:$0xff]
        %v618 = vld [vmem:[#allocation3 + $0x40] sm:$0xff]
        %v619 = vld [vmem:[#allocation3 + $0x48] sm:$0xff]
        %v620 = vld [vmem:[#allocation3 + $0x50] sm:$0xff]
        %v621 = vld [vmem:[#allocation3 + $0x58] sm:$0xff]
        %v622 = vld [vmem:[#allocation3 + $0x60] sm:$0xff]
        %v623 = vld [vmem:[#allocation3 + $0x68] sm:$0xff]
        %v624 = vld [vmem:[#allocation3 + $0x70] sm:$0xff]
        %v625 = vld [vmem:[#allocation3 + $0x78] sm:$0xff]
        %v626 = vld [vmem:[#allocation3 + $0x80] sm:$0xff]
        %v627 = vld [vmem:[#allocation3 + $0x88] sm:$0xff]
        %v628 = vld [vmem:[#allocation3 + $0x90] sm:$0xff]
        %v629 = vld [vmem:[#allocation3 + $0x98] sm:$0xff]
        %v630 = vld [vmem:[#allocation3 + $0xa0] sm:$0xff]
        %v631 = vld [vmem:[#allocation3 + $0xa8] sm:$0xff]
        %v632 = vld [vmem:[#allocation3 + $0xb0] sm:$0xff]
        %v633 = vld [vmem:[#allocation3 + $0xb8] sm:$0xff]
        %v634 = vld [vmem:[#allocation3 + $0xc0] sm:$0xff]
        %v635 = vld [vmem:[#allocation3 + $0xc8] sm:$0xff]
        %v636 = vld [vmem:[#allocation3 + $0xd0] sm:$0xff]
        %v637 = vld [vmem:[#allocation3 + $0xd8] sm:$0xff]
        %v638 = vld [vmem:[#allocation3 + $0xe0] sm:$0xff]
        %v639 = vld [vmem:[#allocation3 + $0xe8] sm:$0xff]
        %v640 = vld [vmem:[#allocation3 + $0xf0] sm:$0xff]
        %v641 = vld [vmem:[#allocation3 + $0xf8] sm:$0xff]
        %v642 = vld [vmem:[#allocation3 + $0x100] sm:$0xff]
        %v643 = vld [vmem:[#allocation3 + $0x108] sm:$0xff]
        %v644 = vld [vmem:[#allocation3 + $0x110] sm:$0xff]
        %v645 = vld [vmem:[#allocation3 + $0x118] sm:$0xff]
        %v646 = vld [vmem:[#allocation3 + $0x120] sm:$0xff]
        %v647 = vld [vmem:[#allocation3 + $0x128] sm:$0xff]
        %v648 = vld [vmem:[#allocation3 + $0x130] sm:$0xff]
        %v649 = vld [vmem:[#allocation3 + $0x138] sm:$0xff]
        %v650 = vld [vmem:[#allocation3 + $0x140] sm:$0xff]
        %v651 = vld [vmem:[#allocation3 + $0x148] sm:$0xff]
        %v652 = vld [vmem:[#allocation3 + $0x150] sm:$0xff]
        %v653 = vld [vmem:[#allocation3 + $0x158] sm:$0xff]
        %v654 = vld [vmem:[#allocation3 + $0x160] sm:$0xff]
        %v655 = vld [vmem:[#allocation3 + $0x168] sm:$0xff]
        %v656 = vld [vmem:[#allocation3 + $0x170] sm:$0xff]
        %v657 = vld [vmem:[#allocation3 + $0x178] sm:$0xff]
        %v658 = vld [vmem:[#allocation3 + $0x180] sm:$0xff]
        %v659 = vld [vmem:[#allocation3 + $0x188] sm:$0xff]
        %v660 = vld [vmem:[#allocation3 + $0x190] sm:$0xff]
        %v661 = vld [vmem:[#allocation3 + $0x198] sm:$0xff]
        %v662 = vld [vmem:[#allocation3 + $0x1a0] sm:$0xff]
        %v663 = vld [vmem:[#allocation3 + $0x1a8] sm:$0xff]
        %v664 = vld [vmem:[#allocation3 + $0x1b0] sm:$0xff]
        %v665 = vld [vmem:[#allocation3 + $0x1b8] sm:$0xff]
        %v666 = vld [vmem:[#allocation3 + $0x1c0] sm:$0xff]
        %v667 = vld [vmem:[#allocation3 + $0x1c8] sm:$0xff]
        %v668 = vld [vmem:[#allocation3 + $0x1d0] sm:$0xff]
        %v669 = vld [vmem:[#allocation3 + $0x1d8] sm:$0xff]
        %v670 = vld [vmem:[#allocation3 + $0x1e0] sm:$0xff]
        %v671 = vld [vmem:[#allocation3 + $0x1e8] sm:$0xff]
        %v672 = vld [vmem:[#allocation3 + $0x1f0] sm:$0xff]
        %v673 = vld [vmem:[#allocation3 + $0x1f8] sm:$0xff]
        %v674 = vld [vmem:[#allocation3 + $0x200] sm:$0xff]
        %v675 = vld [vmem:[#allocation3 + $0x208] sm:$0xff]
        %v676 = vld [vmem:[#allocation3 + $0x210] sm:$0xff]
        %v677 = vld [vmem:[#allocation3 + $0x218] sm:$0xff]
        %v678 = vld [vmem:[#allocation3 + $0x220] sm:$0xff]
        %v679 = vld [vmem:[#allocation3 + $0x228] sm:$0xff]
        %v680 = vld [vmem:[#allocation3 + $0x230] sm:$0xff]
        %v681 = vld [vmem:[#allocation3 + $0x238] sm:$0xff]
        %v682 = vld [vmem:[#allocation3 + $0x240] sm:$0xff]
        %v683 = vld [vmem:[#allocation3 + $0x248] sm:$0xff]
        %v684 = vld [vmem:[#allocation3 + $0x250] sm:$0xff]
        %v685 = vld [vmem:[#allocation3 + $0x258] sm:$0xff]
        %v686 = vld [vmem:[#allocation3 + $0x260] sm:$0xff]
        %v687 = vld [vmem:[#allocation3 + $0x268] sm:$0xff]
        %v688 = vld [vmem:[#allocation3 + $0x270] sm:$0xff]
        %v689 = vld [vmem:[#allocation3 + $0x278] sm:$0xff]
        %v690 = vld [vmem:[#allocation3 + $0x280] sm:$0xff]
        %v691 = vld [vmem:[#allocation3 + $0x288] sm:$0xff]
        %v692 = vld [vmem:[#allocation3 + $0x290] sm:$0xff]
        %v693 = vld [vmem:[#allocation3 + $0x298] sm:$0xff]
        %v694 = vld [vmem:[#allocation3 + $0x2a0] sm:$0xff]
        %v695 = vld [vmem:[#allocation3 + $0x2a8] sm:$0xff]
        %v696 = vld [vmem:[#allocation3 + $0x2b0] sm:$0xff]
        %v697 = vld [vmem:[#allocation3 + $0x2b8] sm:$0xff]
        %v698 = vld [vmem:[#allocation3 + $0x2c0] sm:$0xff]
        %v699 = vld [vmem:[#allocation3 + $0x2c8] sm:$0xff]
        %v700 = vld [vmem:[#allocation3 + $0x2d0] sm:$0xff]
        %v701 = vld [vmem:[#allocation3 + $0x2d8] sm:$0xff]
        %v702 = vld [vmem:[#allocation3 + $0x2e0] sm:$0xff]
        %v703 = vld [vmem:[#allocation3 + $0x2e8] sm:$0xff]
        %v704 = vld [vmem:[#allocation3 + $0x2f0] sm:$0xff]
        %v705 = vld [vmem:[#allocation3 + $0x2f8] sm:$0xff]
        %v706 = vld [vmem:[#allocation3 + $0x300] sm:$0xff]
        %v707 = vld [vmem:[#allocation3 + $0x308] sm:$0xff]
        %v708 = vld [vmem:[#allocation3 + $0x310] sm:$0xff]
        %v709 = vld [vmem:[#allocation3 + $0x318] sm:$0xff]
        %v710 = vld [vmem:[#allocation3 + $0x320] sm:$0xff]
        %v711 = vld [vmem:[#allocation3 + $0x328] sm:$0xff]
        %v712 = vld [vmem:[#allocation3 + $0x330] sm:$0xff]
        %v713 = vld [vmem:[#allocation3 + $0x338] sm:$0xff]
        %v714 = vld [vmem:[#allocation3 + $0x340] sm:$0xff]
        %v715 = vld [vmem:[#allocation3 + $0x348] sm:$0xff]
        %v716 = vld [vmem:[#allocation3 + $0x350] sm:$0xff]
        %v717 = vld [vmem:[#allocation3 + $0x358] sm:$0xff]
        %v718 = vld [vmem:[#allocation3 + $0x360] sm:$0xff]
        %v719 = vld [vmem:[#allocation3 + $0x368] sm:$0xff]
        %v720 = vld [vmem:[#allocation3 + $0x370] sm:$0xff]
        %v721 = vld [vmem:[#allocation3 + $0x378] sm:$0xff]
        %v722 = vld [vmem:[#allocation3 + $0x380] sm:$0xff]
        %v723 = vld [vmem:[#allocation3 + $0x388] sm:$0xff]
        %v724 = vld [vmem:[#allocation3 + $0x390] sm:$0xff]
        %v725 = vld [vmem:[#allocation3 + $0x398] sm:$0xff]
        %v726 = vld [vmem:[#allocation3 + $0x3a0] sm:$0xff]
        %v727 = vld [vmem:[#allocation3 + $0x3a8] sm:$0xff]
        %v728 = vld [vmem:[#allocation3 + $0x3b0] sm:$0xff]
        %v729 = vld [vmem:[#allocation3 + $0x3b8] sm:$0xff]
        %v730 = vld [vmem:[#allocation3 + $0x3c0] sm:$0xff]
        %v731 = vld [vmem:[#allocation3 + $0x3c8] sm:$0xff]
        %v732 = vld [vmem:[#allocation3 + $0x3d0] sm:$0xff]
        %v733 = vld [vmem:[#allocation3 + $0x3d8] sm:$0xff]
        %v734 = vld [vmem:[#allocation3 + $0x3e0] sm:$0xff]
        %v735 = vld [vmem:[#allocation3 + $0x3e8] sm:$0xff]
        %v736 = vld [vmem:[#allocation3 + $0x3f0] sm:$0xff]
        %v737 = vld [vmem:[#allocation3 + $0x3f8] sm:$0xff]
        %v738 = vld [vmem:[%s195] sm:$0xff]
        %v739 = vld [vmem:[%s195 + $0x8] sm:$0xff]
        %v740 = vld [vmem:[%s195 + $0x10] sm:$0xff]
        %v741 = vld [vmem:[%s195 + $0x18] sm:$0xff]
        %v742 = vld [vmem:[%s195 + $0x20] sm:$0xff]
        %v743 = vld [vmem:[%s195 + $0x28] sm:$0xff]
        %v744 = vld [vmem:[%s195 + $0x30] sm:$0xff]
        %v745 = vld [vmem:[%s195 + $0x38] sm:$0xff]
        %v746 = vld [vmem:[%s195 + $0x40] sm:$0xff]
        %v747 = vld [vmem:[%s195 + $0x48] sm:$0xff]
        %v748 = vld [vmem:[%s195 + $0x50] sm:$0xff]
        %v749 = vld [vmem:[%s195 + $0x58] sm:$0xff]
        %v750 = vld [vmem:[%s195 + $0x60] sm:$0xff]
        %v751 = vld [vmem:[%s195 + $0x68] sm:$0xff]
        %v752 = vld [vmem:[%s195 + $0x70] sm:$0xff]
        %v753 = vld [vmem:[%s195 + $0x78] sm:$0xff]
        %v754 = vld [vmem:[%s195 + $0x80] sm:$0xff]
        %v755 = vld [vmem:[%s195 + $0x88] sm:$0xff]
        %v756 = vld [vmem:[%s195 + $0x90] sm:$0xff]
        %v757 = vld [vmem:[%s195 + $0x98] sm:$0xff]
        %v758 = vld [vmem:[%s195 + $0xa0] sm:$0xff]
        %v759 = vld [vmem:[%s195 + $0xa8] sm:$0xff]
        %v760 = vld [vmem:[%s195 + $0xb0] sm:$0xff]
        %v761 = vld [vmem:[%s195 + $0xb8] sm:$0xff]
        %v762 = vld [vmem:[%s195 + $0xc0] sm:$0xff]
        %v763 = vld [vmem:[%s195 + $0xc8] sm:$0xff]
        %v764 = vld [vmem:[%s195 + $0xd0] sm:$0xff]
        %v765 = vld [vmem:[%s195 + $0xd8] sm:$0xff]
        %v766 = vld [vmem:[%s195 + $0xe0] sm:$0xff]
        %v767 = vld [vmem:[%s195 + $0xe8] sm:$0xff]
        %v768 = vld [vmem:[%s195 + $0xf0] sm:$0xff]
        %v769 = vld [vmem:[%s195 + $0xf8] sm:$0xff]
        %v770 = vld [vmem:[%s195 + $0x100] sm:$0xff]
        %v771 = vld [vmem:[%s195 + $0x108] sm:$0xff]
        %v772 = vld [vmem:[%s195 + $0x110] sm:$0xff]
        %v773 = vld [vmem:[%s195 + $0x118] sm:$0xff]
        %v774 = vld [vmem:[%s195 + $0x120] sm:$0xff]
        %v775 = vld [vmem:[%s195 + $0x128] sm:$0xff]
        %v776 = vld [vmem:[%s195 + $0x130] sm:$0xff]
        %v777 = vld [vmem:[%s195 + $0x138] sm:$0xff]
        %v778 = vld [vmem:[%s195 + $0x140] sm:$0xff]
        %v779 = vld [vmem:[%s195 + $0x148] sm:$0xff]
        %v780 = vld [vmem:[%s195 + $0x150] sm:$0xff]
        %v781 = vld [vmem:[%s195 + $0x158] sm:$0xff]
        %v782 = vld [vmem:[%s195 + $0x160] sm:$0xff]
        %v783 = vld [vmem:[%s195 + $0x168] sm:$0xff]
        %v784 = vld [vmem:[%s195 + $0x170] sm:$0xff]
        %v785 = vld [vmem:[%s195 + $0x178] sm:$0xff]
        %v786 = vld [vmem:[%s195 + $0x180] sm:$0xff]
        %v787 = vld [vmem:[%s195 + $0x188] sm:$0xff]
        %v788 = vld [vmem:[%s195 + $0x190] sm:$0xff]
        %v789 = vld [vmem:[%s195 + $0x198] sm:$0xff]
        %v790 = vld [vmem:[%s195 + $0x1a0] sm:$0xff]
        %v791 = vld [vmem:[%s195 + $0x1a8] sm:$0xff]
        %v792 = vld [vmem:[%s195 + $0x1b0] sm:$0xff]
        %v793 = vld [vmem:[%s195 + $0x1b8] sm:$0xff]
        %v794 = vld [vmem:[%s195 + $0x1c0] sm:$0xff]
        %v795 = vld [vmem:[%s195 + $0x1c8] sm:$0xff]
        %v796 = vld [vmem:[%s195 + $0x1d0] sm:$0xff]
        %v797 = vld [vmem:[%s195 + $0x1d8] sm:$0xff]
        %v798 = vld [vmem:[%s195 + $0x1e0] sm:$0xff]
        %v799 = vld [vmem:[%s195 + $0x1e8] sm:$0xff]
        %v800 = vld [vmem:[%s195 + $0x1f0] sm:$0xff]
        %v801 = vld [vmem:[%s195 + $0x1f8] sm:$0xff]
        %v802 = vld [vmem:[%s195 + $0x200] sm:$0xff]
        %v803 = vld [vmem:[%s195 + $0x208] sm:$0xff]
        %v804 = vld [vmem:[%s195 + $0x210] sm:$0xff]
        %v805 = vld [vmem:[%s195 + $0x218] sm:$0xff]
        %v806 = vld [vmem:[%s195 + $0x220] sm:$0xff]
        %v807 = vld [vmem:[%s195 + $0x228] sm:$0xff]
        %v808 = vld [vmem:[%s195 + $0x230] sm:$0xff]
        %v809 = vld [vmem:[%s195 + $0x238] sm:$0xff]
        %v810 = vld [vmem:[%s195 + $0x240] sm:$0xff]
        %v811 = vld [vmem:[%s195 + $0x248] sm:$0xff]
        %v812 = vld [vmem:[%s195 + $0x250] sm:$0xff]
        %v813 = vld [vmem:[%s195 + $0x258] sm:$0xff]
        %v814 = vld [vmem:[%s195 + $0x260] sm:$0xff]
        %v815 = vld [vmem:[%s195 + $0x268] sm:$0xff]
        %v816 = vld [vmem:[%s195 + $0x270] sm:$0xff]
        %v817 = vld [vmem:[%s195 + $0x278] sm:$0xff]
        %v818 = vld [vmem:[%s195 + $0x280] sm:$0xff]
        %v819 = vld [vmem:[%s195 + $0x288] sm:$0xff]
        %v820 = vld [vmem:[%s195 + $0x290] sm:$0xff]
        %v821 = vld [vmem:[%s195 + $0x298] sm:$0xff]
        %v822 = vld [vmem:[%s195 + $0x2a0] sm:$0xff]
        %v823 = vld [vmem:[%s195 + $0x2a8] sm:$0xff]
        %v824 = vld [vmem:[%s195 + $0x2b0] sm:$0xff]
        %v825 = vld [vmem:[%s195 + $0x2b8] sm:$0xff]
        %v826 = vld [vmem:[%s195 + $0x2c0] sm:$0xff]
        %v827 = vld [vmem:[%s195 + $0x2c8] sm:$0xff]
        %v828 = vld [vmem:[%s195 + $0x2d0] sm:$0xff]
        %v829 = vld [vmem:[%s195 + $0x2d8] sm:$0xff]
        %v830 = vld [vmem:[%s195 + $0x2e0] sm:$0xff]
        %v831 = vld [vmem:[%s195 + $0x2e8] sm:$0xff]
        %v832 = vld [vmem:[%s195 + $0x2f0] sm:$0xff]
        %v833 = vld [vmem:[%s195 + $0x2f8] sm:$0xff]
        %834 = vmatprep.subr.mxu0 %v784
        %835 = vmatpush1.msra.mxu0 %v783
        %836 = vmatprep.subr.mxu0 %v781
        %837 = vmatpush1.msra.mxu0 %v780
        %838 = vmatprep.subr.mxu0 %v778
        %839 = vmatpush1.msra.mxu0 %v777
        %840 = vmatprep.subr.mxu0 %v775
        %841 = vmatpush1.msra.mxu0 %v774
        %842 = vmatprep.subr.mxu0 %v772
        %843 = vmatpush1.msra.mxu0 %v771
        %844 = vmatprep.subr.mxu0 %v769
        %845 = vmatpush1.msra.mxu0 %v768
        %846 = vmatprep.subr.mxu0 %v766
        %847 = vmatpush1.msra.mxu0 %v765
        %848 = vmatprep.subr.mxu0 %v763
        %849 = vmatpush1.msra.mxu0 %v762
        %850 = vmatprep.subr.mxu0 %v760
        %851 = vmatpush1.msra.mxu0 %v759
        %852 = vmatprep.subr.mxu0 %v757
        %853 = vmatpush1.msra.mxu0 %v756
        %854 = vmatprep.subr.mxu0 %v754
        %855 = vmatpush1.msra.mxu0 %v753
        %856 = vmatprep.subr.mxu0 %v751
        %857 = vmatpush1.msra.mxu0 %v750
        %858 = vmatprep.subr.mxu0 %v748
        %859 = vmatpush1.msra.mxu0 %v747
        %860 = vmatprep.subr.mxu0 %v745
        %861 = vmatpush1.msra.mxu0 %v744
        %862 = vmatprep.subr.mxu0 %v742
        %863 = vmatpush1.msra.mxu0 %v741
        %864 = vmatprep.subr.mxu0 %v739
        %865 = vmatpush1.msra.mxu0 %v738
        %866 = vmatprep.subr.mxu0 %v832
        %867 = vmatpush2.msra.mxu0 %v831
        %868 = vmatprep.subr.mxu0 %v829
        %869 = vmatpush2.msra.mxu0 %v828
        %870 = vmatprep.subr.mxu0 %v826
        %871 = vmatpush2.msra.mxu0 %v825
        %872 = vmatprep.subr.mxu0 %v823
        %873 = vmatpush2.msra.mxu0 %v822
        %874 = vmatprep.subr.mxu0 %v820
        %875 = vmatpush2.msra.mxu0 %v819
        %876 = vmatprep.subr.mxu0 %v817
        %877 = vmatpush2.msra.mxu0 %v816
        %878 = vmatprep.subr.mxu0 %v814
        %879 = vmatpush2.msra.mxu0 %v813
        %880 = vmatprep.subr.mxu0 %v811
        %881 = vmatpush2.msra.mxu0 %v810
        %882 = vmatprep.subr.mxu0 %v808
        %883 = vmatpush2.msra.mxu0 %v807
        %884 = vmatprep.subr.mxu0 %v805
        %885 = vmatpush2.msra.mxu0 %v804
        %886 = vmatprep.subr.mxu0 %v802
        %887 = vmatpush2.msra.mxu0 %v801
        %888 = vmatprep.subr.mxu0 %v799
        %889 = vmatpush2.msra.mxu0 %v798
        %890 = vmatprep.subr.mxu0 %v796
        %891 = vmatpush2.msra.mxu0 %v795
        %892 = vmatprep.subr.mxu0 %v793
        %893 = vmatpush2.msra.mxu0 %v792
        %894 = vmatprep.subr.mxu0 %v790
        %895 = vmatpush2.msra.mxu0 %v789
        %896 = vmatprep.subr.mxu0 %v787
        %897 = vmatpush2.msra.mxu0 %v786
        %898 = vmatprep.mubr.f32.mxu0 %v611
        %899 = vmatmul.mubr.f32.gmra.mxu0 %v610
        %v900 = vpop.f32.mrf.mxu0
        %v901 = vadd.f32 0.0, %v900
        %v902 = vpop.f32.mrf.mxu0
        %v903 = vadd.f32 0.0, %v902
        %904 = vmatprep.mubr.f32.mxu0 %v613
        %905 = vmatmul.mubr.f32.gmra.mxu0 %v612
        %v906 = vpop.f32.mrf.mxu0
        %v907 = vadd.f32 0.0, %v906
        %v908 = vpop.f32.mrf.mxu0
        %v909 = vadd.f32 0.0, %v908
        %910 = vmatprep.mubr.f32.mxu0 %v615
        %911 = vmatmul.mubr.f32.gmra.mxu0 %v614
        %v912 = vpop.f32.mrf.mxu0
        %v913 = vadd.f32 0.0, %v912
        %v914 = vpop.f32.mrf.mxu0
        %v915 = vadd.f32 0.0, %v914
        %916 = vmatprep.mubr.f32.mxu0 %v617
        %917 = vmatmul.mubr.f32.gmra.mxu0 %v616
        %v918 = vpop.f32.mrf.mxu0
        %v919 = vadd.f32 0.0, %v918
        %v920 = vpop.f32.mrf.mxu0
        %v921 = vadd.f32 0.0, %v920
        %922 = vmatprep.mubr.f32.mxu0 %v619
        %923 = vmatmul.mubr.f32.gmra.mxu0 %v618
        %v924 = vpop.f32.mrf.mxu0
        %v925 = vadd.f32 0.0, %v924
        %v926 = vpop.f32.mrf.mxu0
        %v927 = vadd.f32 0.0, %v926
        %928 = vmatprep.mubr.f32.mxu0 %v621
        %929 = vmatmul.mubr.f32.gmra.mxu0 %v620
        %v930 = vpop.f32.mrf.mxu0
        %v931 = vadd.f32 0.0, %v930
        %v932 = vpop.f32.mrf.mxu0
        %v933 = vadd.f32 0.0, %v932
        %934 = vmatprep.mubr.f32.mxu0 %v623
        %935 = vmatmul.mubr.f32.gmra.mxu0 %v622
        %v936 = vpop.f32.mrf.mxu0
        %v937 = vadd.f32 0.0, %v936
        %v938 = vpop.f32.mrf.mxu0
        %v939 = vadd.f32 0.0, %v938
        %940 = vmatprep.mubr.f32.mxu0 %v625
        %941 = vmatmul.mubr.f32.gmra.mxu0 %v624
        %v942 = vpop.f32.mrf.mxu0
        %v943 = vadd.f32 0.0, %v942
        %v944 = vpop.f32.mrf.mxu0
        %v945 = vadd.f32 0.0, %v944
        %946 = vmatprep.mubr.f32.mxu0 %v627
        %947 = vmatmul.mubr.f32.gmra.mxu0 %v626
        %v948 = vpop.f32.mrf.mxu0
        %v949 = vadd.f32 0.0, %v948
        %v950 = vpop.f32.mrf.mxu0
        %v951 = vadd.f32 0.0, %v950
        %952 = vmatprep.mubr.f32.mxu0 %v629
        %953 = vmatmul.mubr.f32.gmra.mxu0 %v628
        %v954 = vpop.f32.mrf.mxu0
        %v955 = vadd.f32 0.0, %v954
        %v956 = vpop.f32.mrf.mxu0
        %v957 = vadd.f32 0.0, %v956
        %958 = vmatprep.mubr.f32.mxu0 %v631
        %959 = vmatmul.mubr.f32.gmra.mxu0 %v630
        %v960 = vpop.f32.mrf.mxu0
        %v961 = vadd.f32 0.0, %v960
        %v962 = vpop.f32.mrf.mxu0
        %v963 = vadd.f32 0.0, %v962
        %964 = vmatprep.mubr.f32.mxu0 %v633
        %965 = vmatmul.mubr.f32.gmra.mxu0 %v632
        %v966 = vpop.f32.mrf.mxu0
        %v967 = vadd.f32 0.0, %v966
        %v968 = vpop.f32.mrf.mxu0
        %v969 = vadd.f32 0.0, %v968
        %970 = vmatprep.mubr.f32.mxu0 %v635
        %971 = vmatmul.mubr.f32.gmra.mxu0 %v634
        %v972 = vpop.f32.mrf.mxu0
        %v973 = vadd.f32 0.0, %v972
        %v974 = vpop.f32.mrf.mxu0
        %v975 = vadd.f32 0.0, %v974
        %976 = vmatprep.mubr.f32.mxu0 %v637
        %977 = vmatmul.mubr.f32.gmra.mxu0 %v636
        %v978 = vpop.f32.mrf.mxu0
        %v979 = vadd.f32 0.0, %v978
        %v980 = vpop.f32.mrf.mxu0
        %v981 = vadd.f32 0.0, %v980
        %982 = vmatprep.mubr.f32.mxu0 %v639
        %983 = vmatmul.mubr.f32.gmra.mxu0 %v638
        %v984 = vpop.f32.mrf.mxu0
        %v985 = vadd.f32 0.0, %v984
        %v986 = vpop.f32.mrf.mxu0
        %v987 = vadd.f32 0.0, %v986
        %988 = vmatprep.mubr.f32.mxu0 %v641
        %989 = vmatmul.mubr.f32.gmra.mxu0 %v640
        %v990 = vpop.f32.mrf.mxu0
        %v991 = vadd.f32 0.0, %v990
        %v992 = vpop.f32.mrf.mxu0
        %v993 = vadd.f32 0.0, %v992
        %994 = vmatprep.mubr.f32.mxu0 %v643
        %995 = vmatmul.mubr.f32.gmra.mxu0 %v642
        %v996 = vpop.f32.mrf.mxu0
        %v997 = vadd.f32 0.0, %v996
        %v998 = vpop.f32.mrf.mxu0
        %v999 = vadd.f32 0.0, %v998
        %1000 = vmatprep.mubr.f32.mxu0 %v645
        %1001 = vmatmul.mubr.f32.gmra.mxu0 %v644
        %v1002 = vpop.f32.mrf.mxu0
        %v1003 = vadd.f32 0.0, %v1002
        %v1004 = vpop.f32.mrf.mxu0
        %v1005 = vadd.f32 0.0, %v1004
        %1006 = vmatprep.mubr.f32.mxu0 %v647
        %1007 = vmatmul.mubr.f32.gmra.mxu0 %v646
        %v1008 = vpop.f32.mrf.mxu0
        %v1009 = vadd.f32 0.0, %v1008
        %v1010 = vpop.f32.mrf.mxu0
        %v1011 = vadd.f32 0.0, %v1010
        %1012 = vmatprep.mubr.f32.mxu0 %v649
        %1013 = vmatmul.mubr.f32.gmra.mxu0 %v648
        %v1014 = vpop.f32.mrf.mxu0
        %v1015 = vadd.f32 0.0, %v1014
        %v1016 = vpop.f32.mrf.mxu0
        %v1017 = vadd.f32 0.0, %v1016
        %1018 = vmatprep.mubr.f32.mxu0 %v651
        %1019 = vmatmul.mubr.f32.gmra.mxu0 %v650
        %v1020 = vpop.f32.mrf.mxu0
        %v1021 = vadd.f32 0.0, %v1020
        %v1022 = vpop.f32.mrf.mxu0
        %v1023 = vadd.f32 0.0, %v1022
        %1024 = vmatprep.mubr.f32.mxu0 %v653
        %1025 = vmatmul.mubr.f32.gmra.mxu0 %v652
        %v1026 = vpop.f32.mrf.mxu0
        %v1027 = vadd.f32 0.0, %v1026
        %v1028 = vpop.f32.mrf.mxu0
        %v1029 = vadd.f32 0.0, %v1028
        %1030 = vmatprep.mubr.f32.mxu0 %v655
        %1031 = vmatmul.mubr.f32.gmra.mxu0 %v654
        %v1032 = vpop.f32.mrf.mxu0
        %v1033 = vadd.f32 0.0, %v1032
        %v1034 = vpop.f32.mrf.mxu0
        %v1035 = vadd.f32 0.0, %v1034
        %1036 = vmatprep.mubr.f32.mxu0 %v657
        %1037 = vmatmul.mubr.f32.gmra.mxu0 %v656
        %v1038 = vpop.f32.mrf.mxu0
        %v1039 = vadd.f32 0.0, %v1038
        %v1040 = vpop.f32.mrf.mxu0
        %v1041 = vadd.f32 0.0, %v1040
        %1042 = vmatprep.mubr.f32.mxu0 %v659
        %1043 = vmatmul.mubr.f32.gmra.mxu0 %v658
        %v1044 = vpop.f32.mrf.mxu0
        %v1045 = vadd.f32 0.0, %v1044
        %v1046 = vpop.f32.mrf.mxu0
        %v1047 = vadd.f32 0.0, %v1046
        %1048 = vmatprep.mubr.f32.mxu0 %v661
        %1049 = vmatmul.mubr.f32.gmra.mxu0 %v660
        %v1050 = vpop.f32.mrf.mxu0
        %v1051 = vadd.f32 0.0, %v1050
        %v1052 = vpop.f32.mrf.mxu0
        %v1053 = vadd.f32 0.0, %v1052
        %1054 = vmatprep.mubr.f32.mxu0 %v663
        %1055 = vmatmul.mubr.f32.gmra.mxu0 %v662
        %v1056 = vpop.f32.mrf.mxu0
        %v1057 = vadd.f32 0.0, %v1056
        %v1058 = vpop.f32.mrf.mxu0
        %v1059 = vadd.f32 0.0, %v1058
        %1060 = vmatprep.mubr.f32.mxu0 %v665
        %1061 = vmatmul.mubr.f32.gmra.mxu0 %v664
        %v1062 = vpop.f32.mrf.mxu0
        %v1063 = vadd.f32 0.0, %v1062
        %v1064 = vpop.f32.mrf.mxu0
        %v1065 = vadd.f32 0.0, %v1064
        %1066 = vmatprep.mubr.f32.mxu0 %v667
        %1067 = vmatmul.mubr.f32.gmra.mxu0 %v666
        %v1068 = vpop.f32.mrf.mxu0
        %v1069 = vadd.f32 0.0, %v1068
        %v1070 = vpop.f32.mrf.mxu0
        %v1071 = vadd.f32 0.0, %v1070
        %1072 = vmatprep.mubr.f32.mxu0 %v669
        %1073 = vmatmul.mubr.f32.gmra.mxu0 %v668
        %v1074 = vpop.f32.mrf.mxu0
        %v1075 = vadd.f32 0.0, %v1074
        %v1076 = vpop.f32.mrf.mxu0
        %v1077 = vadd.f32 0.0, %v1076
        %1078 = vmatprep.mubr.f32.mxu0 %v671
        %1079 = vmatmul.mubr.f32.gmra.mxu0 %v670
        %v1080 = vpop.f32.mrf.mxu0
        %v1081 = vadd.f32 0.0, %v1080
        %v1082 = vpop.f32.mrf.mxu0
        %v1083 = vadd.f32 0.0, %v1082
        %1084 = vmatprep.mubr.f32.mxu0 %v673
        %1085 = vmatmul.mubr.f32.gmra.mxu0 %v672
        %v1086 = vpop.f32.mrf.mxu0
        %v1087 = vadd.f32 0.0, %v1086
        %v1088 = vpop.f32.mrf.mxu0
        %v1089 = vadd.f32 0.0, %v1088
        %1090 = vmatprep.mubr.f32.mxu0 %v675
        %1091 = vmatmul.mubr.f32.gmra.mxu0 %v674
        %v1092 = vpop.f32.mrf.mxu0
        %v1093 = vadd.f32 0.0, %v1092
        %v1094 = vpop.f32.mrf.mxu0
        %v1095 = vadd.f32 0.0, %v1094
        %1096 = vmatprep.mubr.f32.mxu0 %v677
        %1097 = vmatmul.mubr.f32.gmra.mxu0 %v676
        %v1098 = vpop.f32.mrf.mxu0
        %v1099 = vadd.f32 0.0, %v1098
        %v1100 = vpop.f32.mrf.mxu0
        %v1101 = vadd.f32 0.0, %v1100
        %1102 = vmatprep.mubr.f32.mxu0 %v679
        %1103 = vmatmul.mubr.f32.gmra.mxu0 %v678
        %v1104 = vpop.f32.mrf.mxu0
        %v1105 = vadd.f32 0.0, %v1104
        %v1106 = vpop.f32.mrf.mxu0
        %v1107 = vadd.f32 0.0, %v1106
        %1108 = vmatprep.mubr.f32.mxu0 %v681
        %1109 = vmatmul.mubr.f32.gmra.mxu0 %v680
        %v1110 = vpop.f32.mrf.mxu0
        %v1111 = vadd.f32 0.0, %v1110
        %v1112 = vpop.f32.mrf.mxu0
        %v1113 = vadd.f32 0.0, %v1112
        %1114 = vmatprep.mubr.f32.mxu0 %v683
        %1115 = vmatmul.mubr.f32.gmra.mxu0 %v682
        %v1116 = vpop.f32.mrf.mxu0
        %v1117 = vadd.f32 0.0, %v1116
        %v1118 = vpop.f32.mrf.mxu0
        %v1119 = vadd.f32 0.0, %v1118
        %1120 = vmatprep.mubr.f32.mxu0 %v685
        %1121 = vmatmul.mubr.f32.gmra.mxu0 %v684
        %v1122 = vpop.f32.mrf.mxu0
        %v1123 = vadd.f32 0.0, %v1122
        %v1124 = vpop.f32.mrf.mxu0
        %v1125 = vadd.f32 0.0, %v1124
        %1126 = vmatprep.mubr.f32.mxu0 %v687
        %1127 = vmatmul.mubr.f32.gmra.mxu0 %v686
        %v1128 = vpop.f32.mrf.mxu0
        %v1129 = vadd.f32 0.0, %v1128
        %v1130 = vpop.f32.mrf.mxu0
        %v1131 = vadd.f32 0.0, %v1130
        %1132 = vmatprep.mubr.f32.mxu0 %v689
        %1133 = vmatmul.mubr.f32.gmra.mxu0 %v688
        %v1134 = vpop.f32.mrf.mxu0
        %v1135 = vadd.f32 0.0, %v1134
        %v1136 = vpop.f32.mrf.mxu0
        %v1137 = vadd.f32 0.0, %v1136
        %1138 = vmatprep.mubr.f32.mxu0 %v691
        %1139 = vmatmul.mubr.f32.gmra.mxu0 %v690
        %v1140 = vpop.f32.mrf.mxu0
        %v1141 = vadd.f32 0.0, %v1140
        %v1142 = vpop.f32.mrf.mxu0
        %v1143 = vadd.f32 0.0, %v1142
        %1144 = vmatprep.mubr.f32.mxu0 %v693
        %1145 = vmatmul.mubr.f32.gmra.mxu0 %v692
        %v1146 = vpop.f32.mrf.mxu0
        %v1147 = vadd.f32 0.0, %v1146
        %v1148 = vpop.f32.mrf.mxu0
        %v1149 = vadd.f32 0.0, %v1148
        %1150 = vmatprep.mubr.f32.mxu0 %v695
        %1151 = vmatmul.mubr.f32.gmra.mxu0 %v694
        %v1152 = vpop.f32.mrf.mxu0
        %v1153 = vadd.f32 0.0, %v1152
        %v1154 = vpop.f32.mrf.mxu0
        %v1155 = vadd.f32 0.0, %v1154
        %1156 = vmatprep.mubr.f32.mxu0 %v697
        %1157 = vmatmul.mubr.f32.gmra.mxu0 %v696
        %v1158 = vpop.f32.mrf.mxu0
        %v1159 = vadd.f32 0.0, %v1158
        %v1160 = vpop.f32.mrf.mxu0
        %v1161 = vadd.f32 0.0, %v1160
        %1162 = vmatprep.mubr.f32.mxu0 %v699
        %1163 = vmatmul.mubr.f32.gmra.mxu0 %v698
        %v1164 = vpop.f32.mrf.mxu0
        %v1165 = vadd.f32 0.0, %v1164
        %v1166 = vpop.f32.mrf.mxu0
        %v1167 = vadd.f32 0.0, %v1166
        %1168 = vmatprep.mubr.f32.mxu0 %v701
        %1169 = vmatmul.mubr.f32.gmra.mxu0 %v700
        %v1170 = vpop.f32.mrf.mxu0
        %v1171 = vadd.f32 0.0, %v1170
        %v1172 = vpop.f32.mrf.mxu0
        %v1173 = vadd.f32 0.0, %v1172
        %1174 = vmatprep.mubr.f32.mxu0 %v703
        %1175 = vmatmul.mubr.f32.gmra.mxu0 %v702
        %v1176 = vpop.f32.mrf.mxu0
        %v1177 = vadd.f32 0.0, %v1176
        %v1178 = vpop.f32.mrf.mxu0
        %v1179 = vadd.f32 0.0, %v1178
        %1180 = vmatprep.mubr.f32.mxu0 %v705
        %1181 = vmatmul.mubr.f32.gmra.mxu0 %v704
        %v1182 = vpop.f32.mrf.mxu0
        %v1183 = vadd.f32 0.0, %v1182
        %v1184 = vpop.f32.mrf.mxu0
        %v1185 = vadd.f32 0.0, %v1184
        %1186 = vmatprep.mubr.f32.mxu0 %v707
        %1187 = vmatmul.mubr.f32.gmra.mxu0 %v706
        %v1188 = vpop.f32.mrf.mxu0
        %v1189 = vadd.f32 0.0, %v1188
        %v1190 = vpop.f32.mrf.mxu0
        %v1191 = vadd.f32 0.0, %v1190
        %1192 = vmatprep.mubr.f32.mxu0 %v709
        %1193 = vmatmul.mubr.f32.gmra.mxu0 %v708
        %v1194 = vpop.f32.mrf.mxu0
        %v1195 = vadd.f32 0.0, %v1194
        %v1196 = vpop.f32.mrf.mxu0
        %v1197 = vadd.f32 0.0, %v1196
        %1198 = vmatprep.mubr.f32.mxu0 %v711
        %1199 = vmatmul.mubr.f32.gmra.mxu0 %v710
        %v1200 = vpop.f32.mrf.mxu0
        %v1201 = vadd.f32 0.0, %v1200
        %v1202 = vpop.f32.mrf.mxu0
        %v1203 = vadd.f32 0.0, %v1202
        %1204 = vmatprep.mubr.f32.mxu0 %v713
        %1205 = vmatmul.mubr.f32.gmra.mxu0 %v712
        %v1206 = vpop.f32.mrf.mxu0
        %v1207 = vadd.f32 0.0, %v1206
        %v1208 = vpop.f32.mrf.mxu0
        %v1209 = vadd.f32 0.0, %v1208
        %1210 = vmatprep.mubr.f32.mxu0 %v715
        %1211 = vmatmul.mubr.f32.gmra.mxu0 %v714
        %v1212 = vpop.f32.mrf.mxu0
        %v1213 = vadd.f32 0.0, %v1212
        %v1214 = vpop.f32.mrf.mxu0
        %v1215 = vadd.f32 0.0, %v1214
        %1216 = vmatprep.mubr.f32.mxu0 %v717
        %1217 = vmatmul.mubr.f32.gmra.mxu0 %v716
        %v1218 = vpop.f32.mrf.mxu0
        %v1219 = vadd.f32 0.0, %v1218
        %v1220 = vpop.f32.mrf.mxu0
        %v1221 = vadd.f32 0.0, %v1220
        %1222 = vmatprep.mubr.f32.mxu0 %v719
        %1223 = vmatmul.mubr.f32.gmra.mxu0 %v718
        %v1224 = vpop.f32.mrf.mxu0
        %v1225 = vadd.f32 0.0, %v1224
        %v1226 = vpop.f32.mrf.mxu0
        %v1227 = vadd.f32 0.0, %v1226
        %1228 = vmatprep.mubr.f32.mxu0 %v721
        %1229 = vmatmul.mubr.f32.gmra.mxu0 %v720
        %v1230 = vpop.f32.mrf.mxu0
        %v1231 = vadd.f32 0.0, %v1230
        %v1232 = vpop.f32.mrf.mxu0
        %v1233 = vadd.f32 0.0, %v1232
        %1234 = vmatprep.mubr.f32.mxu0 %v723
        %1235 = vmatmul.mubr.f32.gmra.mxu0 %v722
        %v1236 = vpop.f32.mrf.mxu0
        %v1237 = vadd.f32 0.0, %v1236
        %v1238 = vpop.f32.mrf.mxu0
        %v1239 = vadd.f32 0.0, %v1238
        %1240 = vmatprep.mubr.f32.mxu0 %v725
        %1241 = vmatmul.mubr.f32.gmra.mxu0 %v724
        %v1242 = vpop.f32.mrf.mxu0
        %v1243 = vadd.f32 0.0, %v1242
        %v1244 = vpop.f32.mrf.mxu0
        %v1245 = vadd.f32 0.0, %v1244
        %1246 = vmatprep.mubr.f32.mxu0 %v727
        %1247 = vmatmul.mubr.f32.gmra.mxu0 %v726
        %v1248 = vpop.f32.mrf.mxu0
        %v1249 = vadd.f32 0.0, %v1248
        %v1250 = vpop.f32.mrf.mxu0
        %v1251 = vadd.f32 0.0, %v1250
        %1252 = vmatprep.mubr.f32.mxu0 %v729
        %1253 = vmatmul.mubr.f32.gmra.mxu0 %v728
        %v1254 = vpop.f32.mrf.mxu0
        %v1255 = vadd.f32 0.0, %v1254
        %v1256 = vpop.f32.mrf.mxu0
        %v1257 = vadd.f32 0.0, %v1256
        %1258 = vmatprep.mubr.f32.mxu0 %v731
        %1259 = vmatmul.mubr.f32.gmra.mxu0 %v730
        %v1260 = vpop.f32.mrf.mxu0
        %v1261 = vadd.f32 0.0, %v1260
        %v1262 = vpop.f32.mrf.mxu0
        %v1263 = vadd.f32 0.0, %v1262
        %1264 = vmatprep.mubr.f32.mxu0 %v733
        %1265 = vmatmul.mubr.f32.gmra.mxu0 %v732
        %v1266 = vpop.f32.mrf.mxu0
        %v1267 = vadd.f32 0.0, %v1266
        %v1268 = vpop.f32.mrf.mxu0
        %v1269 = vadd.f32 0.0, %v1268
        %1270 = vmatprep.mubr.f32.mxu0 %v735
        %1271 = vmatmul.mubr.f32.gmra.mxu0 %v734
        %v1272 = vpop.f32.mrf.mxu0
        %v1273 = vadd.f32 0.0, %v1272
        %v1274 = vpop.f32.mrf.mxu0
        %v1275 = vadd.f32 0.0, %v1274
        %1276 = vmatprep.mubr.f32.mxu0 %v737
        %1277 = vmatmul.mubr.f32.gmra.mxu0 %v736
        %v1278 = vpop.f32.mrf.mxu0
        %v1279 = vadd.f32 0.0, %v1278
        %v1280 = vpop.f32.mrf.mxu0
        %v1281 = vadd.f32 0.0, %v1280
        %1282 = vdwg.mxu0
        %1283 = vmatprep.subr.mxu0 0.0
        %1284 = vmatpush1.msra.mxu0 %v785
        %1285 = vmatprep.subr.mxu0 0.0
        %1286 = vmatpush1.msra.mxu0 %v782
        %1287 = vmatprep.subr.mxu0 0.0
        %1288 = vmatpush1.msra.mxu0 %v779
        %1289 = vmatprep.subr.mxu0 0.0
        %1290 = vmatpush1.msra.mxu0 %v776
        %1291 = vmatprep.subr.mxu0 0.0
        %1292 = vmatpush1.msra.mxu0 %v773
        %1293 = vmatprep.subr.mxu0 0.0
        %1294 = vmatpush1.msra.mxu0 %v770
        %1295 = vmatprep.subr.mxu0 0.0
        %1296 = vmatpush1.msra.mxu0 %v767
        %1297 = vmatprep.subr.mxu0 0.0
        %1298 = vmatpush1.msra.mxu0 %v764
        %1299 = vmatprep.subr.mxu0 0.0
        %1300 = vmatpush1.msra.mxu0 %v761
        %1301 = vmatprep.subr.mxu0 0.0
        %1302 = vmatpush1.msra.mxu0 %v758
        %1303 = vmatprep.subr.mxu0 0.0
        %1304 = vmatpush1.msra.mxu0 %v755
        %1305 = vmatprep.subr.mxu0 0.0
        %1306 = vmatpush1.msra.mxu0 %v752
        %1307 = vmatprep.subr.mxu0 0.0
        %1308 = vmatpush1.msra.mxu0 %v749
        %1309 = vmatprep.subr.mxu0 0.0
        %1310 = vmatpush1.msra.mxu0 %v746
        %1311 = vmatprep.subr.mxu0 0.0
        %1312 = vmatpush1.msra.mxu0 %v743
        %1313 = vmatprep.subr.mxu0 0.0
        %1314 = vmatpush1.msra.mxu0 %v740
        %1315 = vmatprep.subr.mxu0 0.0
        %1316 = vmatpush2.msra.mxu0 %v833
        %1317 = vmatprep.subr.mxu0 0.0
        %1318 = vmatpush2.msra.mxu0 %v830
        %1319 = vmatprep.subr.mxu0 0.0
        %1320 = vmatpush2.msra.mxu0 %v827
        %1321 = vmatprep.subr.mxu0 0.0
        %1322 = vmatpush2.msra.mxu0 %v824
        %1323 = vmatprep.subr.mxu0 0.0
        %1324 = vmatpush2.msra.mxu0 %v821
        %1325 = vmatprep.subr.mxu0 0.0
        %1326 = vmatpush2.msra.mxu0 %v818
        %1327 = vmatprep.subr.mxu0 0.0
        %1328 = vmatpush2.msra.mxu0 %v815
        %1329 = vmatprep.subr.mxu0 0.0
        %1330 = vmatpush2.msra.mxu0 %v812
        %1331 = vmatprep.subr.mxu0 0.0
        %1332 = vmatpush2.msra.mxu0 %v809
        %1333 = vmatprep.subr.mxu0 0.0
        %1334 = vmatpush2.msra.mxu0 %v806
        %1335 = vmatprep.subr.mxu0 0.0
        %1336 = vmatpush2.msra.mxu0 %v803
        %1337 = vmatprep.subr.mxu0 0.0
        %1338 = vmatpush2.msra.mxu0 %v800
        %1339 = vmatprep.subr.mxu0 0.0
        %1340 = vmatpush2.msra.mxu0 %v797
        %1341 = vmatprep.subr.mxu0 0.0
        %1342 = vmatpush2.msra.mxu0 %v794
        %1343 = vmatprep.subr.mxu0 0.0
        %1344 = vmatpush2.msra.mxu0 %v791
        %1345 = vmatprep.subr.mxu0 0.0
        %1346 = vmatpush2.msra.mxu0 %v788
        %1347 = vmatprep.mubr.f32.mxu0 %v611
        %1348 = vmatmul.mubr.f32.gmra.mxu0 %v610
        %v1349 = vpop.f32.mrf.mxu0
        %v1350 = vadd.f32 0.0, %v1349
        %v1351 = vpop.f32.mrf.mxu0
        %1352 = vmatprep.mubr.f32.mxu0 %v613
        %1353 = vmatmul.mubr.f32.gmra.mxu0 %v612
        %v1354 = vpop.f32.mrf.mxu0
        %v1355 = vadd.f32 0.0, %v1354
        %v1356 = vpop.f32.mrf.mxu0
        %1357 = vmatprep.mubr.f32.mxu0 %v615
        %1358 = vmatmul.mubr.f32.gmra.mxu0 %v614
        %v1359 = vpop.f32.mrf.mxu0
        %v1360 = vadd.f32 0.0, %v1359
        %v1361 = vpop.f32.mrf.mxu0
        %1362 = vmatprep.mubr.f32.mxu0 %v617
        %1363 = vmatmul.mubr.f32.gmra.mxu0 %v616
        %v1364 = vpop.f32.mrf.mxu0
        %v1365 = vadd.f32 0.0, %v1364
        %v1366 = vpop.f32.mrf.mxu0
        %1367 = vmatprep.mubr.f32.mxu0 %v619
        %1368 = vmatmul.mubr.f32.gmra.mxu0 %v618
        %v1369 = vpop.f32.mrf.mxu0
        %v1370 = vadd.f32 0.0, %v1369
        %v1371 = vpop.f32.mrf.mxu0
        %1372 = vmatprep.mubr.f32.mxu0 %v621
        %1373 = vmatmul.mubr.f32.gmra.mxu0 %v620
        %v1374 = vpop.f32.mrf.mxu0
        %v1375 = vadd.f32 0.0, %v1374
        %v1376 = vpop.f32.mrf.mxu0
        %1377 = vmatprep.mubr.f32.mxu0 %v623
        %1378 = vmatmul.mubr.f32.gmra.mxu0 %v622
        %v1379 = vpop.f32.mrf.mxu0
        %v1380 = vadd.f32 0.0, %v1379
        %v1381 = vpop.f32.mrf.mxu0
        %1382 = vmatprep.mubr.f32.mxu0 %v625
        %1383 = vmatmul.mubr.f32.gmra.mxu0 %v624
        %v1384 = vpop.f32.mrf.mxu0
        %v1385 = vadd.f32 0.0, %v1384
        %v1386 = vpop.f32.mrf.mxu0
        %1387 = vmatprep.mubr.f32.mxu0 %v627
        %1388 = vmatmul.mubr.f32.gmra.mxu0 %v626
        %v1389 = vpop.f32.mrf.mxu0
        %v1390 = vadd.f32 0.0, %v1389
        %v1391 = vpop.f32.mrf.mxu0
        %1392 = vmatprep.mubr.f32.mxu0 %v629
        %1393 = vmatmul.mubr.f32.gmra.mxu0 %v628
        %v1394 = vpop.f32.mrf.mxu0
        %v1395 = vadd.f32 0.0, %v1394
        %v1396 = vpop.f32.mrf.mxu0
        %1397 = vmatprep.mubr.f32.mxu0 %v631
        %1398 = vmatmul.mubr.f32.gmra.mxu0 %v630
        %v1399 = vpop.f32.mrf.mxu0
        %v1400 = vadd.f32 0.0, %v1399
        %v1401 = vpop.f32.mrf.mxu0
        %1402 = vmatprep.mubr.f32.mxu0 %v633
        %1403 = vmatmul.mubr.f32.gmra.mxu0 %v632
        %v1404 = vpop.f32.mrf.mxu0
        %v1405 = vadd.f32 0.0, %v1404
        %v1406 = vpop.f32.mrf.mxu0
        %1407 = vmatprep.mubr.f32.mxu0 %v635
        %1408 = vmatmul.mubr.f32.gmra.mxu0 %v634
        %v1409 = vpop.f32.mrf.mxu0
        %v1410 = vadd.f32 0.0, %v1409
        %v1411 = vpop.f32.mrf.mxu0
        %1412 = vmatprep.mubr.f32.mxu0 %v637
        %1413 = vmatmul.mubr.f32.gmra.mxu0 %v636
        %v1414 = vpop.f32.mrf.mxu0
        %v1415 = vadd.f32 0.0, %v1414
        %v1416 = vpop.f32.mrf.mxu0
        %1417 = vmatprep.mubr.f32.mxu0 %v639
        %1418 = vmatmul.mubr.f32.gmra.mxu0 %v638
        %v1419 = vpop.f32.mrf.mxu0
        %v1420 = vadd.f32 0.0, %v1419
        %v1421 = vpop.f32.mrf.mxu0
        %1422 = vmatprep.mubr.f32.mxu0 %v641
        %1423 = vmatmul.mubr.f32.gmra.mxu0 %v640
        %v1424 = vpop.f32.mrf.mxu0
        %v1425 = vadd.f32 0.0, %v1424
        %v1426 = vpop.f32.mrf.mxu0
        %1427 = vmatprep.mubr.f32.mxu0 %v643
        %1428 = vmatmul.mubr.f32.gmra.mxu0 %v642
        %v1429 = vpop.f32.mrf.mxu0
        %v1430 = vadd.f32 0.0, %v1429
        %v1431 = vpop.f32.mrf.mxu0
        %1432 = vmatprep.mubr.f32.mxu0 %v645
        %1433 = vmatmul.mubr.f32.gmra.mxu0 %v644
        %v1434 = vpop.f32.mrf.mxu0
        %v1435 = vadd.f32 0.0, %v1434
        %v1436 = vpop.f32.mrf.mxu0
        %1437 = vmatprep.mubr.f32.mxu0 %v647
        %1438 = vmatmul.mubr.f32.gmra.mxu0 %v646
        %v1439 = vpop.f32.mrf.mxu0
        %v1440 = vadd.f32 0.0, %v1439
        %v1441 = vpop.f32.mrf.mxu0
        %1442 = vmatprep.mubr.f32.mxu0 %v649
        %1443 = vmatmul.mubr.f32.gmra.mxu0 %v648
        %v1444 = vpop.f32.mrf.mxu0
        %v1445 = vadd.f32 0.0, %v1444
        %v1446 = vpop.f32.mrf.mxu0
        %1447 = vmatprep.mubr.f32.mxu0 %v651
        %1448 = vmatmul.mubr.f32.gmra.mxu0 %v650
        %v1449 = vpop.f32.mrf.mxu0
        %v1450 = vadd.f32 0.0, %v1449
        %v1451 = vpop.f32.mrf.mxu0
        %1452 = vmatprep.mubr.f32.mxu0 %v653
        %1453 = vmatmul.mubr.f32.gmra.mxu0 %v652
        %v1454 = vpop.f32.mrf.mxu0
        %v1455 = vadd.f32 0.0, %v1454
        %v1456 = vpop.f32.mrf.mxu0
        %1457 = vmatprep.mubr.f32.mxu0 %v655
        %1458 = vmatmul.mubr.f32.gmra.mxu0 %v654
        %v1459 = vpop.f32.mrf.mxu0
        %v1460 = vadd.f32 0.0, %v1459
        %v1461 = vpop.f32.mrf.mxu0
        %1462 = vmatprep.mubr.f32.mxu0 %v657
        %1463 = vmatmul.mubr.f32.gmra.mxu0 %v656
        %v1464 = vpop.f32.mrf.mxu0
        %v1465 = vadd.f32 0.0, %v1464
        %v1466 = vpop.f32.mrf.mxu0
        %1467 = vmatprep.mubr.f32.mxu0 %v659
        %1468 = vmatmul.mubr.f32.gmra.mxu0 %v658
        %v1469 = vpop.f32.mrf.mxu0
        %v1470 = vadd.f32 0.0, %v1469
        %v1471 = vpop.f32.mrf.mxu0
        %1472 = vmatprep.mubr.f32.mxu0 %v661
        %1473 = vmatmul.mubr.f32.gmra.mxu0 %v660
        %v1474 = vpop.f32.mrf.mxu0
        %v1475 = vadd.f32 0.0, %v1474
        %v1476 = vpop.f32.mrf.mxu0
        %1477 = vmatprep.mubr.f32.mxu0 %v663
        %1478 = vmatmul.mubr.f32.gmra.mxu0 %v662
        %v1479 = vpop.f32.mrf.mxu0
        %v1480 = vadd.f32 0.0, %v1479
        %v1481 = vpop.f32.mrf.mxu0
        %1482 = vmatprep.mubr.f32.mxu0 %v665
        %1483 = vmatmul.mubr.f32.gmra.mxu0 %v664
        %v1484 = vpop.f32.mrf.mxu0
        %v1485 = vadd.f32 0.0, %v1484
        %v1486 = vpop.f32.mrf.mxu0
        %1487 = vmatprep.mubr.f32.mxu0 %v667
        %1488 = vmatmul.mubr.f32.gmra.mxu0 %v666
        %v1489 = vpop.f32.mrf.mxu0
        %v1490 = vadd.f32 0.0, %v1489
        %v1491 = vpop.f32.mrf.mxu0
        %1492 = vmatprep.mubr.f32.mxu0 %v669
        %1493 = vmatmul.mubr.f32.gmra.mxu0 %v668
        %v1494 = vpop.f32.mrf.mxu0
        %v1495 = vadd.f32 0.0, %v1494
        %v1496 = vpop.f32.mrf.mxu0
        %1497 = vmatprep.mubr.f32.mxu0 %v671
        %1498 = vmatmul.mubr.f32.gmra.mxu0 %v670
        %v1499 = vpop.f32.mrf.mxu0
        %v1500 = vadd.f32 0.0, %v1499
        %v1501 = vpop.f32.mrf.mxu0
        %1502 = vmatprep.mubr.f32.mxu0 %v673
        %1503 = vmatmul.mubr.f32.gmra.mxu0 %v672
        %v1504 = vpop.f32.mrf.mxu0
        %v1505 = vadd.f32 0.0, %v1504
        %v1506 = vpop.f32.mrf.mxu0
        %1507 = vmatprep.mubr.f32.mxu0 %v675
        %1508 = vmatmul.mubr.f32.gmra.mxu0 %v674
        %v1509 = vpop.f32.mrf.mxu0
        %v1510 = vadd.f32 0.0, %v1509
        %v1511 = vpop.f32.mrf.mxu0
        %1512 = vmatprep.mubr.f32.mxu0 %v677
        %1513 = vmatmul.mubr.f32.gmra.mxu0 %v676
        %v1514 = vpop.f32.mrf.mxu0
        %v1515 = vadd.f32 0.0, %v1514
        %v1516 = vpop.f32.mrf.mxu0
        %1517 = vmatprep.mubr.f32.mxu0 %v679
        %1518 = vmatmul.mubr.f32.gmra.mxu0 %v678
        %v1519 = vpop.f32.mrf.mxu0
        %v1520 = vadd.f32 0.0, %v1519
        %v1521 = vpop.f32.mrf.mxu0
        %1522 = vmatprep.mubr.f32.mxu0 %v681
        %1523 = vmatmul.mubr.f32.gmra.mxu0 %v680
        %v1524 = vpop.f32.mrf.mxu0
        %v1525 = vadd.f32 0.0, %v1524
        %v1526 = vpop.f32.mrf.mxu0
        %1527 = vmatprep.mubr.f32.mxu0 %v683
        %1528 = vmatmul.mubr.f32.gmra.mxu0 %v682
        %v1529 = vpop.f32.mrf.mxu0
        %v1530 = vadd.f32 0.0, %v1529
        %v1531 = vpop.f32.mrf.mxu0
        %1532 = vmatprep.mubr.f32.mxu0 %v685
        %1533 = vmatmul.mubr.f32.gmra.mxu0 %v684
        %v1534 = vpop.f32.mrf.mxu0
        %v1535 = vadd.f32 0.0, %v1534
        %v1536 = vpop.f32.mrf.mxu0
        %1537 = vmatprep.mubr.f32.mxu0 %v687
        %1538 = vmatmul.mubr.f32.gmra.mxu0 %v686
        %v1539 = vpop.f32.mrf.mxu0
        %v1540 = vadd.f32 0.0, %v1539
        %v1541 = vpop.f32.mrf.mxu0
        %1542 = vmatprep.mubr.f32.mxu0 %v689
        %1543 = vmatmul.mubr.f32.gmra.mxu0 %v688
        %v1544 = vpop.f32.mrf.mxu0
        %v1545 = vadd.f32 0.0, %v1544
        %v1546 = vpop.f32.mrf.mxu0
        %1547 = vmatprep.mubr.f32.mxu0 %v691
        %1548 = vmatmul.mubr.f32.gmra.mxu0 %v690
        %v1549 = vpop.f32.mrf.mxu0
        %v1550 = vadd.f32 0.0, %v1549
        %v1551 = vpop.f32.mrf.mxu0
        %1552 = vmatprep.mubr.f32.mxu0 %v693
        %1553 = vmatmul.mubr.f32.gmra.mxu0 %v692
        %v1554 = vpop.f32.mrf.mxu0
        %v1555 = vadd.f32 0.0, %v1554
        %v1556 = vpop.f32.mrf.mxu0
        %1557 = vmatprep.mubr.f32.mxu0 %v695
        %1558 = vmatmul.mubr.f32.gmra.mxu0 %v694
        %v1559 = vpop.f32.mrf.mxu0
        %v1560 = vadd.f32 0.0, %v1559
        %v1561 = vpop.f32.mrf.mxu0
        %1562 = vmatprep.mubr.f32.mxu0 %v697
        %1563 = vmatmul.mubr.f32.gmra.mxu0 %v696
        %v1564 = vpop.f32.mrf.mxu0
        %v1565 = vadd.f32 0.0, %v1564
        %v1566 = vpop.f32.mrf.mxu0
        %1567 = vmatprep.mubr.f32.mxu0 %v699
        %1568 = vmatmul.mubr.f32.gmra.mxu0 %v698
        %v1569 = vpop.f32.mrf.mxu0
        %v1570 = vadd.f32 0.0, %v1569
        %v1571 = vpop.f32.mrf.mxu0
        %1572 = vmatprep.mubr.f32.mxu0 %v701
        %1573 = vmatmul.mubr.f32.gmra.mxu0 %v700
        %v1574 = vpop.f32.mrf.mxu0
        %v1575 = vadd.f32 0.0, %v1574
        %v1576 = vpop.f32.mrf.mxu0
        %1577 = vmatprep.mubr.f32.mxu0 %v703
        %1578 = vmatmul.mubr.f32.gmra.mxu0 %v702
        %v1579 = vpop.f32.mrf.mxu0
        %v1580 = vadd.f32 0.0, %v1579
        %v1581 = vpop.f32.mrf.mxu0
        %1582 = vmatprep.mubr.f32.mxu0 %v705
        %1583 = vmatmul.mubr.f32.gmra.mxu0 %v704
        %v1584 = vpop.f32.mrf.mxu0
        %v1585 = vadd.f32 0.0, %v1584
        %v1586 = vpop.f32.mrf.mxu0
        %1587 = vmatprep.mubr.f32.mxu0 %v707
        %1588 = vmatmul.mubr.f32.gmra.mxu0 %v706
        %v1589 = vpop.f32.mrf.mxu0
        %v1590 = vadd.f32 0.0, %v1589
        %v1591 = vpop.f32.mrf.mxu0
        %1592 = vmatprep.mubr.f32.mxu0 %v709
        %1593 = vmatmul.mubr.f32.gmra.mxu0 %v708
        %v1594 = vpop.f32.mrf.mxu0
        %v1595 = vadd.f32 0.0, %v1594
        %v1596 = vpop.f32.mrf.mxu0
        %1597 = vmatprep.mubr.f32.mxu0 %v711
        %1598 = vmatmul.mubr.f32.gmra.mxu0 %v710
        %v1599 = vpop.f32.mrf.mxu0
        %v1600 = vadd.f32 0.0, %v1599
        %v1601 = vpop.f32.mrf.mxu0
        %1602 = vmatprep.mubr.f32.mxu0 %v713
        %1603 = vmatmul.mubr.f32.gmra.mxu0 %v712
        %v1604 = vpop.f32.mrf.mxu0
        %v1605 = vadd.f32 0.0, %v1604
        %v1606 = vpop.f32.mrf.mxu0
        %1607 = vmatprep.mubr.f32.mxu0 %v715
        %1608 = vmatmul.mubr.f32.gmra.mxu0 %v714
        %v1609 = vpop.f32.mrf.mxu0
        %v1610 = vadd.f32 0.0, %v1609
        %v1611 = vpop.f32.mrf.mxu0
        %1612 = vmatprep.mubr.f32.mxu0 %v717
        %1613 = vmatmul.mubr.f32.gmra.mxu0 %v716
        %v1614 = vpop.f32.mrf.mxu0
        %v1615 = vadd.f32 0.0, %v1614
        %v1616 = vpop.f32.mrf.mxu0
        %1617 = vmatprep.mubr.f32.mxu0 %v719
        %1618 = vmatmul.mubr.f32.gmra.mxu0 %v718
        %v1619 = vpop.f32.mrf.mxu0
        %v1620 = vadd.f32 0.0, %v1619
        %v1621 = vpop.f32.mrf.mxu0
        %1622 = vmatprep.mubr.f32.mxu0 %v721
        %1623 = vmatmul.mubr.f32.gmra.mxu0 %v720
        %v1624 = vpop.f32.mrf.mxu0
        %v1625 = vadd.f32 0.0, %v1624
        %v1626 = vpop.f32.mrf.mxu0
        %1627 = vmatprep.mubr.f32.mxu0 %v723
        %1628 = vmatmul.mubr.f32.gmra.mxu0 %v722
        %v1629 = vpop.f32.mrf.mxu0
        %v1630 = vadd.f32 0.0, %v1629
        %v1631 = vpop.f32.mrf.mxu0
        %1632 = vmatprep.mubr.f32.mxu0 %v725
        %1633 = vmatmul.mubr.f32.gmra.mxu0 %v724
        %v1634 = vpop.f32.mrf.mxu0
        %v1635 = vadd.f32 0.0, %v1634
        %v1636 = vpop.f32.mrf.mxu0
        %1637 = vmatprep.mubr.f32.mxu0 %v727
        %1638 = vmatmul.mubr.f32.gmra.mxu0 %v726
        %v1639 = vpop.f32.mrf.mxu0
        %v1640 = vadd.f32 0.0, %v1639
        %v1641 = vpop.f32.mrf.mxu0
        %1642 = vmatprep.mubr.f32.mxu0 %v729
        %1643 = vmatmul.mubr.f32.gmra.mxu0 %v728
        %v1644 = vpop.f32.mrf.mxu0
        %v1645 = vadd.f32 0.0, %v1644
        %v1646 = vpop.f32.mrf.mxu0
        %1647 = vmatprep.mubr.f32.mxu0 %v731
        %1648 = vmatmul.mubr.f32.gmra.mxu0 %v730
        %v1649 = vpop.f32.mrf.mxu0
        %v1650 = vadd.f32 0.0, %v1649
        %v1651 = vpop.f32.mrf.mxu0
        %1652 = vmatprep.mubr.f32.mxu0 %v733
        %1653 = vmatmul.mubr.f32.gmra.mxu0 %v732
        %v1654 = vpop.f32.mrf.mxu0
        %v1655 = vadd.f32 0.0, %v1654
        %v1656 = vpop.f32.mrf.mxu0
        %1657 = vmatprep.mubr.f32.mxu0 %v735
        %1658 = vmatmul.mubr.f32.gmra.mxu0 %v734
        %v1659 = vpop.f32.mrf.mxu0
        %v1660 = vadd.f32 0.0, %v1659
        %v1661 = vpop.f32.mrf.mxu0
        %1662 = vmatprep.mubr.f32.mxu0 %v737
        %1663 = vmatmul.mubr.f32.gmra.mxu0 %v736
        %v1664 = vpop.f32.mrf.mxu0
        %v1665 = vadd.f32 0.0, %v1664
        %v1666 = vpop.f32.mrf.mxu0
        %1667 = vdwg.mxu0
        %v1668 = vadd.f32 %v418, %v901
        %v1669 = vadd.f32 %v419, %v903
        %v1670 = vadd.f32 %v420, %v1350
        %v1671 = vadd.f32 %v421, %v907
        %v1672 = vadd.f32 %v422, %v909
        %v1673 = vadd.f32 %v423, %v1355
        %v1674 = vadd.f32 %v424, %v913
        %v1675 = vadd.f32 %v425, %v915
        %v1676 = vadd.f32 %v426, %v1360
        %v1677 = vadd.f32 %v427, %v919
        %v1678 = vadd.f32 %v428, %v921
        %v1679 = vadd.f32 %v429, %v1365
        %v1680 = vadd.f32 %v430, %v925
        %v1681 = vadd.f32 %v431, %v927
        %v1682 = vadd.f32 %v432, %v1370
        %v1683 = vadd.f32 %v433, %v931
        %v1684 = vadd.f32 %v434, %v933
        %v1685 = vadd.f32 %v435, %v1375
        %v1686 = vadd.f32 %v436, %v937
        %v1687 = vadd.f32 %v437, %v939
        %v1688 = vadd.f32 %v438, %v1380
        %v1689 = vadd.f32 %v439, %v943
        %v1690 = vadd.f32 %v440, %v945
        %v1691 = vadd.f32 %v441, %v1385
        %v1692 = vadd.f32 %v442, %v949
        %v1693 = vadd.f32 %v443, %v951
        %v1694 = vadd.f32 %v444, %v1390
        %v1695 = vadd.f32 %v445, %v955
        %v1696 = vadd.f32 %v446, %v957
        %v1697 = vadd.f32 %v447, %v1395
        %v1698 = vadd.f32 %v448, %v961
        %v1699 = vadd.f32 %v449, %v963
        %v1700 = vadd.f32 %v450, %v1400
        %v1701 = vadd.f32 %v451, %v967
        %v1702 = vadd.f32 %v452, %v969
        %v1703 = vadd.f32 %v453, %v1405
        %v1704 = vadd.f32 %v454, %v973
        %v1705 = vadd.f32 %v455, %v975
        %v1706 = vadd.f32 %v456, %v1410
        %v1707 = vadd.f32 %v457, %v979
        %v1708 = vadd.f32 %v458, %v981
        %v1709 = vadd.f32 %v459, %v1415
        %v1710 = vadd.f32 %v460, %v985
        %v1711 = vadd.f32 %v461, %v987
        %v1712 = vadd.f32 %v462, %v1420
        %v1713 = vadd.f32 %v463, %v991
        %v1714 = vadd.f32 %v464, %v993
        %v1715 = vadd.f32 %v465, %v1425
        %v1716 = vadd.f32 %v466, %v997
        %v1717 = vadd.f32 %v467, %v999
        %v1718 = vadd.f32 %v468, %v1430
        %v1719 = vadd.f32 %v469, %v1003
        %v1720 = vadd.f32 %v470, %v1005
        %v1721 = vadd.f32 %v471, %v1435
        %v1722 = vadd.f32 %v472, %v1009
        %v1723 = vadd.f32 %v473, %v1011
        %v1724 = vadd.f32 %v474, %v1440
        %v1725 = vadd.f32 %v475, %v1015
        %v1726 = vadd.f32 %v476, %v1017
        %v1727 = vadd.f32 %v477, %v1445
        %v1728 = vadd.f32 %v478, %v1021
        %v1729 = vadd.f32 %v479, %v1023
        %v1730 = vadd.f32 %v480, %v1450
        %v1731 = vadd.f32 %v481, %v1027
        %v1732 = vadd.f32 %v482, %v1029
        %v1733 = vadd.f32 %v483, %v1455
        %v1734 = vadd.f32 %v484, %v1033
        %v1735 = vadd.f32 %v485, %v1035
        %v1736 = vadd.f32 %v486, %v1460
        %v1737 = vadd.f32 %v487, %v1039
        %v1738 = vadd.f32 %v488, %v1041
        %v1739 = vadd.f32 %v489, %v1465
        %v1740 = vadd.f32 %v490, %v1045
        %v1741 = vadd.f32 %v491, %v1047
        %v1742 = vadd.f32 %v492, %v1470
        %v1743 = vadd.f32 %v493, %v1051
        %v1744 = vadd.f32 %v494, %v1053
        %v1745 = vadd.f32 %v495, %v1475
        %v1746 = vadd.f32 %v496, %v1057
        %v1747 = vadd.f32 %v497, %v1059
        %v1748 = vadd.f32 %v498, %v1480
        %v1749 = vadd.f32 %v499, %v1063
        %v1750 = vadd.f32 %v500, %v1065
        %v1751 = vadd.f32 %v501, %v1485
        %v1752 = vadd.f32 %v502, %v1069
        %v1753 = vadd.f32 %v503, %v1071
        %v1754 = vadd.f32 %v504, %v1490
        %v1755 = vadd.f32 %v505, %v1075
        %v1756 = vadd.f32 %v506, %v1077
        %v1757 = vadd.f32 %v507, %v1495
        %v1758 = vadd.f32 %v508, %v1081
        %v1759 = vadd.f32 %v509, %v1083
        %v1760 = vadd.f32 %v510, %v1500
        %v1761 = vadd.f32 %v511, %v1087
        %v1762 = vadd.f32 %v512, %v1089
        %v1763 = vadd.f32 %v513, %v1505
        %v1764 = vadd.f32 %v514, %v1093
        %v1765 = vadd.f32 %v515, %v1095
        %v1766 = vadd.f32 %v516, %v1510
        %v1767 = vadd.f32 %v517, %v1099
        %v1768 = vadd.f32 %v518, %v1101
        %v1769 = vadd.f32 %v519, %v1515
        %v1770 = vadd.f32 %v520, %v1105
        %v1771 = vadd.f32 %v521, %v1107
        %v1772 = vadd.f32 %v522, %v1520
        %v1773 = vadd.f32 %v523, %v1111
        %v1774 = vadd.f32 %v524, %v1113
        %v1775 = vadd.f32 %v525, %v1525
        %v1776 = vadd.f32 %v526, %v1117
        %v1777 = vadd.f32 %v527, %v1119
        %v1778 = vadd.f32 %v528, %v1530
        %v1779 = vadd.f32 %v529, %v1123
        %v1780 = vadd.f32 %v530, %v1125
        %v1781 = vadd.f32 %v531, %v1535
        %v1782 = vadd.f32 %v532, %v1129
        %v1783 = vadd.f32 %v533, %v1131
        %v1784 = vadd.f32 %v534, %v1540
        %v1785 = vadd.f32 %v535, %v1135
        %v1786 = vadd.f32 %v536, %v1137
        %v1787 = vadd.f32 %v537, %v1545
        %v1788 = vadd.f32 %v538, %v1141
        %v1789 = vadd.f32 %v539, %v1143
        %v1790 = vadd.f32 %v540, %v1550
        %v1791 = vadd.f32 %v541, %v1147
        %v1792 = vadd.f32 %v542, %v1149
        %v1793 = vadd.f32 %v543, %v1555
        %v1794 = vadd.f32 %v544, %v1153
        %v1795 = vadd.f32 %v545, %v1155
        %v1796 = vadd.f32 %v546, %v1560
        %v1797 = vadd.f32 %v547, %v1159
        %v1798 = vadd.f32 %v548, %v1161
        %v1799 = vadd.f32 %v549, %v1565
        %v1800 = vadd.f32 %v550, %v1165
        %v1801 = vadd.f32 %v551, %v1167
        %v1802 = vadd.f32 %v552, %v1570
        %v1803 = vadd.f32 %v553, %v1171
        %v1804 = vadd.f32 %v554, %v1173
        %v1805 = vadd.f32 %v555, %v1575
        %v1806 = vadd.f32 %v556, %v1177
        %v1807 = vadd.f32 %v557, %v1179
        %v1808 = vadd.f32 %v558, %v1580
        %v1809 = vadd.f32 %v559, %v1183
        %v1810 = vadd.f32 %v560, %v1185
        %v1811 = vadd.f32 %v561, %v1585
        %v1812 = vadd.f32 %v562, %v1189
        %v1813 = vadd.f32 %v563, %v1191
        %v1814 = vadd.f32 %v564, %v1590
        %v1815 = vadd.f32 %v565, %v1195
        %v1816 = vadd.f32 %v566, %v1197
        %v1817 = vadd.f32 %v567, %v1595
        %v1818 = vadd.f32 %v568, %v1201
        %v1819 = vadd.f32 %v569, %v1203
        %v1820 = vadd.f32 %v570, %v1600
        %v1821 = vadd.f32 %v571, %v1207
        %v1822 = vadd.f32 %v572, %v1209
        %v1823 = vadd.f32 %v573, %v1605
        %v1824 = vadd.f32 %v574, %v1213
        %v1825 = vadd.f32 %v575, %v1215
        %v1826 = vadd.f32 %v576, %v1610
        %v1827 = vadd.f32 %v577, %v1219
        %v1828 = vadd.f32 %v578, %v1221
        %v1829 = vadd.f32 %v579, %v1615
        %v1830 = vadd.f32 %v580, %v1225
        %v1831 = vadd.f32 %v581, %v1227
        %v1832 = vadd.f32 %v582, %v1620
        %v1833 = vadd.f32 %v583, %v1231
        %v1834 = vadd.f32 %v584, %v1233
        %v1835 = vadd.f32 %v585, %v1625
        %v1836 = vadd.f32 %v586, %v1237
        %v1837 = vadd.f32 %v587, %v1239
        %v1838 = vadd.f32 %v588, %v1630
        %v1839 = vadd.f32 %v589, %v1243
        %v1840 = vadd.f32 %v590, %v1245
        %v1841 = vadd.f32 %v591, %v1635
        %v1842 = vadd.f32 %v592, %v1249
        %v1843 = vadd.f32 %v593, %v1251
        %v1844 = vadd.f32 %v594, %v1640
        %v1845 = vadd.f32 %v595, %v1255
        %v1846 = vadd.f32 %v596, %v1257
        %v1847 = vadd.f32 %v597, %v1645
        %v1848 = vadd.f32 %v598, %v1261
        %v1849 = vadd.f32 %v599, %v1263
        %v1850 = vadd.f32 %v600, %v1650
        %v1851 = vadd.f32 %v601, %v1267
        %v1852 = vadd.f32 %v602, %v1269
        %v1853 = vadd.f32 %v603, %v1655
        %v1854 = vadd.f32 %v604, %v1273
        %v1855 = vadd.f32 %v605, %v1275
        %v1856 = vadd.f32 %v606, %v1660
        %v1857 = vadd.f32 %v607, %v1279
        %v1858 = vadd.f32 %v608, %v1281
        %v1859 = vadd.f32 %v609, %v1665
        %1860 = vst [vmem:[#allocation2] sm:$0xff] %v1668
        %1861 = vst [vmem:[#allocation2 + $0x8] sm:$0xff] %v1669
        %1862 = vst [vmem:[#allocation2 + $0x10] sm:$0xff] %v1670
        %1863 = vst [vmem:[#allocation2 + $0x18] sm:$0xff] %v1671
        %1864 = vst [vmem:[#allocation2 + $0x20] sm:$0xff] %v1672
        %1865 = vst [vmem:[#allocation2 + $0x28] sm:$0xff] %v1673
        %1866 = vst [vmem:[#allocation2 + $0x30] sm:$0xff] %v1674
        %1867 = vst [vmem:[#allocation2 + $0x38] sm:$0xff] %v1675
        %1868 = vst [vmem:[#allocation2 + $0x40] sm:$0xff] %v1676
        %1869 = vst [vmem:[#allocation2 + $0x48] sm:$0xff] %v1677
        %1870 = vst [vmem:[#allocation2 + $0x50] sm:$0xff] %v1678
        %1871 = vst [vmem:[#allocation2 + $0x58] sm:$0xff] %v1679
        %1872 = vst [vmem:[#allocation2 + $0x60] sm:$0xff] %v1680
        %1873 = vst [vmem:[#allocation2 + $0x68] sm:$0xff] %v1681
        %1874 = vst [vmem:[#allocation2 + $0x70] sm:$0xff] %v1682
        %1875 = vst [vmem:[#allocation2 + $0x78] sm:$0xff] %v1683
        %1876 = vst [vmem:[#allocation2 + $0x80] sm:$0xff] %v1684
        %1877 = vst [vmem:[#allocation2 + $0x88] sm:$0xff] %v1685
        %1878 = vst [vmem:[#allocation2 + $0x90] sm:$0xff] %v1686
        %1879 = vst [vmem:[#allocation2 + $0x98] sm:$0xff] %v1687
        %1880 = vst [vmem:[#allocation2 + $0xa0] sm:$0xff] %v1688
        %1881 = vst [vmem:[#allocation2 + $0xa8] sm:$0xff] %v1689
        %1882 = vst [vmem:[#allocation2 + $0xb0] sm:$0xff] %v1690
        %1883 = vst [vmem:[#allocation2 + $0xb8] sm:$0xff] %v1691
        %1884 = vst [vmem:[#allocation2 + $0xc0] sm:$0xff] %v1692
        %1885 = vst [vmem:[#allocation2 + $0xc8] sm:$0xff] %v1693
        %1886 = vst [vmem:[#allocation2 + $0xd0] sm:$0xff] %v1694
        %1887 = vst [vmem:[#allocation2 + $0xd8] sm:$0xff] %v1695
        %1888 = vst [vmem:[#allocation2 + $0xe0] sm:$0xff] %v1696
        %1889 = vst [vmem:[#allocation2 + $0xe8] sm:$0xff] %v1697
        %1890 = vst [vmem:[#allocation2 + $0xf0] sm:$0xff] %v1698
        %1891 = vst [vmem:[#allocation2 + $0xf8] sm:$0xff] %v1699
        %1892 = vst [vmem:[#allocation2 + $0x100] sm:$0xff] %v1700
        %1893 = vst [vmem:[#allocation2 + $0x108] sm:$0xff] %v1701
        %1894 = vst [vmem:[#allocation2 + $0x110] sm:$0xff] %v1702
        %1895 = vst [vmem:[#allocation2 + $0x118] sm:$0xff] %v1703
        %1896 = vst [vmem:[#allocation2 + $0x120] sm:$0xff] %v1704
        %1897 = vst [vmem:[#allocation2 + $0x128] sm:$0xff] %v1705
        %1898 = vst [vmem:[#allocation2 + $0x130] sm:$0xff] %v1706
        %1899 = vst [vmem:[#allocation2 + $0x138] sm:$0xff] %v1707
        %1900 = vst [vmem:[#allocation2 + $0x140] sm:$0xff] %v1708
        %1901 = vst [vmem:[#allocation2 + $0x148] sm:$0xff] %v1709
        %1902 = vst [vmem:[#allocation2 + $0x150] sm:$0xff] %v1710
        %1903 = vst [vmem:[#allocation2 + $0x158] sm:$0xff] %v1711
        %1904 = vst [vmem:[#allocation2 + $0x160] sm:$0xff] %v1712
        %1905 = vst [vmem:[#allocation2 + $0x168] sm:$0xff] %v1713
        %1906 = vst [vmem:[#allocation2 + $0x170] sm:$0xff] %v1714
        %1907 = vst [vmem:[#allocation2 + $0x178] sm:$0xff] %v1715
        %1908 = vst [vmem:[#allocation2 + $0x180] sm:$0xff] %v1716
        %1909 = vst [vmem:[#allocation2 + $0x188] sm:$0xff] %v1717
        %1910 = vst [vmem:[#allocation2 + $0x190] sm:$0xff] %v1718
        %1911 = vst [vmem:[#allocation2 + $0x198] sm:$0xff] %v1719
        %1912 = vst [vmem:[#allocation2 + $0x1a0] sm:$0xff] %v1720
        %1913 = vst [vmem:[#allocation2 + $0x1a8] sm:$0xff] %v1721
        %1914 = vst [vmem:[#allocation2 + $0x1b0] sm:$0xff] %v1722
        %1915 = vst [vmem:[#allocation2 + $0x1b8] sm:$0xff] %v1723
        %1916 = vst [vmem:[#allocation2 + $0x1c0] sm:$0xff] %v1724
        %1917 = vst [vmem:[#allocation2 + $0x1c8] sm:$0xff] %v1725
        %1918 = vst [vmem:[#allocation2 + $0x1d0] sm:$0xff] %v1726
        %1919 = vst [vmem:[#allocation2 + $0x1d8] sm:$0xff] %v1727
        %1920 = vst [vmem:[#allocation2 + $0x1e0] sm:$0xff] %v1728
        %1921 = vst [vmem:[#allocation2 + $0x1e8] sm:$0xff] %v1729
        %1922 = vst [vmem:[#allocation2 + $0x1f0] sm:$0xff] %v1730
        %1923 = vst [vmem:[#allocation2 + $0x1f8] sm:$0xff] %v1731
        %1924 = vst [vmem:[#allocation2 + $0x200] sm:$0xff] %v1732
        %1925 = vst [vmem:[#allocation2 + $0x208] sm:$0xff] %v1733
        %1926 = vst [vmem:[#allocation2 + $0x210] sm:$0xff] %v1734
        %1927 = vst [vmem:[#allocation2 + $0x218] sm:$0xff] %v1735
        %1928 = vst [vmem:[#allocation2 + $0x220] sm:$0xff] %v1736
        %1929 = vst [vmem:[#allocation2 + $0x228] sm:$0xff] %v1737
        %1930 = vst [vmem:[#allocation2 + $0x230] sm:$0xff] %v1738
        %1931 = vst [vmem:[#allocation2 + $0x238] sm:$0xff] %v1739
        %1932 = vst [vmem:[#allocation2 + $0x240] sm:$0xff] %v1740
        %1933 = vst [vmem:[#allocation2 + $0x248] sm:$0xff] %v1741
        %1934 = vst [vmem:[#allocation2 + $0x250] sm:$0xff] %v1742
        %1935 = vst [vmem:[#allocation2 + $0x258] sm:$0xff] %v1743
        %1936 = vst [vmem:[#allocation2 + $0x260] sm:$0xff] %v1744
        %1937 = vst [vmem:[#allocation2 + $0x268] sm:$0xff] %v1745
        %1938 = vst [vmem:[#allocation2 + $0x270] sm:$0xff] %v1746
        %1939 = vst [vmem:[#allocation2 + $0x278] sm:$0xff] %v1747
        %1940 = vst [vmem:[#allocation2 + $0x280] sm:$0xff] %v1748
        %1941 = vst [vmem:[#allocation2 + $0x288] sm:$0xff] %v1749
        %1942 = vst [vmem:[#allocation2 + $0x290] sm:$0xff] %v1750
        %1943 = vst [vmem:[#allocation2 + $0x298] sm:$0xff] %v1751
        %1944 = vst [vmem:[#allocation2 + $0x2a0] sm:$0xff] %v1752
        %1945 = vst [vmem:[#allocation2 + $0x2a8] sm:$0xff] %v1753
        %1946 = vst [vmem:[#allocation2 + $0x2b0] sm:$0xff] %v1754
        %1947 = vst [vmem:[#allocation2 + $0x2b8] sm:$0xff] %v1755
        %1948 = vst [vmem:[#allocation2 + $0x2c0] sm:$0xff] %v1756
        %1949 = vst [vmem:[#allocation2 + $0x2c8] sm:$0xff] %v1757
        %1950 = vst [vmem:[#allocation2 + $0x2d0] sm:$0xff] %v1758
        %1951 = vst [vmem:[#allocation2 + $0x2d8] sm:$0xff] %v1759
        %1952 = vst [vmem:[#allocation2 + $0x2e0] sm:$0xff] %v1760
        %1953 = vst [vmem:[#allocation2 + $0x2e8] sm:$0xff] %v1761
        %1954 = vst [vmem:[#allocation2 + $0x2f0] sm:$0xff] %v1762
        %1955 = vst [vmem:[#allocation2 + $0x2f8] sm:$0xff] %v1763
        %1956 = vst [vmem:[#allocation2 + $0x300] sm:$0xff] %v1764
        %1957 = vst [vmem:[#allocation2 + $0x308] sm:$0xff] %v1765
        %1958 = vst [vmem:[#allocation2 + $0x310] sm:$0xff] %v1766
        %1959 = vst [vmem:[#allocation2 + $0x318] sm:$0xff] %v1767
        %1960 = vst [vmem:[#allocation2 + $0x320] sm:$0xff] %v1768
        %1961 = vst [vmem:[#allocation2 + $0x328] sm:$0xff] %v1769
        %1962 = vst [vmem:[#allocation2 + $0x330] sm:$0xff] %v1770
        %1963 = vst [vmem:[#allocation2 + $0x338] sm:$0xff] %v1771
        %1964 = vst [vmem:[#allocation2 + $0x340] sm:$0xff] %v1772
        %1965 = vst [vmem:[#allocation2 + $0x348] sm:$0xff] %v1773
        %1966 = vst [vmem:[#allocation2 + $0x350] sm:$0xff] %v1774
        %1967 = vst [vmem:[#allocation2 + $0x358] sm:$0xff] %v1775
        %1968 = vst [vmem:[#allocation2 + $0x360] sm:$0xff] %v1776
        %1969 = vst [vmem:[#allocation2 + $0x368] sm:$0xff] %v1777
        %1970 = vst [vmem:[#allocation2 + $0x370] sm:$0xff] %v1778
        %1971 = vst [vmem:[#allocation2 + $0x378] sm:$0xff] %v1779
        %1972 = vst [vmem:[#allocation2 + $0x380] sm:$0xff] %v1780
        %1973 = vst [vmem:[#allocation2 + $0x388] sm:$0xff] %v1781
        %1974 = vst [vmem:[#allocation2 + $0x390] sm:$0xff] %v1782
        %1975 = vst [vmem:[#allocation2 + $0x398] sm:$0xff] %v1783
        %1976 = vst [vmem:[#allocation2 + $0x3a0] sm:$0xff] %v1784
        %1977 = vst [vmem:[#allocation2 + $0x3a8] sm:$0xff] %v1785
        %1978 = vst [vmem:[#allocation2 + $0x3b0] sm:$0xff] %v1786
        %1979 = vst [vmem:[#allocation2 + $0x3b8] sm:$0xff] %v1787
        %1980 = vst [vmem:[#allocation2 + $0x3c0] sm:$0xff] %v1788
        %1981 = vst [vmem:[#allocation2 + $0x3c8] sm:$0xff] %v1789
        %1982 = vst [vmem:[#allocation2 + $0x3d0] sm:$0xff] %v1790
        %1983 = vst [vmem:[#allocation2 + $0x3d8] sm:$0xff] %v1791
        %1984 = vst [vmem:[#allocation2 + $0x3e0] sm:$0xff] %v1792
        %1985 = vst [vmem:[#allocation2 + $0x3e8] sm:$0xff] %v1793
        %1986 = vst [vmem:[#allocation2 + $0x3f0] sm:$0xff] %v1794
        %1987 = vst [vmem:[#allocation2 + $0x3f8] sm:$0xff] %v1795
        %1988 = vst [vmem:[#allocation2 + $0x400] sm:$0xff] %v1796
        %1989 = vst [vmem:[#allocation2 + $0x408] sm:$0xff] %v1797
        %1990 = vst [vmem:[#allocation2 + $0x410] sm:$0xff] %v1798
        %1991 = vst [vmem:[#allocation2 + $0x418] sm:$0xff] %v1799
        %1992 = vst [vmem:[#allocation2 + $0x420] sm:$0xff] %v1800
        %1993 = vst [vmem:[#allocation2 + $0x428] sm:$0xff] %v1801
        %1994 = vst [vmem:[#allocation2 + $0x430] sm:$0xff] %v1802
        %1995 = vst [vmem:[#allocation2 + $0x438] sm:$0xff] %v1803
        %1996 = vst [vmem:[#allocation2 + $0x440] sm:$0xff] %v1804
        %1997 = vst [vmem:[#allocation2 + $0x448] sm:$0xff] %v1805
        %1998 = vst [vmem:[#allocation2 + $0x450] sm:$0xff] %v1806
        %1999 = vst [vmem:[#allocation2 + $0x458] sm:$0xff] %v1807
        %2000 = vst [vmem:[#allocation2 + $0x460] sm:$0xff] %v1808
        %2001 = vst [vmem:[#allocation2 + $0x468] sm:$0xff] %v1809
        %2002 = vst [vmem:[#allocation2 + $0x470] sm:$0xff] %v1810
        %2003 = vst [vmem:[#allocation2 + $0x478] sm:$0xff] %v1811
        %2004 = vst [vmem:[#allocation2 + $0x480] sm:$0xff] %v1812
        %2005 = vst [vmem:[#allocation2 + $0x488] sm:$0xff] %v1813
        %2006 = vst [vmem:[#allocation2 + $0x490] sm:$0xff] %v1814
        %2007 = vst [vmem:[#allocation2 + $0x498] sm:$0xff] %v1815
        %2008 = vst [vmem:[#allocation2 + $0x4a0] sm:$0xff] %v1816
        %2009 = vst [vmem:[#allocation2 + $0x4a8] sm:$0xff] %v1817
        %2010 = vst [vmem:[#allocation2 + $0x4b0] sm:$0xff] %v1818
        %2011 = vst [vmem:[#allocation2 + $0x4b8] sm:$0xff] %v1819
        %2012 = vst [vmem:[#allocation2 + $0x4c0] sm:$0xff] %v1820
        %2013 = vst [vmem:[#allocation2 + $0x4c8] sm:$0xff] %v1821
        %2014 = vst [vmem:[#allocation2 + $0x4d0] sm:$0xff] %v1822
        %2015 = vst [vmem:[#allocation2 + $0x4d8] sm:$0xff] %v1823
        %2016 = vst [vmem:[#allocation2 + $0x4e0] sm:$0xff] %v1824
        %2017 = vst [vmem:[#allocation2 + $0x4e8] sm:$0xff] %v1825
        %2018 = vst [vmem:[#allocation2 + $0x4f0] sm:$0xff] %v1826
        %2019 = vst [vmem:[#allocation2 + $0x4f8] sm:$0xff] %v1827
        %2020 = vst [vmem:[#allocation2 + $0x500] sm:$0xff] %v1828
        %2021 = vst [vmem:[#allocation2 + $0x508] sm:$0xff] %v1829
        %2022 = vst [vmem:[#allocation2 + $0x510] sm:$0xff] %v1830
        %2023 = vst [vmem:[#allocation2 + $0x518] sm:$0xff] %v1831
        %2024 = vst [vmem:[#allocation2 + $0x520] sm:$0xff] %v1832
        %2025 = vst [vmem:[#allocation2 + $0x528] sm:$0xff] %v1833
        %2026 = vst [vmem:[#allocation2 + $0x530] sm:$0xff] %v1834
        %2027 = vst [vmem:[#allocation2 + $0x538] sm:$0xff] %v1835
        %2028 = vst [vmem:[#allocation2 + $0x540] sm:$0xff] %v1836
        %2029 = vst [vmem:[#allocation2 + $0x548] sm:$0xff] %v1837
        %2030 = vst [vmem:[#allocation2 + $0x550] sm:$0xff] %v1838
        %2031 = vst [vmem:[#allocation2 + $0x558] sm:$0xff] %v1839
        %2032 = vst [vmem:[#allocation2 + $0x560] sm:$0xff] %v1840
        %2033 = vst [vmem:[#allocation2 + $0x568] sm:$0xff] %v1841
        %2034 = vst [vmem:[#allocation2 + $0x570] sm:$0xff] %v1842
        %2035 = vst [vmem:[#allocation2 + $0x578] sm:$0xff] %v1843
        %2036 = vst [vmem:[#allocation2 + $0x580] sm:$0xff] %v1844
        %2037 = vst [vmem:[#allocation2 + $0x588] sm:$0xff] %v1845
        %2038 = vst [vmem:[#allocation2 + $0x590] sm:$0xff] %v1846
        %2039 = vst [vmem:[#allocation2 + $0x598] sm:$0xff] %v1847
        %2040 = vst [vmem:[#allocation2 + $0x5a0] sm:$0xff] %v1848
        %2041 = vst [vmem:[#allocation2 + $0x5a8] sm:$0xff] %v1849
        %2042 = vst [vmem:[#allocation2 + $0x5b0] sm:$0xff] %v1850
        %2043 = vst [vmem:[#allocation2 + $0x5b8] sm:$0xff] %v1851
        %2044 = vst [vmem:[#allocation2 + $0x5c0] sm:$0xff] %v1852
        %2045 = vst [vmem:[#allocation2 + $0x5c8] sm:$0xff] %v1853
        %2046 = vst [vmem:[#allocation2 + $0x5d0] sm:$0xff] %v1854
        %2047 = vst [vmem:[#allocation2 + $0x5d8] sm:$0xff] %v1855
        %2048 = vst [vmem:[#allocation2 + $0x5e0] sm:$0xff] %v1856
        %2049 = vst [vmem:[#allocation2 + $0x5e8] sm:$0xff] %v1857
        %2050 = vst [vmem:[#allocation2 + $0x5f0] sm:$0xff] %v1858
        %2051 = vst [vmem:[#allocation2 + $0x5f8] sm:$0xff] %v1859
        // Predicated region
        $region41: #{tpu_custom_call.1} parent=27 // pred_check
          %p2052 = pneg %p222
        $region42: #{tpu_custom_call.1} parent=27 // pred_check_branch
          %2054 = sbr.rel (%p2052) target = $region44
        $region43: #{tpu_custom_call.1} parent=27 // pred_region
          %v2055 = vld [vmem:[#allocation2] sm:$0xff]
          %v2056 = vld [vmem:[#allocation2 + $0x8] sm:$0xff]
          %v2057 = vld [vmem:[#allocation2 + $0x10] sm:$0xff]
          %v2058 = vld [vmem:[#allocation2 + $0x18] sm:$0xff]
          %v2059 = vld [vmem:[#allocation2 + $0x20] sm:$0xff]
          %v2060 = vld [vmem:[#allocation2 + $0x28] sm:$0xff]
          %v2061 = vld [vmem:[#allocation2 + $0x30] sm:$0xff]
          %v2062 = vld [vmem:[#allocation2 + $0x38] sm:$0xff]
          %v2063 = vld [vmem:[#allocation2 + $0x40] sm:$0xff]
          %v2064 = vld [vmem:[#allocation2 + $0x48] sm:$0xff]
          %v2065 = vld [vmem:[#allocation2 + $0x50] sm:$0xff]
          %v2066 = vld [vmem:[#allocation2 + $0x58] sm:$0xff]
          %v2067 = vld [vmem:[#allocation2 + $0x60] sm:$0xff]
          %v2068 = vld [vmem:[#allocation2 + $0x68] sm:$0xff]
          %v2069 = vld [vmem:[#allocation2 + $0x70] sm:$0xff]
          %v2070 = vld [vmem:[#allocation2 + $0x78] sm:$0xff]
          %v2071 = vld [vmem:[#allocation2 + $0x80] sm:$0xff]
          %v2072 = vld [vmem:[#allocation2 + $0x88] sm:$0xff]
          %v2073 = vld [vmem:[#allocation2 + $0x90] sm:$0xff]
          %v2074 = vld [vmem:[#allocation2 + $0x98] sm:$0xff]
          %v2075 = vld [vmem:[#allocation2 + $0xa0] sm:$0xff]
          %v2076 = vld [vmem:[#allocation2 + $0xa8] sm:$0xff]
          %v2077 = vld [vmem:[#allocation2 + $0xb0] sm:$0xff]
          %v2078 = vld [vmem:[#allocation2 + $0xb8] sm:$0xff]
          %v2079 = vld [vmem:[#allocation2 + $0xc0] sm:$0xff]
          %v2080 = vld [vmem:[#allocation2 + $0xc8] sm:$0xff]
          %v2081 = vld [vmem:[#allocation2 + $0xd0] sm:$0xff]
          %v2082 = vld [vmem:[#allocation2 + $0xd8] sm:$0xff]
          %v2083 = vld [vmem:[#allocation2 + $0xe0] sm:$0xff]
          %v2084 = vld [vmem:[#allocation2 + $0xe8] sm:$0xff]
          %v2085 = vld [vmem:[#allocation2 + $0xf0] sm:$0xff]
          %v2086 = vld [vmem:[#allocation2 + $0xf8] sm:$0xff]
          %v2087 = vld [vmem:[#allocation2 + $0x100] sm:$0xff]
          %v2088 = vld [vmem:[#allocation2 + $0x108] sm:$0xff]
          %v2089 = vld [vmem:[#allocation2 + $0x110] sm:$0xff]
          %v2090 = vld [vmem:[#allocation2 + $0x118] sm:$0xff]
          %v2091 = vld [vmem:[#allocation2 + $0x120] sm:$0xff]
          %v2092 = vld [vmem:[#allocation2 + $0x128] sm:$0xff]
          %v2093 = vld [vmem:[#allocation2 + $0x130] sm:$0xff]
          %v2094 = vld [vmem:[#allocation2 + $0x138] sm:$0xff]
          %v2095 = vld [vmem:[#allocation2 + $0x140] sm:$0xff]
          %v2096 = vld [vmem:[#allocation2 + $0x148] sm:$0xff]
          %v2097 = vld [vmem:[#allocation2 + $0x150] sm:$0xff]
          %v2098 = vld [vmem:[#allocation2 + $0x158] sm:$0xff]
          %v2099 = vld [vmem:[#allocation2 + $0x160] sm:$0xff]
          %v2100 = vld [vmem:[#allocation2 + $0x168] sm:$0xff]
          %v2101 = vld [vmem:[#allocation2 + $0x170] sm:$0xff]
          %v2102 = vld [vmem:[#allocation2 + $0x178] sm:$0xff]
          %v2103 = vld [vmem:[#allocation2 + $0x180] sm:$0xff]
          %v2104 = vld [vmem:[#allocation2 + $0x188] sm:$0xff]
          %v2105 = vld [vmem:[#allocation2 + $0x190] sm:$0xff]
          %v2106 = vld [vmem:[#allocation2 + $0x198] sm:$0xff]
          %v2107 = vld [vmem:[#allocation2 + $0x1a0] sm:$0xff]
          %v2108 = vld [vmem:[#allocation2 + $0x1a8] sm:$0xff]
          %v2109 = vld [vmem:[#allocation2 + $0x1b0] sm:$0xff]
          %v2110 = vld [vmem:[#allocation2 + $0x1b8] sm:$0xff]
          %v2111 = vld [vmem:[#allocation2 + $0x1c0] sm:$0xff]
          %v2112 = vld [vmem:[#allocation2 + $0x1c8] sm:$0xff]
          %v2113 = vld [vmem:[#allocation2 + $0x1d0] sm:$0xff]
          %v2114 = vld [vmem:[#allocation2 + $0x1d8] sm:$0xff]
          %v2115 = vld [vmem:[#allocation2 + $0x1e0] sm:$0xff]
          %v2116 = vld [vmem:[#allocation2 + $0x1e8] sm:$0xff]
          %v2117 = vld [vmem:[#allocation2 + $0x1f0] sm:$0xff]
          %v2118 = vld [vmem:[#allocation2 + $0x1f8] sm:$0xff]
          %v2119 = vld [vmem:[#allocation2 + $0x200] sm:$0xff]
          %v2120 = vld [vmem:[#allocation2 + $0x208] sm:$0xff]
          %v2121 = vld [vmem:[#allocation2 + $0x210] sm:$0xff]
          %v2122 = vld [vmem:[#allocation2 + $0x218] sm:$0xff]
          %v2123 = vld [vmem:[#allocation2 + $0x220] sm:$0xff]
          %v2124 = vld [vmem:[#allocation2 + $0x228] sm:$0xff]
          %v2125 = vld [vmem:[#allocation2 + $0x230] sm:$0xff]
          %v2126 = vld [vmem:[#allocation2 + $0x238] sm:$0xff]
          %v2127 = vld [vmem:[#allocation2 + $0x240] sm:$0xff]
          %v2128 = vld [vmem:[#allocation2 + $0x248] sm:$0xff]
          %v2129 = vld [vmem:[#allocation2 + $0x250] sm:$0xff]
          %v2130 = vld [vmem:[#allocation2 + $0x258] sm:$0xff]
          %v2131 = vld [vmem:[#allocation2 + $0x260] sm:$0xff]
          %v2132 = vld [vmem:[#allocation2 + $0x268] sm:$0xff]
          %v2133 = vld [vmem:[#allocation2 + $0x270] sm:$0xff]
          %v2134 = vld [vmem:[#allocation2 + $0x278] sm:$0xff]
          %v2135 = vld [vmem:[#allocation2 + $0x280] sm:$0xff]
          %v2136 = vld [vmem:[#allocation2 + $0x288] sm:$0xff]
          %v2137 = vld [vmem:[#allocation2 + $0x290] sm:$0xff]
          %v2138 = vld [vmem:[#allocation2 + $0x298] sm:$0xff]
          %v2139 = vld [vmem:[#allocation2 + $0x2a0] sm:$0xff]
          %v2140 = vld [vmem:[#allocation2 + $0x2a8] sm:$0xff]
          %v2141 = vld [vmem:[#allocation2 + $0x2b0] sm:$0xff]
          %v2142 = vld [vmem:[#allocation2 + $0x2b8] sm:$0xff]
          %v2143 = vld [vmem:[#allocation2 + $0x2c0] sm:$0xff]
          %v2144 = vld [vmem:[#allocation2 + $0x2c8] sm:$0xff]
          %v2145 = vld [vmem:[#allocation2 + $0x2d0] sm:$0xff]
          %v2146 = vld [vmem:[#allocation2 + $0x2d8] sm:$0xff]
          %v2147 = vld [vmem:[#allocation2 + $0x2e0] sm:$0xff]
          %v2148 = vld [vmem:[#allocation2 + $0x2e8] sm:$0xff]
          %v2149 = vld [vmem:[#allocation2 + $0x2f0] sm:$0xff]
          %v2150 = vld [vmem:[#allocation2 + $0x2f8] sm:$0xff]
          %v2151 = vld [vmem:[#allocation2 + $0x300] sm:$0xff]
          %v2152 = vld [vmem:[#allocation2 + $0x308] sm:$0xff]
          %v2153 = vld [vmem:[#allocation2 + $0x310] sm:$0xff]
          %v2154 = vld [vmem:[#allocation2 + $0x318] sm:$0xff]
          %v2155 = vld [vmem:[#allocation2 + $0x320] sm:$0xff]
          %v2156 = vld [vmem:[#allocation2 + $0x328] sm:$0xff]
          %v2157 = vld [vmem:[#allocation2 + $0x330] sm:$0xff]
          %v2158 = vld [vmem:[#allocation2 + $0x338] sm:$0xff]
          %v2159 = vld [vmem:[#allocation2 + $0x340] sm:$0xff]
          %v2160 = vld [vmem:[#allocation2 + $0x348] sm:$0xff]
          %v2161 = vld [vmem:[#allocation2 + $0x350] sm:$0xff]
          %v2162 = vld [vmem:[#allocation2 + $0x358] sm:$0xff]
          %v2163 = vld [vmem:[#allocation2 + $0x360] sm:$0xff]
          %v2164 = vld [vmem:[#allocation2 + $0x368] sm:$0xff]
          %v2165 = vld [vmem:[#allocation2 + $0x370] sm:$0xff]
          %v2166 = vld [vmem:[#allocation2 + $0x378] sm:$0xff]
          %v2167 = vld [vmem:[#allocation2 + $0x380] sm:$0xff]
          %v2168 = vld [vmem:[#allocation2 + $0x388] sm:$0xff]
          %v2169 = vld [vmem:[#allocation2 + $0x390] sm:$0xff]
          %v2170 = vld [vmem:[#allocation2 + $0x398] sm:$0xff]
          %v2171 = vld [vmem:[#allocation2 + $0x3a0] sm:$0xff]
          %v2172 = vld [vmem:[#allocation2 + $0x3a8] sm:$0xff]
          %v2173 = vld [vmem:[#allocation2 + $0x3b0] sm:$0xff]
          %v2174 = vld [vmem:[#allocation2 + $0x3b8] sm:$0xff]
          %v2175 = vld [vmem:[#allocation2 + $0x3c0] sm:$0xff]
          %v2176 = vld [vmem:[#allocation2 + $0x3c8] sm:$0xff]
          %v2177 = vld [vmem:[#allocation2 + $0x3d0] sm:$0xff]
          %v2178 = vld [vmem:[#allocation2 + $0x3d8] sm:$0xff]
          %v2179 = vld [vmem:[#allocation2 + $0x3e0] sm:$0xff]
          %v2180 = vld [vmem:[#allocation2 + $0x3e8] sm:$0xff]
          %v2181 = vld [vmem:[#allocation2 + $0x3f0] sm:$0xff]
          %v2182 = vld [vmem:[#allocation2 + $0x3f8] sm:$0xff]
          %v2183 = vld [vmem:[#allocation2 + $0x400] sm:$0xff]
          %v2184 = vld [vmem:[#allocation2 + $0x408] sm:$0xff]
          %v2185 = vld [vmem:[#allocation2 + $0x410] sm:$0xff]
          %v2186 = vld [vmem:[#allocation2 + $0x418] sm:$0xff]
          %v2187 = vld [vmem:[#allocation2 + $0x420] sm:$0xff]
          %v2188 = vld [vmem:[#allocation2 + $0x428] sm:$0xff]
          %v2189 = vld [vmem:[#allocation2 + $0x430] sm:$0xff]
          %v2190 = vld [vmem:[#allocation2 + $0x438] sm:$0xff]
          %v2191 = vld [vmem:[#allocation2 + $0x440] sm:$0xff]
          %v2192 = vld [vmem:[#allocation2 + $0x448] sm:$0xff]
          %v2193 = vld [vmem:[#allocation2 + $0x450] sm:$0xff]
          %v2194 = vld [vmem:[#allocation2 + $0x458] sm:$0xff]
          %v2195 = vld [vmem:[#allocation2 + $0x460] sm:$0xff]
          %v2196 = vld [vmem:[#allocation2 + $0x468] sm:$0xff]
          %v2197 = vld [vmem:[#allocation2 + $0x470] sm:$0xff]
          %v2198 = vld [vmem:[#allocation2 + $0x478] sm:$0xff]
          %v2199 = vld [vmem:[#allocation2 + $0x480] sm:$0xff]
          %v2200 = vld [vmem:[#allocation2 + $0x488] sm:$0xff]
          %v2201 = vld [vmem:[#allocation2 + $0x490] sm:$0xff]
          %v2202 = vld [vmem:[#allocation2 + $0x498] sm:$0xff]
          %v2203 = vld [vmem:[#allocation2 + $0x4a0] sm:$0xff]
          %v2204 = vld [vmem:[#allocation2 + $0x4a8] sm:$0xff]
          %v2205 = vld [vmem:[#allocation2 + $0x4b0] sm:$0xff]
          %v2206 = vld [vmem:[#allocation2 + $0x4b8] sm:$0xff]
          %v2207 = vld [vmem:[#allocation2 + $0x4c0] sm:$0xff]
          %v2208 = vld [vmem:[#allocation2 + $0x4c8] sm:$0xff]
          %v2209 = vld [vmem:[#allocation2 + $0x4d0] sm:$0xff]
          %v2210 = vld [vmem:[#allocation2 + $0x4d8] sm:$0xff]
          %v2211 = vld [vmem:[#allocation2 + $0x4e0] sm:$0xff]
          %v2212 = vld [vmem:[#allocation2 + $0x4e8] sm:$0xff]
          %v2213 = vld [vmem:[#allocation2 + $0x4f0] sm:$0xff]
          %v2214 = vld [vmem:[#allocation2 + $0x4f8] sm:$0xff]
          %v2215 = vld [vmem:[#allocation2 + $0x500] sm:$0xff]
          %v2216 = vld [vmem:[#allocation2 + $0x508] sm:$0xff]
          %v2217 = vld [vmem:[#allocation2 + $0x510] sm:$0xff]
          %v2218 = vld [vmem:[#allocation2 + $0x518] sm:$0xff]
          %v2219 = vld [vmem:[#allocation2 + $0x520] sm:$0xff]
          %v2220 = vld [vmem:[#allocation2 + $0x528] sm:$0xff]
          %v2221 = vld [vmem:[#allocation2 + $0x530] sm:$0xff]
          %v2222 = vld [vmem:[#allocation2 + $0x538] sm:$0xff]
          %v2223 = vld [vmem:[#allocation2 + $0x540] sm:$0xff]
          %v2224 = vld [vmem:[#allocation2 + $0x548] sm:$0xff]
          %v2225 = vld [vmem:[#allocation2 + $0x550] sm:$0xff]
          %v2226 = vld [vmem:[#allocation2 + $0x558] sm:$0xff]
          %v2227 = vld [vmem:[#allocation2 + $0x560] sm:$0xff]
          %v2228 = vld [vmem:[#allocation2 + $0x568] sm:$0xff]
          %v2229 = vld [vmem:[#allocation2 + $0x570] sm:$0xff]
          %v2230 = vld [vmem:[#allocation2 + $0x578] sm:$0xff]
          %v2231 = vld [vmem:[#allocation2 + $0x580] sm:$0xff]
          %v2232 = vld [vmem:[#allocation2 + $0x588] sm:$0xff]
          %v2233 = vld [vmem:[#allocation2 + $0x590] sm:$0xff]
          %v2234 = vld [vmem:[#allocation2 + $0x598] sm:$0xff]
          %v2235 = vld [vmem:[#allocation2 + $0x5a0] sm:$0xff]
          %v2236 = vld [vmem:[#allocation2 + $0x5a8] sm:$0xff]
          %v2237 = vld [vmem:[#allocation2 + $0x5b0] sm:$0xff]
          %v2238 = vld [vmem:[#allocation2 + $0x5b8] sm:$0xff]
          %v2239 = vld [vmem:[#allocation2 + $0x5c0] sm:$0xff]
          %v2240 = vld [vmem:[#allocation2 + $0x5c8] sm:$0xff]
          %v2241 = vld [vmem:[#allocation2 + $0x5d0] sm:$0xff]
          %v2242 = vld [vmem:[#allocation2 + $0x5d8] sm:$0xff]
          %v2243 = vld [vmem:[#allocation2 + $0x5e0] sm:$0xff]
          %v2244 = vld [vmem:[#allocation2 + $0x5e8] sm:$0xff]
          %v2245 = vld [vmem:[#allocation2 + $0x5f0] sm:$0xff]
          %v2246 = vld [vmem:[#allocation2 + $0x5f8] sm:$0xff]
          %2247 = vst [vmem:[%s215] sm:$0xff] %v2055
          %2248 = vst [vmem:[%s215 + $0x8] sm:$0xff] %v2056
          %2249 = vst [vmem:[%s215 + $0x10] sm:$0xff] %v2057
          %2250 = vst [vmem:[%s215 + $0x18] sm:$0xff] %v2058
          %2251 = vst [vmem:[%s215 + $0x20] sm:$0xff] %v2059
          %2252 = vst [vmem:[%s215 + $0x28] sm:$0xff] %v2060
          %2253 = vst [vmem:[%s215 + $0x30] sm:$0xff] %v2061
          %2254 = vst [vmem:[%s215 + $0x38] sm:$0xff] %v2062
          %2255 = vst [vmem:[%s215 + $0x40] sm:$0xff] %v2063
          %2256 = vst [vmem:[%s215 + $0x48] sm:$0xff] %v2064
          %2257 = vst [vmem:[%s215 + $0x50] sm:$0xff] %v2065
          %2258 = vst [vmem:[%s215 + $0x58] sm:$0xff] %v2066
          %2259 = vst [vmem:[%s215 + $0x60] sm:$0xff] %v2067
          %2260 = vst [vmem:[%s215 + $0x68] sm:$0xff] %v2068
          %2261 = vst [vmem:[%s215 + $0x70] sm:$0xff] %v2069
          %2262 = vst [vmem:[%s215 + $0x78] sm:$0xff] %v2070
          %2263 = vst [vmem:[%s215 + $0x80] sm:$0xff] %v2071
          %2264 = vst [vmem:[%s215 + $0x88] sm:$0xff] %v2072
          %2265 = vst [vmem:[%s215 + $0x90] sm:$0xff] %v2073
          %2266 = vst [vmem:[%s215 + $0x98] sm:$0xff] %v2074
          %2267 = vst [vmem:[%s215 + $0xa0] sm:$0xff] %v2075
          %2268 = vst [vmem:[%s215 + $0xa8] sm:$0xff] %v2076
          %2269 = vst [vmem:[%s215 + $0xb0] sm:$0xff] %v2077
          %2270 = vst [vmem:[%s215 + $0xb8] sm:$0xff] %v2078
          %2271 = vst [vmem:[%s215 + $0xc0] sm:$0xff] %v2079
          %2272 = vst [vmem:[%s215 + $0xc8] sm:$0xff] %v2080
          %2273 = vst [vmem:[%s215 + $0xd0] sm:$0xff] %v2081
          %2274 = vst [vmem:[%s215 + $0xd8] sm:$0xff] %v2082
          %2275 = vst [vmem:[%s215 + $0xe0] sm:$0xff] %v2083
          %2276 = vst [vmem:[%s215 + $0xe8] sm:$0xff] %v2084
          %2277 = vst [vmem:[%s215 + $0xf0] sm:$0xff] %v2085
          %2278 = vst [vmem:[%s215 + $0xf8] sm:$0xff] %v2086
          %2279 = vst [vmem:[%s215 + $0x100] sm:$0xff] %v2087
          %2280 = vst [vmem:[%s215 + $0x108] sm:$0xff] %v2088
          %2281 = vst [vmem:[%s215 + $0x110] sm:$0xff] %v2089
          %2282 = vst [vmem:[%s215 + $0x118] sm:$0xff] %v2090
          %2283 = vst [vmem:[%s215 + $0x120] sm:$0xff] %v2091
          %2284 = vst [vmem:[%s215 + $0x128] sm:$0xff] %v2092
          %2285 = vst [vmem:[%s215 + $0x130] sm:$0xff] %v2093
          %2286 = vst [vmem:[%s215 + $0x138] sm:$0xff] %v2094
          %2287 = vst [vmem:[%s215 + $0x140] sm:$0xff] %v2095
          %2288 = vst [vmem:[%s215 + $0x148] sm:$0xff] %v2096
          %2289 = vst [vmem:[%s215 + $0x150] sm:$0xff] %v2097
          %2290 = vst [vmem:[%s215 + $0x158] sm:$0xff] %v2098
          %2291 = vst [vmem:[%s215 + $0x160] sm:$0xff] %v2099
          %2292 = vst [vmem:[%s215 + $0x168] sm:$0xff] %v2100
          %2293 = vst [vmem:[%s215 + $0x170] sm:$0xff] %v2101
          %2294 = vst [vmem:[%s215 + $0x178] sm:$0xff] %v2102
          %2295 = vst [vmem:[%s215 + $0x180] sm:$0xff] %v2103
          %2296 = vst [vmem:[%s215 + $0x188] sm:$0xff] %v2104
          %2297 = vst [vmem:[%s215 + $0x190] sm:$0xff] %v2105
          %2298 = vst [vmem:[%s215 + $0x198] sm:$0xff] %v2106
          %2299 = vst [vmem:[%s215 + $0x1a0] sm:$0xff] %v2107
          %2300 = vst [vmem:[%s215 + $0x1a8] sm:$0xff] %v2108
          %2301 = vst [vmem:[%s215 + $0x1b0] sm:$0xff] %v2109
          %2302 = vst [vmem:[%s215 + $0x1b8] sm:$0xff] %v2110
          %2303 = vst [vmem:[%s215 + $0x1c0] sm:$0xff] %v2111
          %2304 = vst [vmem:[%s215 + $0x1c8] sm:$0xff] %v2112
          %2305 = vst [vmem:[%s215 + $0x1d0] sm:$0xff] %v2113
          %2306 = vst [vmem:[%s215 + $0x1d8] sm:$0xff] %v2114
          %2307 = vst [vmem:[%s215 + $0x1e0] sm:$0xff] %v2115
          %2308 = vst [vmem:[%s215 + $0x1e8] sm:$0xff] %v2116
          %2309 = vst [vmem:[%s215 + $0x1f0] sm:$0xff] %v2117
          %2310 = vst [vmem:[%s215 + $0x1f8] sm:$0xff] %v2118
          %2311 = vst [vmem:[%s215 + $0x200] sm:$0xff] %v2119
          %2312 = vst [vmem:[%s215 + $0x208] sm:$0xff] %v2120
          %2313 = vst [vmem:[%s215 + $0x210] sm:$0xff] %v2121
          %2314 = vst [vmem:[%s215 + $0x218] sm:$0xff] %v2122
          %2315 = vst [vmem:[%s215 + $0x220] sm:$0xff] %v2123
          %2316 = vst [vmem:[%s215 + $0x228] sm:$0xff] %v2124
          %2317 = vst [vmem:[%s215 + $0x230] sm:$0xff] %v2125
          %2318 = vst [vmem:[%s215 + $0x238] sm:$0xff] %v2126
          %2319 = vst [vmem:[%s215 + $0x240] sm:$0xff] %v2127
          %2320 = vst [vmem:[%s215 + $0x248] sm:$0xff] %v2128
          %2321 = vst [vmem:[%s215 + $0x250] sm:$0xff] %v2129
          %2322 = vst [vmem:[%s215 + $0x258] sm:$0xff] %v2130
          %2323 = vst [vmem:[%s215 + $0x260] sm:$0xff] %v2131
          %2324 = vst [vmem:[%s215 + $0x268] sm:$0xff] %v2132
          %2325 = vst [vmem:[%s215 + $0x270] sm:$0xff] %v2133
          %2326 = vst [vmem:[%s215 + $0x278] sm:$0xff] %v2134
          %2327 = vst [vmem:[%s215 + $0x280] sm:$0xff] %v2135
          %2328 = vst [vmem:[%s215 + $0x288] sm:$0xff] %v2136
          %2329 = vst [vmem:[%s215 + $0x290] sm:$0xff] %v2137
          %2330 = vst [vmem:[%s215 + $0x298] sm:$0xff] %v2138
          %2331 = vst [vmem:[%s215 + $0x2a0] sm:$0xff] %v2139
          %2332 = vst [vmem:[%s215 + $0x2a8] sm:$0xff] %v2140
          %2333 = vst [vmem:[%s215 + $0x2b0] sm:$0xff] %v2141
          %2334 = vst [vmem:[%s215 + $0x2b8] sm:$0xff] %v2142
          %2335 = vst [vmem:[%s215 + $0x2c0] sm:$0xff] %v2143
          %2336 = vst [vmem:[%s215 + $0x2c8] sm:$0xff] %v2144
          %2337 = vst [vmem:[%s215 + $0x2d0] sm:$0xff] %v2145
          %2338 = vst [vmem:[%s215 + $0x2d8] sm:$0xff] %v2146
          %2339 = vst [vmem:[%s215 + $0x2e0] sm:$0xff] %v2147
          %2340 = vst [vmem:[%s215 + $0x2e8] sm:$0xff] %v2148
          %2341 = vst [vmem:[%s215 + $0x2f0] sm:$0xff] %v2149
          %2342 = vst [vmem:[%s215 + $0x2f8] sm:$0xff] %v2150
          %2343 = vst [vmem:[%s215 + $0x300] sm:$0xff] %v2151
          %2344 = vst [vmem:[%s215 + $0x308] sm:$0xff] %v2152
          %2345 = vst [vmem:[%s215 + $0x310] sm:$0xff] %v2153
          %2346 = vst [vmem:[%s215 + $0x318] sm:$0xff] %v2154
          %2347 = vst [vmem:[%s215 + $0x320] sm:$0xff] %v2155
          %2348 = vst [vmem:[%s215 + $0x328] sm:$0xff] %v2156
          %2349 = vst [vmem:[%s215 + $0x330] sm:$0xff] %v2157
          %2350 = vst [vmem:[%s215 + $0x338] sm:$0xff] %v2158
          %2351 = vst [vmem:[%s215 + $0x340] sm:$0xff] %v2159
          %2352 = vst [vmem:[%s215 + $0x348] sm:$0xff] %v2160
          %2353 = vst [vmem:[%s215 + $0x350] sm:$0xff] %v2161
          %2354 = vst [vmem:[%s215 + $0x358] sm:$0xff] %v2162
          %2355 = vst [vmem:[%s215 + $0x360] sm:$0xff] %v2163
          %2356 = vst [vmem:[%s215 + $0x368] sm:$0xff] %v2164
          %2357 = vst [vmem:[%s215 + $0x370] sm:$0xff] %v2165
          %2358 = vst [vmem:[%s215 + $0x378] sm:$0xff] %v2166
          %2359 = vst [vmem:[%s215 + $0x380] sm:$0xff] %v2167
          %2360 = vst [vmem:[%s215 + $0x388] sm:$0xff] %v2168
          %2361 = vst [vmem:[%s215 + $0x390] sm:$0xff] %v2169
          %2362 = vst [vmem:[%s215 + $0x398] sm:$0xff] %v2170
          %2363 = vst [vmem:[%s215 + $0x3a0] sm:$0xff] %v2171
          %2364 = vst [vmem:[%s215 + $0x3a8] sm:$0xff] %v2172
          %2365 = vst [vmem:[%s215 + $0x3b0] sm:$0xff] %v2173
          %2366 = vst [vmem:[%s215 + $0x3b8] sm:$0xff] %v2174
          %2367 = vst [vmem:[%s215 + $0x3c0] sm:$0xff] %v2175
          %2368 = vst [vmem:[%s215 + $0x3c8] sm:$0xff] %v2176
          %2369 = vst [vmem:[%s215 + $0x3d0] sm:$0xff] %v2177
          %2370 = vst [vmem:[%s215 + $0x3d8] sm:$0xff] %v2178
          %2371 = vst [vmem:[%s215 + $0x3e0] sm:$0xff] %v2179
          %2372 = vst [vmem:[%s215 + $0x3e8] sm:$0xff] %v2180
          %2373 = vst [vmem:[%s215 + $0x3f0] sm:$0xff] %v2181
          %2374 = vst [vmem:[%s215 + $0x3f8] sm:$0xff] %v2182
          %2375 = vst [vmem:[%s215 + $0x400] sm:$0xff] %v2183
          %2376 = vst [vmem:[%s215 + $0x408] sm:$0xff] %v2184
          %2377 = vst [vmem:[%s215 + $0x410] sm:$0xff] %v2185
          %2378 = vst [vmem:[%s215 + $0x418] sm:$0xff] %v2186
          %2379 = vst [vmem:[%s215 + $0x420] sm:$0xff] %v2187
          %2380 = vst [vmem:[%s215 + $0x428] sm:$0xff] %v2188
          %2381 = vst [vmem:[%s215 + $0x430] sm:$0xff] %v2189
          %2382 = vst [vmem:[%s215 + $0x438] sm:$0xff] %v2190
          %2383 = vst [vmem:[%s215 + $0x440] sm:$0xff] %v2191
          %2384 = vst [vmem:[%s215 + $0x448] sm:$0xff] %v2192
          %2385 = vst [vmem:[%s215 + $0x450] sm:$0xff] %v2193
          %2386 = vst [vmem:[%s215 + $0x458] sm:$0xff] %v2194
          %2387 = vst [vmem:[%s215 + $0x460] sm:$0xff] %v2195
          %2388 = vst [vmem:[%s215 + $0x468] sm:$0xff] %v2196
          %2389 = vst [vmem:[%s215 + $0x470] sm:$0xff] %v2197
          %2390 = vst [vmem:[%s215 + $0x478] sm:$0xff] %v2198
          %2391 = vst [vmem:[%s215 + $0x480] sm:$0xff] %v2199
          %2392 = vst [vmem:[%s215 + $0x488] sm:$0xff] %v2200
          %2393 = vst [vmem:[%s215 + $0x490] sm:$0xff] %v2201
          %2394 = vst [vmem:[%s215 + $0x498] sm:$0xff] %v2202
          %2395 = vst [vmem:[%s215 + $0x4a0] sm:$0xff] %v2203
          %2396 = vst [vmem:[%s215 + $0x4a8] sm:$0xff] %v2204
          %2397 = vst [vmem:[%s215 + $0x4b0] sm:$0xff] %v2205
          %2398 = vst [vmem:[%s215 + $0x4b8] sm:$0xff] %v2206
          %2399 = vst [vmem:[%s215 + $0x4c0] sm:$0xff] %v2207
          %2400 = vst [vmem:[%s215 + $0x4c8] sm:$0xff] %v2208
          %2401 = vst [vmem:[%s215 + $0x4d0] sm:$0xff] %v2209
          %2402 = vst [vmem:[%s215 + $0x4d8] sm:$0xff] %v2210
          %2403 = vst [vmem:[%s215 + $0x4e0] sm:$0xff] %v2211
          %2404 = vst [vmem:[%s215 + $0x4e8] sm:$0xff] %v2212
          %2405 = vst [vmem:[%s215 + $0x4f0] sm:$0xff] %v2213
          %2406 = vst [vmem:[%s215 + $0x4f8] sm:$0xff] %v2214
          %2407 = vst [vmem:[%s215 + $0x500] sm:$0xff] %v2215
          %2408 = vst [vmem:[%s215 + $0x508] sm:$0xff] %v2216
          %2409 = vst [vmem:[%s215 + $0x510] sm:$0xff] %v2217
          %2410 = vst [vmem:[%s215 + $0x518] sm:$0xff] %v2218
          %2411 = vst [vmem:[%s215 + $0x520] sm:$0xff] %v2219
          %2412 = vst [vmem:[%s215 + $0x528] sm:$0xff] %v2220
          %2413 = vst [vmem:[%s215 + $0x530] sm:$0xff] %v2221
          %2414 = vst [vmem:[%s215 + $0x538] sm:$0xff] %v2222
          %2415 = vst [vmem:[%s215 + $0x540] sm:$0xff] %v2223
          %2416 = vst [vmem:[%s215 + $0x548] sm:$0xff] %v2224
          %2417 = vst [vmem:[%s215 + $0x550] sm:$0xff] %v2225
          %2418 = vst [vmem:[%s215 + $0x558] sm:$0xff] %v2226
          %2419 = vst [vmem:[%s215 + $0x560] sm:$0xff] %v2227
          %2420 = vst [vmem:[%s215 + $0x568] sm:$0xff] %v2228
          %2421 = vst [vmem:[%s215 + $0x570] sm:$0xff] %v2229
          %2422 = vst [vmem:[%s215 + $0x578] sm:$0xff] %v2230
          %2423 = vst [vmem:[%s215 + $0x580] sm:$0xff] %v2231
          %2424 = vst [vmem:[%s215 + $0x588] sm:$0xff] %v2232
          %2425 = vst [vmem:[%s215 + $0x590] sm:$0xff] %v2233
          %2426 = vst [vmem:[%s215 + $0x598] sm:$0xff] %v2234
          %2427 = vst [vmem:[%s215 + $0x5a0] sm:$0xff] %v2235
          %2428 = vst [vmem:[%s215 + $0x5a8] sm:$0xff] %v2236
          %2429 = vst [vmem:[%s215 + $0x5b0] sm:$0xff] %v2237
          %2430 = vst [vmem:[%s215 + $0x5b8] sm:$0xff] %v2238
          %2431 = vst [vmem:[%s215 + $0x5c0] sm:$0xff] %v2239
          %2432 = vst [vmem:[%s215 + $0x5c8] sm:$0xff] %v2240
          %2433 = vst [vmem:[%s215 + $0x5d0] sm:$0xff] %v2241
          %2434 = vst [vmem:[%s215 + $0x5d8] sm:$0xff] %v2242
          %2435 = vst [vmem:[%s215 + $0x5e0] sm:$0xff] %v2243
          %2436 = vst [vmem:[%s215 + $0x5e8] sm:$0xff] %v2244
          %2437 = vst [vmem:[%s215 + $0x5f0] sm:$0xff] %v2245
          %2438 = vst [vmem:[%s215 + $0x5f8] sm:$0xff] %v2246
        $region44: #{tpu_custom_call.1} parent=27 // pred_fallthru
          _
        %s2439 = sand.u32 %s105, 1
        %s2440 = scalar_lea.sflag [#allocation5], %s2439
        %s2441 = sand.u32 %s105, 1
        %s2442 = smul.addr %s2441, 1536
        %s2443 = scalar_lea.vmem [#allocation8], %s2442
        // Predicated region
        $region45: #{tpu_custom_call.1} parent=27 // pred_check
          %p2444 = pneg %p115
        $region46: #{tpu_custom_call.1} parent=27 // pred_check_branch
          %2446 = sbr.rel (%p2444) target = $region48
        $region47: #{tpu_custom_call.1} parent=27 // pred_region
          %s2447 = smul.u32 64, %s25
          %s2448 = smul.u32 3, %s26
          %s2450 = ssub.s32 24576, 24576
          %2451 = vsyncadd %s2440, %s2450
          %s2452 = smul.addr %s2447, 6
          %s2453 = sadd.s32 %s2448, %s2452
          %s2454 = smul.addr %s2453, 128
          %s2455 = scalar_lea.hbm %s2, %s2454
          %s2456 = sshll.u32 %s2443, 4
          %s2457 = int_to_ptr.vmem [resolvable:$true] %s2456
          %2462 = dma.vmem_to_hbm [thread:$0]  %s2457, 24576, %s2455, %s2440, 384, 768, 24
        $region48: #{tpu_custom_call.1} parent=27 // pred_fallthru
          _
      $region28: #{tpu_custom_call.1} parent=5 // pred_fallthru
        _
      %p2463 = scmp.le.s32.totalorder 2, %s15
      // Predicated region
      $region49: #{tpu_custom_call.1} parent=5 // pred_check
        %p2464 = pneg %p2463
      $region50: #{tpu_custom_call.1} parent=5 // pred_check_branch
        %2466 = sbr.rel (%p2464) target = $region52
      $region51: #{tpu_custom_call.1} parent=5 // pred_region
        %s2467 = ssub.s32 %s15, 2
        // Predicated region
        $region53: #{tpu_custom_call.1} parent=51 // pred_check
          %p2468 = pneg %p121
        $region54: #{tpu_custom_call.1} parent=51 // pred_check_branch
          %2470 = sbr.rel (%p2468) target = $region56
        $region55: #{tpu_custom_call.1} parent=51 // pred_region
          %s2471 = sand.u32 %s106, 1
          %s2472 = scalar_lea.sflag [#allocation5], %s2471
          %s2473 = sand.u32 %s106, 1
          %s2474 = smul.addr %s2473, 1536
          %s2475 = scalar_lea.vmem [#allocation8], %s2474
          %2476 = dma.done %s2472, 24576
        $region56: #{tpu_custom_call.1} parent=51 // pred_fallthru
          _
      $region52: #{tpu_custom_call.1} parent=5 // pred_fallthru
        _
    $region6: #{tpu_custom_call.1} parent=1 // loop_footer
      %s19 = sadd.s32 1, %s15
    $region7: #{tpu_custom_call.1} parent=1 // loop_footer_branch
      %14 = sbr.rel target = $region3
    $region8: #{tpu_custom_call.1} parent=1 // loop_exit
      _
    %2477 = vsyncpa [#allocation4], 1
    %s2478 = scalar_lea.sflag [#allocation4], 1
    %2479 = vsyncpa %s2478, 1
    %2480 = vsyncpa [#allocation7], 1
    %s2481 = scalar_lea.sflag [#allocation7], 1
    %2482 = vsyncpa %s2481, 1
    %2483 = vsyncpa [#allocation5], 1
    %s2484 = scalar_lea.sflag [#allocation5], 1
    %2485 = vsyncpa %s2484, 1

</llo_original>
